<compile_context>
chip_gen: v7x
topology: tpu7x:2x2x1
jax: 0.10.0
libtpu: 0.0.40
codegen_flags: <defaults>
</compile_context>

<pallas_src>
import numpy as np
import jax
import jax.numpy as jnp
from jax.experimental import pallas as pl
from jax.experimental.pallas import tpu as pltpu


def _stable_sigmoid(x):
    # exp() only ever sees a non-positive argument -> no overflow, output in (0, 1).
    z = jnp.exp(-jnp.abs(x))
    return jnp.where(x >= 0, 1.0 / (1.0 + z), z / (1.0 + z))


def _fused_forward_kernel(x_ref, sel3_ref, scat4_ref,
                          w1_ref, b1_ref, w2_ref, b2_ref,
                          w3_ref, b3_ref, w4_ref, b4_ref,
                          o_ref, patch_buf, contrib_buf):
    f32, bf16 = jnp.float32, jnp.bfloat16
    n_tap, p3, _ = sel3_ref.shape            # 9, H3*W3, H*W
    c2 = w2_ref.shape[1]                     # 16
    c4 = w4_ref.shape[1] // n_tap            # 128

    # ---- conv1 / conv2: 1x1 convs == per-pixel channel matmuls --------------
    x = x_ref[...].astype(bf16)                                          # (HW, 3)
    h1 = _stable_sigmoid(
        jnp.dot(x, w1_ref[...], preferred_element_type=f32) + b1_ref[...])
    h2 = _stable_sigmoid(
        jnp.dot(h1.astype(bf16), w2_ref[...], preferred_element_type=f32)
        + b2_ref[...]).astype(bf16)                                      # (HW, 16)

    # ---- conv3: 3x3 / stride 2 / pad 1  (16 -> 64) ---------------------------
    # Tap t gathers its input pixels with a 0/1 matmul; each (P3, 16) patch is
    # written at lane offset 16*t of the (P3, 144) scratch, then a single
    # deep-K matmul against the stacked (144, 64) weights covers all 9 taps.
    for t in range(n_tap):
        patch_buf[:, t * c2:(t + 1) * c2] = jnp.dot(
            sel3_ref[t], h2, preferred_element_type=f32)
    h3 = _stable_sigmoid(
        jnp.dot(patch_buf[...].astype(bf16), w3_ref[...],
                preferred_element_type=f32) + b3_ref[...]).astype(bf16)  # (P3, 64)

    # ---- conv4: 3x3 / stride 2 / pad 1 transposed conv (64 -> 128) -----------
    # One wide-N matmul produces all 9 tap contributions at once; the taps are
    # restacked along rows, then one deep-K 0/1 scatter matmul accumulates the
    # valid contributions for every (padded) output pixel.
    contrib = jnp.dot(h3, w4_ref[...], preferred_element_type=f32)       # (P3, 9*128)
    for t in range(n_tap):
        contrib_buf[t * p3:(t + 1) * p3, :] = (
            contrib[:, t * c4:(t + 1) * c4].astype(bf16))
    acc4 = jnp.dot(scat4_ref[...], contrib_buf[...],
                   preferred_element_type=f32)                           # (M4pad, 128)
    o_ref[...] = _stable_sigmoid(acc4 + b4_ref[...])


def _build_select_matrices(H, W, H3, W3, H4, W4, m4_pad):
    """Batch-invariant 0/1 gather (conv3) / scatter (conv4^T) matrices.

    sel3[t, m, q]          = 1  iff conv3 output pixel m = (a, b) reads input
                                 pixel q = (2a+i-1, 2b+j-1), t = 3i+j
    scat4[m, t*P3 + p]     = 1  iff conv4^T output pixel m = (y, x) satisfies
                                 y == 2a+i-1, x == 2b+j-1 for input pixel
                                 p = (a, b), t = 3i+j
    Out-of-range (zero-padding) coordinates simply match nothing.
    """
    p3 = H3 * W3
    a = np.arange(p3) // W3
    b = np.arange(p3) % W3
    yi = np.arange(H * W) // W
    xi = np.arange(H * W) % W
    yo = np.arange(H4 * W4) // W4
    xo = np.arange(H4 * W4) % W4
    sel3 = np.zeros((9, p3, H * W), np.float32)
    scat4 = np.zeros((m4_pad, 9 * p3), np.float32)
    for i in range(3):
        for j in range(3):
            t = 3 * i + j
            ty = 2 * a + i - 1
            tx = 2 * b + j - 1
            sel3[t] = ((ty[:, None] == yi[None, :]) &
                       (tx[:, None] == xi[None, :]))
            scat4[:H4 * W4, t * p3:(t + 1) * p3] = (
                (yo[:, None] == ty[None, :]) & (xo[:, None] == tx[None, :]))
    return jnp.asarray(sel3, jnp.bfloat16), jnp.asarray(scat4, jnp.bfloat16)


def fused_forward(x_nchw, params):
    N, C, H, W = x_nchw.shape
    assert H >= 2 and W >= 2, "spatial input too small for k=3, s=2, p=1"
    # Shape formulas are specific to the module's fixed hyper-parameters
    # (kernel=3, stride=2, padding=1, output_padding=0).
    H3, W3 = (H + 2 - 3) // 2 + 1, (W + 2 - 3) // 2 + 1
    H4, W4 = (H3 - 1) * 2 - 2 + 3, (W3 - 1) * 2 - 2 + 3
    P3, M4 = H3 * W3, H4 * W4
    M4_pad = ((M4 + 7) // 8) * 8          # full-sublane rows for the final store
    C2 = params["w2m"].shape[1]
    C4 = params["w4s"].shape[1] // 9

    x_rows = jnp.transpose(x_nchw, (0, 2, 3, 1)).reshape(N, H * W, C)
    sel3, scat4 = _build_select_matrices(H, W, H3, W3, H4, W4, M4_pad)

    def const_spec(a):
        # Constant block index -> the block stays resident across grid steps.
        return pl.BlockSpec(a.shape, lambda n, _nd=a.ndim: (0,) * _nd)

    out_rows = pl.pallas_call(
        _fused_forward_kernel,
        out_shape=jax.ShapeDtypeStruct((N, M4_pad, C4), jnp.float32),
        grid=(N,),
        in_specs=[
            pl.BlockSpec((None, H * W, C), lambda n: (n, 0, 0)),   # one image / step
            const_spec(sel3), const_spec(scat4),
            const_spec(params["w1m"]), const_spec(params["b1"]),
            const_spec(params["w2m"]), const_spec(params["b2"]),
            const_spec(params["w3s"]), const_spec(params["b3"]),
            const_spec(params["w4s"]), const_spec(params["b4"]),
        ],
        out_specs=pl.BlockSpec((None, M4_pad, C4), lambda n: (n, 0, 0)),
        scratch_shapes=[
            pltpu.VMEM((P3, 9 * C2), jnp.float32),     # conv3 stacked patches (P3, 144)
            pltpu.VMEM((9 * P3, C4), jnp.bfloat16),    # conv4 stacked tap contributions
        ],
        compiler_params=pltpu.CompilerParams(
            dimension_semantics=("parallel",)),
    )(x_rows, sel3, scat4,
      params["w1m"], params["b1"], params["w2m"], params["b2"],
      params["w3s"], params["b3"], params["w4s"], params["b4"])

    # NOTE(perf): slice + NHWC->NCHW transpose are separate XLA ops; return
    # out_rows (lane-dense) directly if the consumer allows.
    out = out_rows[:, :M4, :].reshape(N, H4, W4, C4)
    return jnp.transpose(out, (0, 3, 1, 2))


# ---------------------------------------------------------------------------
# Parameters
# ---------------------------------------------------------------------------
def init_params(key):
    ks = jax.random.split(key, 8)
    scale = 0.1

    def rnd(k, shape):
        return scale * jax.random.normal(k, shape, dtype=jnp.float32)

    # PyTorch layouts: Conv2d (Cout, Cin, kh, kw); ConvTranspose2d (Cin, Cout, kh, kw)
    return {
        "w1": rnd(ks[0], (8, 3, 1, 1)),    "b1": rnd(ks[1], (8,)),
        "w2": rnd(ks[2], (16, 8, 1, 1)),   "b2": rnd(ks[3], (16,)),
        "w3": rnd(ks[4], (64, 16, 3, 3)),  "b3": rnd(ks[5], (64,)),
        "w4": rnd(ks[6], (64, 128, 3, 3)), "b4": rnd(ks[7], (128,)),
    }


def prepare_params(p):
    """One-time layout transforms (hoisted out of the per-call forward)."""
    bf16 = jnp.bfloat16
    # conv3 weights stacked along K: row index = 16*(3i+j) + cin
    w3s = jnp.transpose(p["w3"], (2, 3, 1, 0)).reshape(9 * 16, 64)
    # conv4^T weights stacked along N: column index = 128*(3i+j) + cout
    w4s = jnp.transpose(p["w4"], (0, 2, 3, 1)).reshape(64, 9 * 128)
    return {
        "w1m": p["w1"][:, :, 0, 0].T.astype(bf16),       # (3, 8)
        "w2m": p["w2"][:, :, 0, 0].T.astype(bf16),       # (8, 16)
        "w3s": w3s.astype(bf16),                         # (144, 64)
        "w4s": w4s.astype(bf16),                         # (64, 1152)
        "b1": p["b1"].reshape(1, -1), "b2": p["b2"].reshape(1, -1),
        "b3": p["b3"].reshape(1, -1), "b4": p["b4"].reshape(1, -1),
    }


# ---------------------------------------------------------------------------
# Pure-XLA reference (PyTorch conv semantics) for validation
# ---------------------------------------------------------------------------
def reference_forward(x, p):
    dn = ("NCHW", "OIHW", "NCHW")
    hi = jax.lax.Precision.HIGHEST

    def conv(y, w, b, stride, pad):
        y = jax.lax.conv_general_dilated(
            y, w, (stride, stride), [(pad, pad), (pad, pad)],
            dimension_numbers=dn, precision=hi)
        return jax.nn.sigmoid(y + b.reshape(1, -1, 1, 1))

    y = conv(x, p["w1"], p["b1"], 1, 0)
    y = conv(y, p["w2"], p["b2"], 1, 0)
    y = conv(y, p["w3"], p["b3"], 2, 1)
    # ConvTranspose2d(k=3, s=2, p=1) == lhs-dilated conv with flipped, swapped kernel
    w4e = jnp.transpose(p["w4"], (1, 0, 2, 3))[:, :, ::-1, ::-1]
    y = jax.lax.conv_general_dilated(
        y, w4e, (1, 1), [(1, 1), (1, 1)], lhs_dilation=(2, 2),
        dimension_numbers=dn, precision=hi)
    return jax.nn.sigmoid(y + p["b4"].reshape(1, -1, 1, 1))


if __name__ == "__main__":
    key = jax.random.PRNGKey(0)
    kx, kp = jax.random.split(key)

    # Small shapes consistent with the module: batch=2, C=3, H=W=16.
    x = jax.random.normal(kx, (2, 3, 16, 16), dtype=jnp.float32)
    raw = init_params(kp)
    params = prepare_params(raw)

    fwd = jax.jit(fused_forward)
    out = jax.block_until_ready(fwd(x, params))

    # conv3: 16 -> 8 spatial; convT4: 8 -> 15 spatial
    assert out.shape == (2, 128, 15, 15), out.shape
    assert out.dtype == jnp.float32
    assert bool(jnp.all(jnp.isfinite(out)))
    assert bool(jnp.all((out > 0.0) & (out < 1.0)))   # sigmoid range

    ref = jax.block_until_ready(reference_forward(x, raw))
    err = float(jnp.max(jnp.abs(out - ref)))
    # Tolerance re-derived for bf16 MXU operands (reference uses f32 HIGHEST):
    # the 0/1 select matrices are exact in bf16; activations/weights carry
    # ~2^-9 relative quantization which stays well below 2e-2 after sigmoid.
    assert err < 2e-2, err

    print("KERNEL_OK")
</pallas_src>

<mosaic_0001>
module attributes {stable_mosaic.version = 11 : i64} {
  func.func @_fused_forward_kernel(%arg0: i32, %arg1: memref<1x256x3xf32, #tpu.memory_space<vmem>>, %arg2: memref<9x64x256xbf16, #tpu.memory_space<vmem>>, %arg3: memref<232x576xbf16, #tpu.memory_space<vmem>>, %arg4: memref<3x8xbf16, #tpu.memory_space<vmem>>, %arg5: memref<1x8xf32, #tpu.memory_space<vmem>>, %arg6: memref<8x16xbf16, #tpu.memory_space<vmem>>, %arg7: memref<1x16xf32, #tpu.memory_space<vmem>>, %arg8: memref<144x64xbf16, #tpu.memory_space<vmem>>, %arg9: memref<1x64xf32, #tpu.memory_space<vmem>>, %arg10: memref<64x1152xbf16, #tpu.memory_space<vmem>>, %arg11: memref<1x128xf32, #tpu.memory_space<vmem>>, %arg12: memref<1x232x128xf32, #tpu.memory_space<vmem>>, %arg13: memref<64x144xf32, #tpu.memory_space<vmem>>, %arg14: memref<576x128xbf16, #tpu.memory_space<vmem>>) attributes {dimension_semantics = [#tpu.dimension_semantics<parallel>], iteration_bounds = array<i64: 2>, scalar_prefetch = 0 : i64, scratch_operands = 2 : i64, tpu.core_type = #tpu.core_type<tc>, window_params = [{transform_indices = @transform_0, window_bounds = array<i64: 1, 256, 3>}, {pipeline_mode = #tpu.pipeline_mode<synchronous>, transform_indices = @transform_1, window_bounds = array<i64: 9, 64, 256>}, {pipeline_mode = #tpu.pipeline_mode<synchronous>, transform_indices = @transform_2, window_bounds = array<i64: 232, 576>}, {pipeline_mode = #tpu.pipeline_mode<synchronous>, transform_indices = @transform_3, window_bounds = array<i64: 3, 8>}, {pipeline_mode = #tpu.pipeline_mode<synchronous>, transform_indices = @transform_4, window_bounds = array<i64: 1, 8>}, {pipeline_mode = #tpu.pipeline_mode<synchronous>, transform_indices = @transform_5, window_bounds = array<i64: 8, 16>}, {pipeline_mode = #tpu.pipeline_mode<synchronous>, transform_indices = @transform_6, window_bounds = array<i64: 1, 16>}, {pipeline_mode = #tpu.pipeline_mode<synchronous>, transform_indices = @transform_7, window_bounds = array<i64: 144, 64>}, {pipeline_mode = #tpu.pipeline_mode<synchronous>, transform_indices = @transform_8, window_bounds = array<i64: 1, 64>}, {pipeline_mode = #tpu.pipeline_mode<synchronous>, transform_indices = @transform_9, window_bounds = array<i64: 64, 1152>}, {pipeline_mode = #tpu.pipeline_mode<synchronous>, transform_indices = @transform_10, window_bounds = array<i64: 1, 128>}, {transform_indices = @transform_11, window_bounds = array<i64: 1, 232, 128>}]} {
    %c0 = arith.constant 0 : index
    %c0_0 = arith.constant 0 : index
    %c0_1 = arith.constant 0 : index
    %0 = vector.load %arg1[%c0, %c0_0, %c0_1] : memref<1x256x3xf32, #tpu.memory_space<vmem>>, vector<1x256x3xf32>
    %1 = vector.shape_cast %0 : vector<1x256x3xf32> to vector<256x3xf32>
    %2 = arith.truncf %1 : vector<256x3xf32> to vector<256x3xbf16>
    %c0_2 = arith.constant 0 : index
    %c0_3 = arith.constant 0 : index
    %3 = vector.load %arg4[%c0_2, %c0_3] : memref<3x8xbf16, #tpu.memory_space<vmem>>, vector<3x8xbf16>
    %cst = arith.constant dense<0.000000e+00> : vector<256x8xf32>
    %4 = tpu.matmul %2, %3, %cst {dimension_numbers = #tpu.dot_dimension_numbers<[1], [0], [0], [1], [0, 0, 1, 1], [], []>} : vector<256x3xbf16>, vector<3x8xbf16>, vector<256x8xf32> -> vector<256x8xf32>
    %c0_4 = arith.constant 0 : index
    %c0_5 = arith.constant 0 : index
    %5 = vector.load %arg5[%c0_4, %c0_5] : memref<1x8xf32, #tpu.memory_space<vmem>>, vector<1x8xf32>
    %6 = vector.broadcast %5 : vector<1x8xf32> to vector<256x8xf32>
    %7 = arith.addf %4, %6 : vector<256x8xf32>
    %8 = math.absf %7 : vector<256x8xf32>
    %cst_6 = arith.constant 0.000000e+00 : f32
    %9 = vector.broadcast %cst_6 : f32 to vector<256x8xf32>
    %10 = arith.subf %9, %8 : vector<256x8xf32>
    %11 = math.exp %10 : vector<256x8xf32>
    %cst_7 = arith.constant 0.000000e+00 : f32
    %12 = vector.broadcast %cst_7 : f32 to vector<256x8xf32>
    %13 = arith.cmpf oge, %7, %12 : vector<256x8xf32>
    %cst_8 = arith.constant 1.000000e+00 : f32
    %14 = vector.broadcast %cst_8 : f32 to vector<256x8xf32>
    %15 = arith.addf %14, %11 : vector<256x8xf32>
    %cst_9 = arith.constant 1.000000e+00 : f32
    %16 = vector.broadcast %cst_9 : f32 to vector<256x8xf32>
    %17 = arith.divf %16, %15 : vector<256x8xf32>
    %cst_10 = arith.constant 1.000000e+00 : f32
    %18 = vector.broadcast %cst_10 : f32 to vector<256x8xf32>
    %19 = arith.addf %18, %11 : vector<256x8xf32>
    %20 = arith.divf %11, %19 : vector<256x8xf32>
    %21 = arith.select %13, %17, %20 : vector<256x8xi1>, vector<256x8xf32>
    %22 = arith.truncf %21 : vector<256x8xf32> to vector<256x8xbf16>
    %c0_11 = arith.constant 0 : index
    %c0_12 = arith.constant 0 : index
    %23 = vector.load %arg6[%c0_11, %c0_12] : memref<8x16xbf16, #tpu.memory_space<vmem>>, vector<8x16xbf16>
    %cst_13 = arith.constant dense<0.000000e+00> : vector<256x16xf32>
    %24 = tpu.matmul %22, %23, %cst_13 {dimension_numbers = #tpu.dot_dimension_numbers<[1], [0], [0], [1], [0, 0, 1, 1], [], []>} : vector<256x8xbf16>, vector<8x16xbf16>, vector<256x16xf32> -> vector<256x16xf32>
    %c0_14 = arith.constant 0 : index
    %c0_15 = arith.constant 0 : index
    %25 = vector.load %arg7[%c0_14, %c0_15] : memref<1x16xf32, #tpu.memory_space<vmem>>, vector<1x16xf32>
    %26 = vector.broadcast %25 : vector<1x16xf32> to vector<256x16xf32>
    %27 = arith.addf %24, %26 : vector<256x16xf32>
    %28 = math.absf %27 : vector<256x16xf32>
    %cst_16 = arith.constant 0.000000e+00 : f32
    %29 = vector.broadcast %cst_16 : f32 to vector<256x16xf32>
    %30 = arith.subf %29, %28 : vector<256x16xf32>
    %31 = math.exp %30 : vector<256x16xf32>
    %cst_17 = arith.constant 0.000000e+00 : f32
    %32 = vector.broadcast %cst_17 : f32 to vector<256x16xf32>
    %33 = arith.cmpf oge, %27, %32 : vector<256x16xf32>
    %cst_18 = arith.constant 1.000000e+00 : f32
    %34 = vector.broadcast %cst_18 : f32 to vector<256x16xf32>
    %35 = arith.addf %34, %31 : vector<256x16xf32>
    %cst_19 = arith.constant 1.000000e+00 : f32
    %36 = vector.broadcast %cst_19 : f32 to vector<256x16xf32>
    %37 = arith.divf %36, %35 : vector<256x16xf32>
    %cst_20 = arith.constant 1.000000e+00 : f32
    %38 = vector.broadcast %cst_20 : f32 to vector<256x16xf32>
    %39 = arith.addf %38, %31 : vector<256x16xf32>
    %40 = arith.divf %31, %39 : vector<256x16xf32>
    %41 = arith.select %33, %37, %40 : vector<256x16xi1>, vector<256x16xf32>
    %42 = arith.truncf %41 : vector<256x16xf32> to vector<256x16xbf16>
    %c0_21 = arith.constant 0 : index
    %c0_22 = arith.constant 0 : index
    %c0_23 = arith.constant 0 : index
    %43 = vector.load %arg2[%c0_21, %c0_22, %c0_23] : memref<9x64x256xbf16, #tpu.memory_space<vmem>>, vector<1x64x256xbf16>
    %44 = vector.shape_cast %43 : vector<1x64x256xbf16> to vector<64x256xbf16>
    %cst_24 = arith.constant dense<0.000000e+00> : vector<64x16xf32>
    %45 = tpu.matmul %44, %42, %cst_24 {dimension_numbers = #tpu.dot_dimension_numbers<[1], [0], [0], [1], [0, 0, 1, 1], [], []>} : vector<64x256xbf16>, vector<256x16xbf16>, vector<64x16xf32> -> vector<64x16xf32>
    %c0_25 = arith.constant 0 : index
    %c0_26 = arith.constant 0 : index
    %46 = vector.load %arg13[%c0_25, %c0_26] : memref<64x144xf32, #tpu.memory_space<vmem>>, vector<64x16xf32>
    tpu.vector_store %arg13[%c0_25, %c0_26], %45 {strides = array<i32>} : memref<64x144xf32, #tpu.memory_space<vmem>>, vector<64x16xf32>,
    %c1 = arith.constant 1 : index
    %c0_27 = arith.constant 0 : index
    %c0_28 = arith.constant 0 : index
    %47 = vector.load %arg2[%c1, %c0_27, %c0_28] : memref<9x64x256xbf16, #tpu.memory_space<vmem>>, vector<1x64x256xbf16>
    %48 = vector.shape_cast %47 : vector<1x64x256xbf16> to vector<64x256xbf16>
    %cst_29 = arith.constant dense<0.000000e+00> : vector<64x16xf32>
    %49 = tpu.matmul %48, %42, %cst_29 {dimension_numbers = #tpu.dot_dimension_numbers<[1], [0], [0], [1], [0, 0, 1, 1], [], []>} : vector<64x256xbf16>, vector<256x16xbf16>, vector<64x16xf32> -> vector<64x16xf32>
    %c0_30 = arith.constant 0 : index
    %c16 = arith.constant 16 : index
    %50 = vector.load %arg13[%c0_30, %c16] : memref<64x144xf32, #tpu.memory_space<vmem>>, vector<64x16xf32>
    tpu.vector_store %arg13[%c0_30, %c16], %49 {strides = array<i32>} : memref<64x144xf32, #tpu.memory_space<vmem>>, vector<64x16xf32>,
    %c2 = arith.constant 2 : index
    %c0_31 = arith.constant 0 : index
    %c0_32 = arith.constant 0 : index
    %51 = vector.load %arg2[%c2, %c0_31, %c0_32] : memref<9x64x256xbf16, #tpu.memory_space<vmem>>, vector<1x64x256xbf16>
    %52 = vector.shape_cast %51 : vector<1x64x256xbf16> to vector<64x256xbf16>
    %cst_33 = arith.constant dense<0.000000e+00> : vector<64x16xf32>
    %53 = tpu.matmul %52, %42, %cst_33 {dimension_numbers = #tpu.dot_dimension_numbers<[1], [0], [0], [1], [0, 0, 1, 1], [], []>} : vector<64x256xbf16>, vector<256x16xbf16>, vector<64x16xf32> -> vector<64x16xf32>
    %c0_34 = arith.constant 0 : index
    %c32 = arith.constant 32 : index
    %54 = vector.load %arg13[%c0_34, %c32] : memref<64x144xf32, #tpu.memory_space<vmem>>, vector<64x16xf32>
    tpu.vector_store %arg13[%c0_34, %c32], %53 {strides = array<i32>} : memref<64x144xf32, #tpu.memory_space<vmem>>, vector<64x16xf32>,
    %c3 = arith.constant 3 : index
    %c0_35 = arith.constant 0 : index
    %c0_36 = arith.constant 0 : index
    %55 = vector.load %arg2[%c3, %c0_35, %c0_36] : memref<9x64x256xbf16, #tpu.memory_space<vmem>>, vector<1x64x256xbf16>
    %56 = vector.shape_cast %55 : vector<1x64x256xbf16> to vector<64x256xbf16>
    %cst_37 = arith.constant dense<0.000000e+00> : vector<64x16xf32>
    %57 = tpu.matmul %56, %42, %cst_37 {dimension_numbers = #tpu.dot_dimension_numbers<[1], [0], [0], [1], [0, 0, 1, 1], [], []>} : vector<64x256xbf16>, vector<256x16xbf16>, vector<64x16xf32> -> vector<64x16xf32>
    %c0_38 = arith.constant 0 : index
    %c48 = arith.constant 48 : index
    %58 = vector.load %arg13[%c0_38, %c48] : memref<64x144xf32, #tpu.memory_space<vmem>>, vector<64x16xf32>
    tpu.vector_store %arg13[%c0_38, %c48], %57 {strides = array<i32>} : memref<64x144xf32, #tpu.memory_space<vmem>>, vector<64x16xf32>,
    %c4 = arith.constant 4 : index
    %c0_39 = arith.constant 0 : index
    %c0_40 = arith.constant 0 : index
    %59 = vector.load %arg2[%c4, %c0_39, %c0_40] : memref<9x64x256xbf16, #tpu.memory_space<vmem>>, vector<1x64x256xbf16>
    %60 = vector.shape_cast %59 : vector<1x64x256xbf16> to vector<64x256xbf16>
    %cst_41 = arith.constant dense<0.000000e+00> : vector<64x16xf32>
    %61 = tpu.matmul %60, %42, %cst_41 {dimension_numbers = #tpu.dot_dimension_numbers<[1], [0], [0], [1], [0, 0, 1, 1], [], []>} : vector<64x256xbf16>, vector<256x16xbf16>, vector<64x16xf32> -> vector<64x16xf32>
    %c0_42 = arith.constant 0 : index
    %c64 = arith.constant 64 : index
    %62 = vector.load %arg13[%c0_42, %c64] : memref<64x144xf32, #tpu.memory_space<vmem>>, vector<64x16xf32>
    tpu.vector_store %arg13[%c0_42, %c64], %61 {strides = array<i32>} : memref<64x144xf32, #tpu.memory_space<vmem>>, vector<64x16xf32>,
    %c5 = arith.constant 5 : index
    %c0_43 = arith.constant 0 : index
    %c0_44 = arith.constant 0 : index
    %63 = vector.load %arg2[%c5, %c0_43, %c0_44] : memref<9x64x256xbf16, #tpu.memory_space<vmem>>, vector<1x64x256xbf16>
    %64 = vector.shape_cast %63 : vector<1x64x256xbf16> to vector<64x256xbf16>
    %cst_45 = arith.constant dense<0.000000e+00> : vector<64x16xf32>
    %65 = tpu.matmul %64, %42, %cst_45 {dimension_numbers = #tpu.dot_dimension_numbers<[1], [0], [0], [1], [0, 0, 1, 1], [], []>} : vector<64x256xbf16>, vector<256x16xbf16>, vector<64x16xf32> -> vector<64x16xf32>
    %c0_46 = arith.constant 0 : index
    %c80 = arith.constant 80 : index
    %66 = vector.load %arg13[%c0_46, %c80] : memref<64x144xf32, #tpu.memory_space<vmem>>, vector<64x16xf32>
    tpu.vector_store %arg13[%c0_46, %c80], %65 {strides = array<i32>} : memref<64x144xf32, #tpu.memory_space<vmem>>, vector<64x16xf32>,
    %c6 = arith.constant 6 : index
    %c0_47 = arith.constant 0 : index
    %c0_48 = arith.constant 0 : index
    %67 = vector.load %arg2[%c6, %c0_47, %c0_48] : memref<9x64x256xbf16, #tpu.memory_space<vmem>>, vector<1x64x256xbf16>
    %68 = vector.shape_cast %67 : vector<1x64x256xbf16> to vector<64x256xbf16>
    %cst_49 = arith.constant dense<0.000000e+00> : vector<64x16xf32>
    %69 = tpu.matmul %68, %42, %cst_49 {dimension_numbers = #tpu.dot_dimension_numbers<[1], [0], [0], [1], [0, 0, 1, 1], [], []>} : vector<64x256xbf16>, vector<256x16xbf16>, vector<64x16xf32> -> vector<64x16xf32>
    %c0_50 = arith.constant 0 : index
    %c96 = arith.constant 96 : index
    %70 = vector.load %arg13[%c0_50, %c96] : memref<64x144xf32, #tpu.memory_space<vmem>>, vector<64x16xf32>
    tpu.vector_store %arg13[%c0_50, %c96], %69 {strides = array<i32>} : memref<64x144xf32, #tpu.memory_space<vmem>>, vector<64x16xf32>,
    %c7 = arith.constant 7 : index
    %c0_51 = arith.constant 0 : index
    %c0_52 = arith.constant 0 : index
    %71 = vector.load %arg2[%c7, %c0_51, %c0_52] : memref<9x64x256xbf16, #tpu.memory_space<vmem>>, vector<1x64x256xbf16>
    %72 = vector.shape_cast %71 : vector<1x64x256xbf16> to vector<64x256xbf16>
    %cst_53 = arith.constant dense<0.000000e+00> : vector<64x16xf32>
    %73 = tpu.matmul %72, %42, %cst_53 {dimension_numbers = #tpu.dot_dimension_numbers<[1], [0], [0], [1], [0, 0, 1, 1], [], []>} : vector<64x256xbf16>, vector<256x16xbf16>, vector<64x16xf32> -> vector<64x16xf32>
    %c0_54 = arith.constant 0 : index
    %c112 = arith.constant 112 : index
    %74 = vector.load %arg13[%c0_54, %c112] : memref<64x144xf32, #tpu.memory_space<vmem>>, vector<64x16xf32>
    tpu.vector_store %arg13[%c0_54, %c112], %73 {strides = array<i32>} : memref<64x144xf32, #tpu.memory_space<vmem>>, vector<64x16xf32>,
    %c8 = arith.constant 8 : index
    %c0_55 = arith.constant 0 : index
    %c0_56 = arith.constant 0 : index
    %75 = vector.load %arg2[%c8, %c0_55, %c0_56] : memref<9x64x256xbf16, #tpu.memory_space<vmem>>, vector<1x64x256xbf16>
    %76 = vector.shape_cast %75 : vector<1x64x256xbf16> to vector<64x256xbf16>
    %cst_57 = arith.constant dense<0.000000e+00> : vector<64x16xf32>
    %77 = tpu.matmul %76, %42, %cst_57 {dimension_numbers = #tpu.dot_dimension_numbers<[1], [0], [0], [1], [0, 0, 1, 1], [], []>} : vector<64x256xbf16>, vector<256x16xbf16>, vector<64x16xf32> -> vector<64x16xf32>
    %c0_58 = arith.constant 0 : index
    %c128 = arith.constant 128 : index
    %78 = vector.load %arg13[%c0_58, %c128] : memref<64x144xf32, #tpu.memory_space<vmem>>, vector<64x16xf32>
    tpu.vector_store %arg13[%c0_58, %c128], %77 {strides = array<i32>} : memref<64x144xf32, #tpu.memory_space<vmem>>, vector<64x16xf32>,
    %c0_59 = arith.constant 0 : index
    %c0_60 = arith.constant 0 : index
    %79 = vector.load %arg13[%c0_59, %c0_60] : memref<64x144xf32, #tpu.memory_space<vmem>>, vector<64x144xf32>
    %80 = arith.truncf %79 : vector<64x144xf32> to vector<64x144xbf16>
    %c0_61 = arith.constant 0 : index
    %c0_62 = arith.constant 0 : index
    %81 = vector.load %arg8[%c0_61, %c0_62] : memref<144x64xbf16, #tpu.memory_space<vmem>>, vector<144x64xbf16>
    %cst_63 = arith.constant dense<0.000000e+00> : vector<64x64xf32>
    %82 = tpu.matmul %80, %81, %cst_63 {dimension_numbers = #tpu.dot_dimension_numbers<[1], [0], [0], [1], [0, 0, 1, 1], [], []>} : vector<64x144xbf16>, vector<144x64xbf16>, vector<64x64xf32> -> vector<64x64xf32>
    %c0_64 = arith.constant 0 : index
    %c0_65 = arith.constant 0 : index
    %83 = vector.load %arg9[%c0_64, %c0_65] : memref<1x64xf32, #tpu.memory_space<vmem>>, vector<1x64xf32>
    %84 = vector.broadcast %83 : vector<1x64xf32> to vector<64x64xf32>
    %85 = arith.addf %82, %84 : vector<64x64xf32>
    %86 = math.absf %85 : vector<64x64xf32>
    %cst_66 = arith.constant 0.000000e+00 : f32
    %87 = vector.broadcast %cst_66 : f32 to vector<64x64xf32>
    %88 = arith.subf %87, %86 : vector<64x64xf32>
    %89 = math.exp %88 : vector<64x64xf32>
    %cst_67 = arith.constant 0.000000e+00 : f32
    %90 = vector.broadcast %cst_67 : f32 to vector<64x64xf32>
    %91 = arith.cmpf oge, %85, %90 : vector<64x64xf32>
    %cst_68 = arith.constant 1.000000e+00 : f32
    %92 = vector.broadcast %cst_68 : f32 to vector<64x64xf32>
    %93 = arith.addf %92, %89 : vector<64x64xf32>
    %cst_69 = arith.constant 1.000000e+00 : f32
    %94 = vector.broadcast %cst_69 : f32 to vector<64x64xf32>
    %95 = arith.divf %94, %93 : vector<64x64xf32>
    %cst_70 = arith.constant 1.000000e+00 : f32
    %96 = vector.broadcast %cst_70 : f32 to vector<64x64xf32>
    %97 = arith.addf %96, %89 : vector<64x64xf32>
    %98 = arith.divf %89, %97 : vector<64x64xf32>
    %99 = arith.select %91, %95, %98 : vector<64x64xi1>, vector<64x64xf32>
    %100 = arith.truncf %99 : vector<64x64xf32> to vector<64x64xbf16>
    %c0_71 = arith.constant 0 : index
    %c0_72 = arith.constant 0 : index
    %101 = vector.load %arg10[%c0_71, %c0_72] : memref<64x1152xbf16, #tpu.memory_space<vmem>>, vector<64x1152xbf16>
    %cst_73 = arith.constant dense<0.000000e+00> : vector<64x1152xf32>
    %102 = tpu.matmul %100, %101, %cst_73 {dimension_numbers = #tpu.dot_dimension_numbers<[1], [0], [0], [1], [0, 0, 1, 1], [], []>} : vector<64x64xbf16>, vector<64x1152xbf16>, vector<64x1152xf32> -> vector<64x1152xf32>
    %103 = vector.extract_strided_slice %102 {offsets = [0, 0], sizes = [64, 128], strides = [1, 1]} : vector<64x1152xf32> to vector<64x128xf32>
    %104 = arith.truncf %103 : vector<64x128xf32> to vector<64x128xbf16>
    %c0_74 = arith.constant 0 : index
    %c0_75 = arith.constant 0 : index
    %105 = vector.load %arg14[%c0_74, %c0_75] : memref<576x128xbf16, #tpu.memory_space<vmem>>, vector<64x128xbf16>
    tpu.vector_store %arg14[%c0_74, %c0_75], %104 {strides = array<i32>} : memref<576x128xbf16, #tpu.memory_space<vmem>>, vector<64x128xbf16>,
    %106 = vector.extract_strided_slice %102 {offsets = [0, 128], sizes = [64, 128], strides = [1, 1]} : vector<64x1152xf32> to vector<64x128xf32>
    %107 = arith.truncf %106 : vector<64x128xf32> to vector<64x128xbf16>
    %c64_76 = arith.constant 64 : index
    %c0_77 = arith.constant 0 : index
    %108 = vector.load %arg14[%c64_76, %c0_77] : memref<576x128xbf16, #tpu.memory_space<vmem>>, vector<64x128xbf16>
    tpu.vector_store %arg14[%c64_76, %c0_77], %107 {strides = array<i32>} : memref<576x128xbf16, #tpu.memory_space<vmem>>, vector<64x128xbf16>,
    %109 = vector.extract_strided_slice %102 {offsets = [0, 256], sizes = [64, 128], strides = [1, 1]} : vector<64x1152xf32> to vector<64x128xf32>
    %110 = arith.truncf %109 : vector<64x128xf32> to vector<64x128xbf16>
    %c128_78 = arith.constant 128 : index
    %c0_79 = arith.constant 0 : index
    %111 = vector.load %arg14[%c128_78, %c0_79] : memref<576x128xbf16, #tpu.memory_space<vmem>>, vector<64x128xbf16>
    tpu.vector_store %arg14[%c128_78, %c0_79], %110 {strides = array<i32>} : memref<576x128xbf16, #tpu.memory_space<vmem>>, vector<64x128xbf16>,
    %112 = vector.extract_strided_slice %102 {offsets = [0, 384], sizes = [64, 128], strides = [1, 1]} : vector<64x1152xf32> to vector<64x128xf32>
    %113 = arith.truncf %112 : vector<64x128xf32> to vector<64x128xbf16>
    %c192 = arith.constant 192 : index
    %c0_80 = arith.constant 0 : index
    %114 = vector.load %arg14[%c192, %c0_80] : memref<576x128xbf16, #tpu.memory_space<vmem>>, vector<64x128xbf16>
    tpu.vector_store %arg14[%c192, %c0_80], %113 {strides = array<i32>} : memref<576x128xbf16, #tpu.memory_space<vmem>>, vector<64x128xbf16>,
    %115 = vector.extract_strided_slice %102 {offsets = [0, 512], sizes = [64, 128], strides = [1, 1]} : vector<64x1152xf32> to vector<64x128xf32>
    %116 = arith.truncf %115 : vector<64x128xf32> to vector<64x128xbf16>
    %c256 = arith.constant 256 : index
    %c0_81 = arith.constant 0 : index
    %117 = vector.load %arg14[%c256, %c0_81] : memref<576x128xbf16, #tpu.memory_space<vmem>>, vector<64x128xbf16>
    tpu.vector_store %arg14[%c256, %c0_81], %116 {strides = array<i32>} : memref<576x128xbf16, #tpu.memory_space<vmem>>, vector<64x128xbf16>,
    %118 = vector.extract_strided_slice %102 {offsets = [0, 640], sizes = [64, 128], strides = [1, 1]} : vector<64x1152xf32> to vector<64x128xf32>
    %119 = arith.truncf %118 : vector<64x128xf32> to vector<64x128xbf16>
    %c320 = arith.constant 320 : index
    %c0_82 = arith.constant 0 : index
    %120 = vector.load %arg14[%c320, %c0_82] : memref<576x128xbf16, #tpu.memory_space<vmem>>, vector<64x128xbf16>
    tpu.vector_store %arg14[%c320, %c0_82], %119 {strides = array<i32>} : memref<576x128xbf16, #tpu.memory_space<vmem>>, vector<64x128xbf16>,
    %121 = vector.extract_strided_slice %102 {offsets = [0, 768], sizes = [64, 128], strides = [1, 1]} : vector<64x1152xf32> to vector<64x128xf32>
    %122 = arith.truncf %121 : vector<64x128xf32> to vector<64x128xbf16>
    %c384 = arith.constant 384 : index
    %c0_83 = arith.constant 0 : index
    %123 = vector.load %arg14[%c384, %c0_83] : memref<576x128xbf16, #tpu.memory_space<vmem>>, vector<64x128xbf16>
    tpu.vector_store %arg14[%c384, %c0_83], %122 {strides = array<i32>} : memref<576x128xbf16, #tpu.memory_space<vmem>>, vector<64x128xbf16>,
    %124 = vector.extract_strided_slice %102 {offsets = [0, 896], sizes = [64, 128], strides = [1, 1]} : vector<64x1152xf32> to vector<64x128xf32>
    %125 = arith.truncf %124 : vector<64x128xf32> to vector<64x128xbf16>
    %c448 = arith.constant 448 : index
    %c0_84 = arith.constant 0 : index
    %126 = vector.load %arg14[%c448, %c0_84] : memref<576x128xbf16, #tpu.memory_space<vmem>>, vector<64x128xbf16>
    tpu.vector_store %arg14[%c448, %c0_84], %125 {strides = array<i32>} : memref<576x128xbf16, #tpu.memory_space<vmem>>, vector<64x128xbf16>,
    %127 = vector.extract_strided_slice %102 {offsets = [0, 1024], sizes = [64, 128], strides = [1, 1]} : vector<64x1152xf32> to vector<64x128xf32>
    %128 = arith.truncf %127 : vector<64x128xf32> to vector<64x128xbf16>
    %c512 = arith.constant 512 : index
    %c0_85 = arith.constant 0 : index
    %129 = vector.load %arg14[%c512, %c0_85] : memref<576x128xbf16, #tpu.memory_space<vmem>>, vector<64x128xbf16>
    tpu.vector_store %arg14[%c512, %c0_85], %128 {strides = array<i32>} : memref<576x128xbf16, #tpu.memory_space<vmem>>, vector<64x128xbf16>,
    %c0_86 = arith.constant 0 : index
    %c0_87 = arith.constant 0 : index
    %130 = vector.load %arg3[%c0_86, %c0_87] : memref<232x576xbf16, #tpu.memory_space<vmem>>, vector<232x576xbf16>
    %c0_88 = arith.constant 0 : index
    %c0_89 = arith.constant 0 : index
    %131 = vector.load %arg14[%c0_88, %c0_89] : memref<576x128xbf16, #tpu.memory_space<vmem>>, vector<576x128xbf16>
    %cst_90 = arith.constant dense<0.000000e+00> : vector<232x128xf32>
    %132 = tpu.matmul %130, %131, %cst_90 {dimension_numbers = #tpu.dot_dimension_numbers<[1], [0], [0], [1], [0, 0, 1, 1], [], []>} : vector<232x576xbf16>, vector<576x128xbf16>, vector<232x128xf32> -> vector<232x128xf32>
    %c0_91 = arith.constant 0 : index
    %c0_92 = arith.constant 0 : index
    %133 = vector.load %arg11[%c0_91, %c0_92] : memref<1x128xf32, #tpu.memory_space<vmem>>, vector<1x128xf32>
    %134 = vector.broadcast %133 : vector<1x128xf32> to vector<232x128xf32>
    %135 = arith.addf %132, %134 : vector<232x128xf32>
    %136 = math.absf %135 : vector<232x128xf32>
    %cst_93 = arith.constant 0.000000e+00 : f32
    %137 = vector.broadcast %cst_93 : f32 to vector<232x128xf32>
    %138 = arith.subf %137, %136 : vector<232x128xf32>
    %139 = math.exp %138 : vector<232x128xf32>
    %cst_94 = arith.constant 0.000000e+00 : f32
    %140 = vector.broadcast %cst_94 : f32 to vector<232x128xf32>
    %141 = arith.cmpf oge, %135, %140 : vector<232x128xf32>
    %cst_95 = arith.constant 1.000000e+00 : f32
    %142 = vector.broadcast %cst_95 : f32 to vector<232x128xf32>
    %143 = arith.addf %142, %139 : vector<232x128xf32>
    %cst_96 = arith.constant 1.000000e+00 : f32
    %144 = vector.broadcast %cst_96 : f32 to vector<232x128xf32>
    %145 = arith.divf %144, %143 : vector<232x128xf32>
    %cst_97 = arith.constant 1.000000e+00 : f32
    %146 = vector.broadcast %cst_97 : f32 to vector<232x128xf32>
    %147 = arith.addf %146, %139 : vector<232x128xf32>
    %148 = arith.divf %139, %147 : vector<232x128xf32>
    %149 = arith.select %141, %145, %148 : vector<232x128xi1>, vector<232x128xf32>
    %c0_98 = arith.constant 0 : index
    %c0_99 = arith.constant 0 : index
    %c0_100 = arith.constant 0 : index
    %150 = vector.load %arg12[%c0_98, %c0_99, %c0_100] : memref<1x232x128xf32, #tpu.memory_space<vmem>>, vector<1x232x128xf32>
    %151 = vector.shape_cast %150 : vector<1x232x128xf32> to vector<232x128xf32>
    %152 = vector.shape_cast %149 : vector<232x128xf32> to vector<1x232x128xf32>
    tpu.vector_store %arg12[%c0_98, %c0_99, %c0_100], %152 {strides = array<i32>} : memref<1x232x128xf32, #tpu.memory_space<vmem>>, vector<1x232x128xf32>,
    return
  }
  func.func @transform_0(%arg0: i32) -> (i32, i32, i32) {
    %c0_i32 = arith.constant 0 : i32
    %c0_i32_0 = arith.constant 0 : i32
    %c0_i32_1 = arith.constant 0 : i32
    return %arg0, %c0_i32, %c0_i32_0 : i32, i32, i32
  }
  func.func @transform_1(%arg0: i32) -> (i32, i32, i32) {
    %c0_i32 = arith.constant 0 : i32
    %c0_i32_0 = arith.constant 0 : i32
    %c0_i32_1 = arith.constant 0 : i32
    %c0_i32_2 = arith.constant 0 : i32
    return %c0_i32, %c0_i32_0, %c0_i32_1 : i32, i32, i32
  }
  func.func @transform_2(%arg0: i32) -> (i32, i32) {
    %c0_i32 = arith.constant 0 : i32
    %c0_i32_0 = arith.constant 0 : i32
    %c0_i32_1 = arith.constant 0 : i32
    return %c0_i32, %c0_i32_0 : i32, i32
  }
  func.func @transform_3(%arg0: i32) -> (i32, i32) {
    %c0_i32 = arith.constant 0 : i32
    %c0_i32_0 = arith.constant 0 : i32
    %c0_i32_1 = arith.constant 0 : i32
    return %c0_i32, %c0_i32_0 : i32, i32
  }
  func.func @transform_4(%arg0: i32) -> (i32, i32) {
    %c0_i32 = arith.constant 0 : i32
    %c0_i32_0 = arith.constant 0 : i32
    %c0_i32_1 = arith.constant 0 : i32
    return %c0_i32, %c0_i32_0 : i32, i32
  }
  func.func @transform_5(%arg0: i32) -> (i32, i32) {
    %c0_i32 = arith.constant 0 : i32
    %c0_i32_0 = arith.constant 0 : i32
    %c0_i32_1 = arith.constant 0 : i32
    return %c0_i32, %c0_i32_0 : i32, i32
  }
  func.func @transform_6(%arg0: i32) -> (i32, i32) {
    %c0_i32 = arith.constant 0 : i32
    %c0_i32_0 = arith.constant 0 : i32
    %c0_i32_1 = arith.constant 0 : i32
    return %c0_i32, %c0_i32_0 : i32, i32
  }
  func.func @transform_7(%arg0: i32) -> (i32, i32) {
    %c0_i32 = arith.constant 0 : i32
    %c0_i32_0 = arith.constant 0 : i32
    %c0_i32_1 = arith.constant 0 : i32
    return %c0_i32, %c0_i32_0 : i32, i32
  }
  func.func @transform_8(%arg0: i32) -> (i32, i32) {
    %c0_i32 = arith.constant 0 : i32
    %c0_i32_0 = arith.constant 0 : i32
    %c0_i32_1 = arith.constant 0 : i32
    return %c0_i32, %c0_i32_0 : i32, i32
  }
  func.func @transform_9(%arg0: i32) -> (i32, i32) {
    %c0_i32 = arith.constant 0 : i32
    %c0_i32_0 = arith.constant 0 : i32
    %c0_i32_1 = arith.constant 0 : i32
    return %c0_i32, %c0_i32_0 : i32, i32
  }
  func.func @transform_10(%arg0: i32) -> (i32, i32) {
    %c0_i32 = arith.constant 0 : i32
    %c0_i32_0 = arith.constant 0 : i32
    %c0_i32_1 = arith.constant 0 : i32
    return %c0_i32, %c0_i32_0 : i32, i32
  }
  func.func @transform_11(%arg0: i32) -> (i32, i32, i32) {
    %c0_i32 = arith.constant 0 : i32
    %c0_i32_0 = arith.constant 0 : i32
    %c0_i32_1 = arith.constant 0 : i32
    return %arg0, %c0_i32, %c0_i32_0 : i32, i32, i32
  }
}

</mosaic_0001>

<llo_original>
// kernel: fused_forward.1
$region0: #{fused_forward.1}
  #allocation0 [shape = 'u32[]', space=smem, size = 0x4, offset = 0x4, fixed_abs, tag = 'smem constant byte address 0x4 - core index']
  #allocation1 [shape = 'u32[144,128]{1,0:T(1,128)}', space=vmem, size = 0x12000, scoped, tag = 'internal scratch']
  #allocation2 [shape = 'f32[64,144]{1,0:T(8,128)}', space=vmem, size = 0x10000, scoped, tag = 'scratch operand']
  #allocation3 [shape = 'bf16[576,128]{1,0:T(16,128)(2,1)}', space=vmem, size = 0x24000, scoped, tag = 'scratch operand']
  %s0 = inlined_call_operand.vmem [shape: f32[2,256,3], index: 0, kind: input, shape index: {}]
  %s1 = inlined_call_operand.vmem [shape: bf16[9,64,256], index: 1, kind: input, shape index: {}]
  %s2 = inlined_call_operand.vmem [shape: bf16[232,576], index: 2, kind: input, shape index: {}]
  %s3 = inlined_call_operand.vmem [shape: bf16[3,8], index: 3, kind: input, shape index: {}]
  %s4 = inlined_call_operand.vmem [shape: f32[1,8], index: 4, kind: input, shape index: {}]
  %s5 = inlined_call_operand.vmem [shape: bf16[8,16], index: 5, kind: input, shape index: {}]
  %s6 = inlined_call_operand.vmem [shape: f32[1,16], index: 6, kind: input, shape index: {}]
  %s7 = inlined_call_operand.vmem [shape: bf16[144,64], index: 7, kind: input, shape index: {}]
  %s8 = inlined_call_operand.vmem [shape: f32[1,64], index: 8, kind: input, shape index: {}]
  %s9 = inlined_call_operand.vmem [shape: bf16[64,1152], index: 9, kind: input, shape index: {}]
  %s10 = inlined_call_operand.vmem [shape: f32[1,128], index: 10, kind: input, shape index: {}]
  %s11 = inlined_call_operand.vmem [shape: f32[2,232,128], index: 11, kind: output, shape index: {}]
  %s12 = sld [smem:[#allocation0]]
  $region77: #{fused_forward.1} parent=0
    _
  %s14 = ssub.s32 1, %s12
  %s15 = scalar_select 0, %s14, %s12
  loop: start=0, step=1, limit=4
  $region2: #{fused_forward.1} parent=0 // loop_pre_header
    _
  $region3: #{fused_forward.1} parent=0 // loop_header
    %s17 = sphi 0, %s21
    %p18 = scmp.ge.s32.totalorder %s17, 4
    %s27 = sphi 0, %s29
    %s30 = sphi 0, %s27
    %s31 = sphi 0, %s30
    %s47 = sphi 0, %s31
    %s51 = sphi 0, %s51
    %s53 = sphi 0, %s51
    %s54 = sphi 0, %s53
    %s68 = sphi 0, %s54
    %s72 = sphi 0, %s72
    %s74 = sphi 0, %s72
    %s75 = sphi 0, %s74
    %s89 = sphi 0, %s75
    %s93 = sphi 0, %s93
    %s95 = sphi 0, %s93
    %s96 = sphi 0, %s95
    %s110 = sphi 0, %s96
    %s114 = sphi 0, %s114
    %s116 = sphi 0, %s114
    %s117 = sphi 0, %s116
    %s131 = sphi 0, %s117
    %s135 = sphi 0, %s135
    %s137 = sphi 0, %s135
    %s138 = sphi 0, %s137
    %s152 = sphi 0, %s138
    %s156 = sphi 0, %s156
    %s158 = sphi 0, %s156
    %s159 = sphi 0, %s158
    %s173 = sphi 0, %s159
    %s177 = sphi 0, %s177
    %s179 = sphi 0, %s177
    %s180 = sphi 0, %s179
    %s194 = sphi 0, %s180
    %s198 = sphi 0, %s198
    %s200 = sphi 0, %s198
    %s201 = sphi 0, %s200
    %s215 = sphi 0, %s201
    %s219 = sphi 0, %s219
    %s221 = sphi 0, %s219
    %s222 = sphi 0, %s221
    %s236 = sphi 0, %s222
    %s240 = sphi 0, %s240
    %s242 = sphi 0, %s240
    %s243 = sphi 0, %s242
    %s257 = sphi 0, %s243
    %s263 = sphi 0, %s265
    %s266 = sphi 0, %s263
    %s267 = sphi 0, %s266
    %s283 = sphi 0, %s267
  $region4: #{fused_forward.1} parent=0 // loop_header_branch
    %20 = sbr.rel (%p18) target = $region8
  $region5: #{fused_forward.1} parent=0 // loop_body
    %s22 = ssub.s32 %s17, 1
    %s23 = ssub.s32 %s17, 2
    %s24 = sadd.s32 %s17, 1
    %s25 = ssub.s32 %s17, %s24
    %p26 = scmp.eq.s32.totalorder %s25, 0
    %s28 = sadd.s32 %s27, 1
    %s29 = scalar_select %p26, %s27, %s28
    %p32 = pneg %p26
    %p33 = scmp.eq.s32.totalorder %s17, 1
    %p34 = por %p32, %p33
    %p35 = scmp.ne.s32.totalorder %s27, %s30
    %p36 = scmp.eq.s32.totalorder %s17, 0
    %p37 = por %p35, %p36
    %p38 = scmp.ne.s32.totalorder %s27, %s30
    %p39 = scmp.eq.s32.totalorder %s22, 1
    %p40 = por %p38, %p39
    %p41 = scmp.ne.s32.totalorder %s30, %s31
    %p42 = scmp.eq.s32.totalorder %s22, 0
    %p43 = por %p41, %p42
    %p44 = scmp.ne.s32.totalorder %s30, %s31
    %p45 = scmp.eq.s32.totalorder %s23, 1
    %p46 = por %p44, %p45
    %p48 = scmp.ne.s32.totalorder %s31, %s47
    %p49 = scmp.eq.s32.totalorder %s23, 0
    %p50 = por %p48, %p49
    %s52 = sadd.s32 %s51, 1
    %p55 = scmp.eq.s32.totalorder %s17, 1
    %p56 = scmp.ne.s32.totalorder %s51, %s53
    %p57 = scmp.eq.s32.totalorder %s17, 0
    %p58 = por %p56, %p57
    %p59 = scmp.ne.s32.totalorder %s51, %s53
    %p60 = scmp.eq.s32.totalorder %s22, 1
    %p61 = por %p59, %p60
    %p62 = scmp.ne.s32.totalorder %s53, %s54
    %p63 = scmp.eq.s32.totalorder %s22, 0
    %p64 = por %p62, %p63
    %p65 = scmp.ne.s32.totalorder %s53, %s54
    %p66 = scmp.eq.s32.totalorder %s23, 1
    %p67 = por %p65, %p66
    %p69 = scmp.ne.s32.totalorder %s54, %s68
    %p70 = scmp.eq.s32.totalorder %s23, 0
    %p71 = por %p69, %p70
    %s73 = sadd.s32 %s72, 1
    %p76 = scmp.eq.s32.totalorder %s17, 1
    %p77 = scmp.ne.s32.totalorder %s72, %s74
    %p78 = scmp.eq.s32.totalorder %s17, 0
    %p79 = por %p77, %p78
    %p80 = scmp.ne.s32.totalorder %s72, %s74
    %p81 = scmp.eq.s32.totalorder %s22, 1
    %p82 = por %p80, %p81
    %p83 = scmp.ne.s32.totalorder %s74, %s75
    %p84 = scmp.eq.s32.totalorder %s22, 0
    %p85 = por %p83, %p84
    %p86 = scmp.ne.s32.totalorder %s74, %s75
    %p87 = scmp.eq.s32.totalorder %s23, 1
    %p88 = por %p86, %p87
    %p90 = scmp.ne.s32.totalorder %s75, %s89
    %p91 = scmp.eq.s32.totalorder %s23, 0
    %p92 = por %p90, %p91
    %s94 = sadd.s32 %s93, 1
    %p97 = scmp.eq.s32.totalorder %s17, 1
    %p98 = scmp.ne.s32.totalorder %s93, %s95
    %p99 = scmp.eq.s32.totalorder %s17, 0
    %p100 = por %p98, %p99
    %p101 = scmp.ne.s32.totalorder %s93, %s95
    %p102 = scmp.eq.s32.totalorder %s22, 1
    %p103 = por %p101, %p102
    %p104 = scmp.ne.s32.totalorder %s95, %s96
    %p105 = scmp.eq.s32.totalorder %s22, 0
    %p106 = por %p104, %p105
    %p107 = scmp.ne.s32.totalorder %s95, %s96
    %p108 = scmp.eq.s32.totalorder %s23, 1
    %p109 = por %p107, %p108
    %p111 = scmp.ne.s32.totalorder %s96, %s110
    %p112 = scmp.eq.s32.totalorder %s23, 0
    %p113 = por %p111, %p112
    %s115 = sadd.s32 %s114, 1
    %p118 = scmp.eq.s32.totalorder %s17, 1
    %p119 = scmp.ne.s32.totalorder %s114, %s116
    %p120 = scmp.eq.s32.totalorder %s17, 0
    %p121 = por %p119, %p120
    %p122 = scmp.ne.s32.totalorder %s114, %s116
    %p123 = scmp.eq.s32.totalorder %s22, 1
    %p124 = por %p122, %p123
    %p125 = scmp.ne.s32.totalorder %s116, %s117
    %p126 = scmp.eq.s32.totalorder %s22, 0
    %p127 = por %p125, %p126
    %p128 = scmp.ne.s32.totalorder %s116, %s117
    %p129 = scmp.eq.s32.totalorder %s23, 1
    %p130 = por %p128, %p129
    %p132 = scmp.ne.s32.totalorder %s117, %s131
    %p133 = scmp.eq.s32.totalorder %s23, 0
    %p134 = por %p132, %p133
    %s136 = sadd.s32 %s135, 1
    %p139 = scmp.eq.s32.totalorder %s17, 1
    %p140 = scmp.ne.s32.totalorder %s135, %s137
    %p141 = scmp.eq.s32.totalorder %s17, 0
    %p142 = por %p140, %p141
    %p143 = scmp.ne.s32.totalorder %s135, %s137
    %p144 = scmp.eq.s32.totalorder %s22, 1
    %p145 = por %p143, %p144
    %p146 = scmp.ne.s32.totalorder %s137, %s138
    %p147 = scmp.eq.s32.totalorder %s22, 0
    %p148 = por %p146, %p147
    %p149 = scmp.ne.s32.totalorder %s137, %s138
    %p150 = scmp.eq.s32.totalorder %s23, 1
    %p151 = por %p149, %p150
    %p153 = scmp.ne.s32.totalorder %s138, %s152
    %p154 = scmp.eq.s32.totalorder %s23, 0
    %p155 = por %p153, %p154
    %s157 = sadd.s32 %s156, 1
    %p160 = scmp.eq.s32.totalorder %s17, 1
    %p161 = scmp.ne.s32.totalorder %s156, %s158
    %p162 = scmp.eq.s32.totalorder %s17, 0
    %p163 = por %p161, %p162
    %p164 = scmp.ne.s32.totalorder %s156, %s158
    %p165 = scmp.eq.s32.totalorder %s22, 1
    %p166 = por %p164, %p165
    %p167 = scmp.ne.s32.totalorder %s158, %s159
    %p168 = scmp.eq.s32.totalorder %s22, 0
    %p169 = por %p167, %p168
    %p170 = scmp.ne.s32.totalorder %s158, %s159
    %p171 = scmp.eq.s32.totalorder %s23, 1
    %p172 = por %p170, %p171
    %p174 = scmp.ne.s32.totalorder %s159, %s173
    %p175 = scmp.eq.s32.totalorder %s23, 0
    %p176 = por %p174, %p175
    %s178 = sadd.s32 %s177, 1
    %p181 = scmp.eq.s32.totalorder %s17, 1
    %p182 = scmp.ne.s32.totalorder %s177, %s179
    %p183 = scmp.eq.s32.totalorder %s17, 0
    %p184 = por %p182, %p183
    %p185 = scmp.ne.s32.totalorder %s177, %s179
    %p186 = scmp.eq.s32.totalorder %s22, 1
    %p187 = por %p185, %p186
    %p188 = scmp.ne.s32.totalorder %s179, %s180
    %p189 = scmp.eq.s32.totalorder %s22, 0
    %p190 = por %p188, %p189
    %p191 = scmp.ne.s32.totalorder %s179, %s180
    %p192 = scmp.eq.s32.totalorder %s23, 1
    %p193 = por %p191, %p192
    %p195 = scmp.ne.s32.totalorder %s180, %s194
    %p196 = scmp.eq.s32.totalorder %s23, 0
    %p197 = por %p195, %p196
    %s199 = sadd.s32 %s198, 1
    %p202 = scmp.eq.s32.totalorder %s17, 1
    %p203 = scmp.ne.s32.totalorder %s198, %s200
    %p204 = scmp.eq.s32.totalorder %s17, 0
    %p205 = por %p203, %p204
    %p206 = scmp.ne.s32.totalorder %s198, %s200
    %p207 = scmp.eq.s32.totalorder %s22, 1
    %p208 = por %p206, %p207
    %p209 = scmp.ne.s32.totalorder %s200, %s201
    %p210 = scmp.eq.s32.totalorder %s22, 0
    %p211 = por %p209, %p210
    %p212 = scmp.ne.s32.totalorder %s200, %s201
    %p213 = scmp.eq.s32.totalorder %s23, 1
    %p214 = por %p212, %p213
    %p216 = scmp.ne.s32.totalorder %s201, %s215
    %p217 = scmp.eq.s32.totalorder %s23, 0
    %p218 = por %p216, %p217
    %s220 = sadd.s32 %s219, 1
    %p223 = scmp.eq.s32.totalorder %s17, 1
    %p224 = scmp.ne.s32.totalorder %s219, %s221
    %p225 = scmp.eq.s32.totalorder %s17, 0
    %p226 = por %p224, %p225
    %p227 = scmp.ne.s32.totalorder %s219, %s221
    %p228 = scmp.eq.s32.totalorder %s22, 1
    %p229 = por %p227, %p228
    %p230 = scmp.ne.s32.totalorder %s221, %s222
    %p231 = scmp.eq.s32.totalorder %s22, 0
    %p232 = por %p230, %p231
    %p233 = scmp.ne.s32.totalorder %s221, %s222
    %p234 = scmp.eq.s32.totalorder %s23, 1
    %p235 = por %p233, %p234
    %p237 = scmp.ne.s32.totalorder %s222, %s236
    %p238 = scmp.eq.s32.totalorder %s23, 0
    %p239 = por %p237, %p238
    %s241 = sadd.s32 %s240, 1
    %p244 = scmp.eq.s32.totalorder %s17, 1
    %p245 = scmp.ne.s32.totalorder %s240, %s242
    %p246 = scmp.eq.s32.totalorder %s17, 0
    %p247 = por %p245, %p246
    %p248 = scmp.ne.s32.totalorder %s240, %s242
    %p249 = scmp.eq.s32.totalorder %s22, 1
    %p250 = por %p248, %p249
    %p251 = scmp.ne.s32.totalorder %s242, %s243
    %p252 = scmp.eq.s32.totalorder %s22, 0
    %p253 = por %p251, %p252
    %p254 = scmp.ne.s32.totalorder %s242, %s243
    %p255 = scmp.eq.s32.totalorder %s23, 1
    %p256 = por %p254, %p255
    %p258 = scmp.ne.s32.totalorder %s243, %s257
    %p259 = scmp.eq.s32.totalorder %s23, 0
    %p260 = por %p258, %p259
    %s261 = ssub.s32 %s17, %s24
    %p262 = scmp.eq.s32.totalorder %s261, 0
    %s264 = sadd.s32 %s263, 1
    %s265 = scalar_select %p262, %s263, %s264
    %p268 = pneg %p262
    %p269 = scmp.eq.s32.totalorder %s17, 1
    %p270 = por %p268, %p269
    %p271 = scmp.ne.s32.totalorder %s263, %s266
    %p272 = scmp.eq.s32.totalorder %s17, 0
    %p273 = por %p271, %p272
    %p274 = scmp.ne.s32.totalorder %s263, %s266
    %p275 = scmp.eq.s32.totalorder %s22, 1
    %p276 = por %p274, %p275
    %p277 = scmp.ne.s32.totalorder %s266, %s267
    %p278 = scmp.eq.s32.totalorder %s22, 0
    %p279 = por %p277, %p278
    %p280 = scmp.ne.s32.totalorder %s266, %s267
    %p281 = scmp.eq.s32.totalorder %s23, 1
    %p282 = por %p280, %p281
    %p284 = scmp.ne.s32.totalorder %s267, %s283
    %p285 = scmp.eq.s32.totalorder %s23, 0
    %p286 = por %p284, %p285
    %p287 = scmp.le.s32.totalorder 1, %s17
    %p288 = scmp.lt.s32.totalorder %s17, 3
    %p289 = pnand %p287, %p288
    %p290 = pneg %p289
    // Predicated region
    $region9: #{fused_forward.1} parent=5 // pred_check
      _
    $region10: #{fused_forward.1} parent=5 // pred_check_branch
      %292 = sbr.rel (%p289) target = $region12
    $region11: #{fused_forward.1} parent=5 // pred_region
      %s293 = ssub.s32 %s17, 1
      // Predicated region
      $region13: #{fused_forward.1} parent=11 // pred_check
        %p294 = pneg %p64
      $region14: #{fused_forward.1} parent=11 // pred_check_branch
        %296 = sbr.rel (%p294) target = $region16
      $region15: #{fused_forward.1} parent=11 // pred_region
        _
      $region16: #{fused_forward.1} parent=11 // pred_fallthru
        _
      // Predicated region
      $region17: #{fused_forward.1} parent=11 // pred_check
        %p297 = pneg %p85
      $region18: #{fused_forward.1} parent=11 // pred_check_branch
        %299 = sbr.rel (%p297) target = $region20
      $region19: #{fused_forward.1} parent=11 // pred_region
        _
      $region20: #{fused_forward.1} parent=11 // pred_fallthru
        _
      // Predicated region
      $region21: #{fused_forward.1} parent=11 // pred_check
        %p300 = pneg %p106
      $region22: #{fused_forward.1} parent=11 // pred_check_branch
        %302 = sbr.rel (%p300) target = $region24
      $region23: #{fused_forward.1} parent=11 // pred_region
        _
      $region24: #{fused_forward.1} parent=11 // pred_fallthru
        _
      // Predicated region
      $region25: #{fused_forward.1} parent=11 // pred_check
        %p303 = pneg %p127
      $region26: #{fused_forward.1} parent=11 // pred_check_branch
        %305 = sbr.rel (%p303) target = $region28
      $region27: #{fused_forward.1} parent=11 // pred_region
        _
      $region28: #{fused_forward.1} parent=11 // pred_fallthru
        _
      // Predicated region
      $region29: #{fused_forward.1} parent=11 // pred_check
        %p306 = pneg %p148
      $region30: #{fused_forward.1} parent=11 // pred_check_branch
        %308 = sbr.rel (%p306) target = $region32
      $region31: #{fused_forward.1} parent=11 // pred_region
        _
      $region32: #{fused_forward.1} parent=11 // pred_fallthru
        _
      // Predicated region
      $region33: #{fused_forward.1} parent=11 // pred_check
        %p309 = pneg %p169
      $region34: #{fused_forward.1} parent=11 // pred_check_branch
        %311 = sbr.rel (%p309) target = $region36
      $region35: #{fused_forward.1} parent=11 // pred_region
        _
      $region36: #{fused_forward.1} parent=11 // pred_fallthru
        _
      // Predicated region
      $region37: #{fused_forward.1} parent=11 // pred_check
        %p312 = pneg %p190
      $region38: #{fused_forward.1} parent=11 // pred_check_branch
        %314 = sbr.rel (%p312) target = $region40
      $region39: #{fused_forward.1} parent=11 // pred_region
        _
      $region40: #{fused_forward.1} parent=11 // pred_fallthru
        _
      // Predicated region
      $region41: #{fused_forward.1} parent=11 // pred_check
        %p315 = pneg %p211
      $region42: #{fused_forward.1} parent=11 // pred_check_branch
        %317 = sbr.rel (%p315) target = $region44
      $region43: #{fused_forward.1} parent=11 // pred_region
        _
      $region44: #{fused_forward.1} parent=11 // pred_fallthru
        _
      // Predicated region
      $region45: #{fused_forward.1} parent=11 // pred_check
        %p318 = pneg %p232
      $region46: #{fused_forward.1} parent=11 // pred_check_branch
        %320 = sbr.rel (%p318) target = $region48
      $region47: #{fused_forward.1} parent=11 // pred_region
        _
      $region48: #{fused_forward.1} parent=11 // pred_fallthru
        _
      // Predicated region
      $region49: #{fused_forward.1} parent=11 // pred_check
        %p321 = pneg %p253
      $region50: #{fused_forward.1} parent=11 // pred_check_branch
        %323 = sbr.rel (%p321) target = $region52
      $region51: #{fused_forward.1} parent=11 // pred_region
        _
      $region52: #{fused_forward.1} parent=11 // pred_fallthru
        _
    $region12: #{fused_forward.1} parent=5 // pred_fallthru
      _
    %p324 = scmp.lt.s32.totalorder %s17, 2
    // Predicated region
    $region53: #{fused_forward.1} parent=5 // pred_check
      %p325 = pneg %p324
    $region54: #{fused_forward.1} parent=5 // pred_check_branch
      %327 = sbr.rel (%p325) target = $region56
    $region55: #{fused_forward.1} parent=5 // pred_region
      // Predicated region
      $region57: #{fused_forward.1} parent=55 // pred_check
        %p328 = pneg %p37
      $region58: #{fused_forward.1} parent=55 // pred_check_branch
        %330 = sbr.rel (%p328) target = $region60
      $region59: #{fused_forward.1} parent=55 // pred_region
        %p331 = scmp.lt.s32.totalorder %s17, 1
        %s332 = scalar_select %p331, %s17, 1
        %s333 = smul.addr %s332, 32
        %s334 = smul.addr %s333, 8
        %s335 = scalar_lea.vmem %s0, %s334
      $region60: #{fused_forward.1} parent=55 // pred_fallthru
        _
    $region56: #{fused_forward.1} parent=5 // pred_fallthru
      _
    %p336 = scmp.le.s32.totalorder 1, %s17
    %p337 = scmp.lt.s32.totalorder %s17, 3
    %p338 = pnand %p336, %p337
    %p339 = pneg %p338
    // Predicated region
    $region61: #{fused_forward.1} parent=5 // pred_check
      _
    $region62: #{fused_forward.1} parent=5 // pred_check_branch
      %341 = sbr.rel (%p338) target = $region64
    $region63: #{fused_forward.1} parent=5 // pred_region
      %s342 = ssub.s32 %s17, 1
      %p343 = scmp.lt.s32.totalorder %s22, 1
      %s344 = scalar_select %p343, %s22, 1
      %s345 = smul.addr %s344, 32
      %s346 = smul.addr %s345, 8
      %s347 = scalar_lea.vmem %s0, %s346
      %p348 = pneg %p43
      %p349 = pneg %p40
      %p350 = pneg %p64
      %p351 = pneg %p61
      %p352 = pneg %p85
      %p353 = pneg %p82
      %p354 = pneg %p106
      %p355 = pneg %p103
      %p356 = pneg %p127
      %p357 = pneg %p124
      %p358 = pneg %p148
      %p359 = pneg %p145
      %p360 = pneg %p169
      %p361 = pneg %p166
      %p362 = pneg %p190
      %p363 = pneg %p187
      %p364 = pneg %p211
      %p365 = pneg %p208
      %p366 = pneg %p232
      %p367 = pneg %p229
      %p368 = pneg %p253
      %p369 = pneg %p250
      %p370 = pneg %p279
      %p371 = pneg %p276
      %p372 = scmp.lt.s32.totalorder %s22, 1
      %s373 = scalar_select %p372, %s22, 1
      %s374 = smul.addr %s373, 29
      %s375 = smul.addr %s374, 8
      %s376 = scalar_lea.vmem %s11, %s375
      %p377 = scmp.lt.s32.totalorder %s22, 1
      %s378 = scalar_select %p377, %s22, 1
      %s379 = smul.addr %s378, 32
      %s380 = smul.addr %s379, 8
      %s381 = scalar_lea.vmem %s0, %s380
      %p382 = scmp.lt.s32.totalorder %s22, 1
      %s383 = scalar_select %p382, %s22, 1
      %s384 = smul.addr %s383, 29
      %s385 = smul.addr %s384, 8
      %s386 = scalar_lea.vmem %s11, %s385
      %v388 = vld [vmem:[%s381] sm:$0xff]
      %v389 = vld [vmem:[%s381 + $0x8] sm:$0xff]
      %v390 = vld [vmem:[%s381 + $0x10] sm:$0xff]
      %v391 = vld [vmem:[%s381 + $0x18] sm:$0xff]
      %v392 = vld [vmem:[%s381 + $0x20] sm:$0xff]
      %v393 = vld [vmem:[%s381 + $0x28] sm:$0xff]
      %v394 = vld [vmem:[%s381 + $0x30] sm:$0xff]
      %v395 = vld [vmem:[%s381 + $0x38] sm:$0xff]
      %v396 = vld [vmem:[%s381 + $0x40] sm:$0xff]
      %v397 = vld [vmem:[%s381 + $0x48] sm:$0xff]
      %v398 = vld [vmem:[%s381 + $0x50] sm:$0xff]
      %v399 = vld [vmem:[%s381 + $0x58] sm:$0xff]
      %v400 = vld [vmem:[%s381 + $0x60] sm:$0xff]
      %v401 = vld [vmem:[%s381 + $0x68] sm:$0xff]
      %v402 = vld [vmem:[%s381 + $0x70] sm:$0xff]
      %v403 = vld [vmem:[%s381 + $0x78] sm:$0xff]
      %v404 = vld [vmem:[%s381 + $0x80] sm:$0xff]
      %v405 = vld [vmem:[%s381 + $0x88] sm:$0xff]
      %v406 = vld [vmem:[%s381 + $0x90] sm:$0xff]
      %v407 = vld [vmem:[%s381 + $0x98] sm:$0xff]
      %v408 = vld [vmem:[%s381 + $0xa0] sm:$0xff]
      %v409 = vld [vmem:[%s381 + $0xa8] sm:$0xff]
      %v410 = vld [vmem:[%s381 + $0xb0] sm:$0xff]
      %v411 = vld [vmem:[%s381 + $0xb8] sm:$0xff]
      %v412 = vld [vmem:[%s381 + $0xc0] sm:$0xff]
      %v413 = vld [vmem:[%s381 + $0xc8] sm:$0xff]
      %v414 = vld [vmem:[%s381 + $0xd0] sm:$0xff]
      %v415 = vld [vmem:[%s381 + $0xd8] sm:$0xff]
      %v416 = vld [vmem:[%s381 + $0xe0] sm:$0xff]
      %v417 = vld [vmem:[%s381 + $0xe8] sm:$0xff]
      %v418 = vld [vmem:[%s381 + $0xf0] sm:$0xff]
      %v419 = vld [vmem:[%s381 + $0xf8] sm:$0xff]
      %v420 = vpack.c.bf16 %v389, %v388
      %v421 = vpack.c.bf16 %v391, %v390
      %v422 = vpack.c.bf16 %v393, %v392
      %v423 = vpack.c.bf16 %v395, %v394
      %v424 = vpack.c.bf16 %v397, %v396
      %v425 = vpack.c.bf16 %v399, %v398
      %v426 = vpack.c.bf16 %v401, %v400
      %v427 = vpack.c.bf16 %v403, %v402
      %v428 = vpack.c.bf16 %v405, %v404
      %v429 = vpack.c.bf16 %v407, %v406
      %v430 = vpack.c.bf16 %v409, %v408
      %v431 = vpack.c.bf16 %v411, %v410
      %v432 = vpack.c.bf16 %v413, %v412
      %v433 = vpack.c.bf16 %v415, %v414
      %v434 = vpack.c.bf16 %v417, %v416
      %v435 = vpack.c.bf16 %v419, %v418
      %v436 = vld [vmem:[%s3] sm:$0x3]
      %v437 = vld [vmem:[%s4] sm:$0x1]
      %v439 = vlaneseq
      %v440 = vshrl.u32 %v439, 7
      %v441 = vsub.s32 0, %v440
      %v442 = vrot.slane %v437, %v441
      %vm444 = vcmask 23552
      %v446 = vsel %vm444, %v420, 0
      %v449 = vsel %vm444, %v421, 0
      %v452 = vsel %vm444, %v422, 0
      %v455 = vsel %vm444, %v423, 0
      %v458 = vsel %vm444, %v424, 0
      %v461 = vsel %vm444, %v425, 0
      %v464 = vsel %vm444, %v426, 0
      %v467 = vsel %vm444, %v427, 0
      %v470 = vsel %vm444, %v428, 0
      %v473 = vsel %vm444, %v429, 0
      %v476 = vsel %vm444, %v430, 0
      %v479 = vsel %vm444, %v431, 0
      %v482 = vsel %vm444, %v432, 0
      %v485 = vsel %vm444, %v433, 0
      %v488 = vsel %vm444, %v434, 0
      %v491 = vsel %vm444, %v435, 0
      %vm493 = vcmask 1040384
      %vm494 = vcmask 1041408
      %v495 = vsel %vm493, 4294967295, 65535
      %v496 = vsel %vm494, %v495, 0
      %v498 = vand.u32 %v436, %v496
      %500 = vmatprep.subr.bf16.mxu0 0
      %501 = vmatpush1.bf16.msra.mxu0 %v498
      %502 = vmatprep.subr.bf16.mxu0 0
      %503 = vmatpush1.bf16.msra.mxu0 0
      %504 = vmatprep.subr.bf16.mxu0 0
      %505 = vmatpush1.bf16.msra.mxu0 0
      %506 = vmatprep.subr.bf16.mxu0 0
      %507 = vmatpush1.bf16.msra.mxu0 0
      %508 = vmatprep.subr.bf16.mxu0 0
      %509 = vmatpush1.bf16.msra.mxu0 0
      %510 = vmatprep.subr.bf16.mxu0 0
      %511 = vmatpush1.bf16.msra.mxu0 0
      %512 = vmatprep.subr.bf16.mxu0 0
      %513 = vmatpush1.bf16.msra.mxu0 0
      %514 = vmatprep.subr.bf16.mxu0 0
      %515 = vmatpush1.bf16.msra.mxu0 0
      %516 = vmatprep.subr.bf16.mxu0 0
      %517 = vmatpush1.bf16.msra.mxu0 0
      %518 = vmatprep.subr.bf16.mxu0 0
      %519 = vmatpush1.bf16.msra.mxu0 0
      %520 = vmatprep.subr.bf16.mxu0 0
      %521 = vmatpush1.bf16.msra.mxu0 0
      %522 = vmatprep.subr.bf16.mxu0 0
      %523 = vmatpush1.bf16.msra.mxu0 0
      %524 = vmatprep.subr.bf16.mxu0 0
      %525 = vmatpush1.bf16.msra.mxu0 0
      %526 = vmatprep.subr.bf16.mxu0 0
      %527 = vmatpush1.bf16.msra.mxu0 0
      %528 = vmatprep.subr.bf16.mxu0 0
      %529 = vmatpush1.bf16.msra.mxu0 0
      %530 = vmatprep.subr.bf16.mxu0 0
      %531 = vmatpush1.bf16.msra.mxu0 0
      %532 = vmatprep.mubr.bf16.mxu0 0
      %533 = vmatmul.mubr.bf16.gmra.mrb[0].mxu0 %v446
      %v534 = vpop.f32.mrb[0].mxu0
      %v535 = vadd.f32 %v442, %v534
      %v536 = vpop.f32.mrb[0].mxu0
      %v537 = vpop.f32.mrb[0].mxu0
      %v538 = vadd.f32 %v442, %v537
      %v539 = vpop.f32.mrb[0].mxu0
      %540 = vmatprep.mubr.bf16.mxu0 0
      %541 = vmatmul.mubr.bf16.gmra.mrb[0].mxu0 %v449
      %v542 = vpop.f32.mrb[0].mxu0
      %v543 = vadd.f32 %v442, %v542
      %v544 = vpop.f32.mrb[0].mxu0
      %v545 = vpop.f32.mrb[0].mxu0
      %v546 = vadd.f32 %v442, %v545
      %v547 = vpop.f32.mrb[0].mxu0
      %548 = vmatprep.mubr.bf16.mxu0 0
      %549 = vmatmul.mubr.bf16.gmra.mrb[0].mxu0 %v452
      %v550 = vpop.f32.mrb[0].mxu0
      %v551 = vadd.f32 %v442, %v550
      %v552 = vpop.f32.mrb[0].mxu0
      %v553 = vpop.f32.mrb[0].mxu0
      %v554 = vadd.f32 %v442, %v553
      %v555 = vpop.f32.mrb[0].mxu0
      %556 = vmatprep.mubr.bf16.mxu0 0
      %557 = vmatmul.mubr.bf16.gmra.mrb[0].mxu0 %v455
      %v558 = vpop.f32.mrb[0].mxu0
      %v559 = vadd.f32 %v442, %v558
      %v560 = vpop.f32.mrb[0].mxu0
      %v561 = vpop.f32.mrb[0].mxu0
      %v562 = vadd.f32 %v442, %v561
      %v563 = vpop.f32.mrb[0].mxu0
      %564 = vmatprep.mubr.bf16.mxu0 0
      %565 = vmatmul.mubr.bf16.gmra.mrb[0].mxu0 %v458
      %v566 = vpop.f32.mrb[0].mxu0
      %v567 = vadd.f32 %v442, %v566
      %v568 = vpop.f32.mrb[0].mxu0
      %v569 = vpop.f32.mrb[0].mxu0
      %v570 = vadd.f32 %v442, %v569
      %v571 = vpop.f32.mrb[0].mxu0
      %572 = vmatprep.mubr.bf16.mxu0 0
      %573 = vmatmul.mubr.bf16.gmra.mrb[0].mxu0 %v461
      %v574 = vpop.f32.mrb[0].mxu0
      %v575 = vadd.f32 %v442, %v574
      %v576 = vpop.f32.mrb[0].mxu0
      %v577 = vpop.f32.mrb[0].mxu0
      %v578 = vadd.f32 %v442, %v577
      %v579 = vpop.f32.mrb[0].mxu0
      %580 = vmatprep.mubr.bf16.mxu0 0
      %581 = vmatmul.mubr.bf16.gmra.mrb[0].mxu0 %v464
      %v582 = vpop.f32.mrb[0].mxu0
      %v583 = vadd.f32 %v442, %v582
      %v584 = vpop.f32.mrb[0].mxu0
      %v585 = vpop.f32.mrb[0].mxu0
      %v586 = vadd.f32 %v442, %v585
      %v587 = vpop.f32.mrb[0].mxu0
      %588 = vmatprep.mubr.bf16.mxu0 0
      %589 = vmatmul.mubr.bf16.gmra.mrb[0].mxu0 %v467
      %v590 = vpop.f32.mrb[0].mxu0
      %v591 = vadd.f32 %v442, %v590
      %v592 = vpop.f32.mrb[0].mxu0
      %v593 = vpop.f32.mrb[0].mxu0
      %v594 = vadd.f32 %v442, %v593
      %v595 = vpop.f32.mrb[0].mxu0
      %596 = vmatprep.mubr.bf16.mxu0 0
      %597 = vmatmul.mubr.bf16.gmra.mrb[0].mxu0 %v470
      %v598 = vpop.f32.mrb[0].mxu0
      %v599 = vadd.f32 %v442, %v598
      %v600 = vpop.f32.mrb[0].mxu0
      %v601 = vpop.f32.mrb[0].mxu0
      %v602 = vadd.f32 %v442, %v601
      %v603 = vpop.f32.mrb[0].mxu0
      %604 = vmatprep.mubr.bf16.mxu0 0
      %605 = vmatmul.mubr.bf16.gmra.mrb[0].mxu0 %v473
      %v606 = vpop.f32.mrb[0].mxu0
      %v607 = vadd.f32 %v442, %v606
      %v608 = vpop.f32.mrb[0].mxu0
      %v609 = vpop.f32.mrb[0].mxu0
      %v610 = vadd.f32 %v442, %v609
      %v611 = vpop.f32.mrb[0].mxu0
      %612 = vmatprep.mubr.bf16.mxu0 0
      %613 = vmatmul.mubr.bf16.gmra.mrb[0].mxu0 %v476
      %v614 = vpop.f32.mrb[0].mxu0
      %v615 = vadd.f32 %v442, %v614
      %v616 = vpop.f32.mrb[0].mxu0
      %v617 = vpop.f32.mrb[0].mxu0
      %v618 = vadd.f32 %v442, %v617
      %v619 = vpop.f32.mrb[0].mxu0
      %620 = vmatprep.mubr.bf16.mxu0 0
      %621 = vmatmul.mubr.bf16.gmra.mrb[0].mxu0 %v479
      %v622 = vpop.f32.mrb[0].mxu0
      %v623 = vadd.f32 %v442, %v622
      %v624 = vpop.f32.mrb[0].mxu0
      %v625 = vpop.f32.mrb[0].mxu0
      %v626 = vadd.f32 %v442, %v625
      %v627 = vpop.f32.mrb[0].mxu0
      %628 = vmatprep.mubr.bf16.mxu0 0
      %629 = vmatmul.mubr.bf16.gmra.mrb[0].mxu0 %v482
      %v630 = vpop.f32.mrb[0].mxu0
      %v631 = vadd.f32 %v442, %v630
      %v632 = vpop.f32.mrb[0].mxu0
      %v633 = vpop.f32.mrb[0].mxu0
      %v634 = vadd.f32 %v442, %v633
      %v635 = vpop.f32.mrb[0].mxu0
      %636 = vmatprep.mubr.bf16.mxu0 0
      %637 = vmatmul.mubr.bf16.gmra.mrb[0].mxu0 %v485
      %v638 = vpop.f32.mrb[0].mxu0
      %v639 = vadd.f32 %v442, %v638
      %v640 = vpop.f32.mrb[0].mxu0
      %v641 = vpop.f32.mrb[0].mxu0
      %v642 = vadd.f32 %v442, %v641
      %v643 = vpop.f32.mrb[0].mxu0
      %644 = vmatprep.mubr.bf16.mxu0 0
      %645 = vmatmul.mubr.bf16.gmra.mrb[0].mxu0 %v488
      %v646 = vpop.f32.mrb[0].mxu0
      %v647 = vadd.f32 %v442, %v646
      %v648 = vpop.f32.mrb[0].mxu0
      %v649 = vpop.f32.mrb[0].mxu0
      %v650 = vadd.f32 %v442, %v649
      %v651 = vpop.f32.mrb[0].mxu0
      %652 = vmatprep.mubr.bf16.mxu0 0
      %653 = vmatmul.mubr.bf16.gmra.mrb[0].mxu0 %v491
      %v654 = vpop.f32.mrb[0].mxu0
      %v655 = vadd.f32 %v442, %v654
      %v656 = vpop.f32.mrb[0].mxu0
      %v657 = vpop.f32.mrb[0].mxu0
      %v658 = vadd.f32 %v442, %v657
      %v659 = vpop.f32.mrb[0].mxu0
      %660 = vdwg.mxu0
      %v661 = vand.u32 2147483647, %v535
      %v662 = vand.u32 2147483647, %v538
      %v663 = vand.u32 2147483647, %v543
      %v664 = vand.u32 2147483647, %v546
      %v665 = vand.u32 2147483647, %v551
      %v666 = vand.u32 2147483647, %v554
      %v667 = vand.u32 2147483647, %v559
      %v668 = vand.u32 2147483647, %v562
      %v669 = vand.u32 2147483647, %v567
      %v670 = vand.u32 2147483647, %v570
      %v671 = vand.u32 2147483647, %v575
      %v672 = vand.u32 2147483647, %v578
      %v673 = vand.u32 2147483647, %v583
      %v674 = vand.u32 2147483647, %v586
      %v675 = vand.u32 2147483647, %v591
      %v676 = vand.u32 2147483647, %v594
      %v677 = vand.u32 2147483647, %v599
      %v678 = vand.u32 2147483647, %v602
      %v679 = vand.u32 2147483647, %v607
      %v680 = vand.u32 2147483647, %v610
      %v681 = vand.u32 2147483647, %v615
      %v682 = vand.u32 2147483647, %v618
      %v683 = vand.u32 2147483647, %v623
      %v684 = vand.u32 2147483647, %v626
      %v685 = vand.u32 2147483647, %v631
      %v686 = vand.u32 2147483647, %v634
      %v687 = vand.u32 2147483647, %v639
      %v688 = vand.u32 2147483647, %v642
      %v689 = vand.u32 2147483647, %v647
      %v690 = vand.u32 2147483647, %v650
      %v691 = vand.u32 2147483647, %v655
      %v692 = vand.u32 2147483647, %v658
      %v693 = vsub.f32 0.0, %v661
      %v694 = vsub.f32 0.0, %v662
      %v695 = vsub.f32 0.0, %v663
      %v696 = vsub.f32 0.0, %v664
      %v697 = vsub.f32 0.0, %v665
      %v698 = vsub.f32 0.0, %v666
      %v699 = vsub.f32 0.0, %v667
      %v700 = vsub.f32 0.0, %v668
      %v701 = vsub.f32 0.0, %v669
      %v702 = vsub.f32 0.0, %v670
      %v703 = vsub.f32 0.0, %v671
      %v704 = vsub.f32 0.0, %v672
      %v705 = vsub.f32 0.0, %v673
      %v706 = vsub.f32 0.0, %v674
      %v707 = vsub.f32 0.0, %v675
      %v708 = vsub.f32 0.0, %v676
      %v709 = vsub.f32 0.0, %v677
      %v710 = vsub.f32 0.0, %v678
      %v711 = vsub.f32 0.0, %v679
      %v712 = vsub.f32 0.0, %v680
      %v713 = vsub.f32 0.0, %v681
      %v714 = vsub.f32 0.0, %v682
      %v715 = vsub.f32 0.0, %v683
      %v716 = vsub.f32 0.0, %v684
      %v717 = vsub.f32 0.0, %v685
      %v718 = vsub.f32 0.0, %v686
      %v719 = vsub.f32 0.0, %v687
      %v720 = vsub.f32 0.0, %v688
      %v721 = vsub.f32 0.0, %v689
      %v722 = vsub.f32 0.0, %v690
      %v723 = vsub.f32 0.0, %v691
      %v724 = vsub.f32 0.0, %v692
      %v725 = vmul.f32 %v693, 1.442695
      %v726 = vpow.pop %v725
      %v727 = vmul.f32 %v694, 1.442695
      %v728 = vpow.pop %v727
      %v729 = vmul.f32 %v695, 1.442695
      %v730 = vpow.pop %v729
      %v731 = vmul.f32 %v696, 1.442695
      %v732 = vpow.pop %v731
      %v733 = vmul.f32 %v697, 1.442695
      %v734 = vpow.pop %v733
      %v735 = vmul.f32 %v698, 1.442695
      %v736 = vpow.pop %v735
      %v737 = vmul.f32 %v699, 1.442695
      %v738 = vpow.pop %v737
      %v739 = vmul.f32 %v700, 1.442695
      %v740 = vpow.pop %v739
      %v741 = vmul.f32 %v701, 1.442695
      %v742 = vpow.pop %v741
      %v743 = vmul.f32 %v702, 1.442695
      %v744 = vpow.pop %v743
      %v745 = vmul.f32 %v703, 1.442695
      %v746 = vpow.pop %v745
      %v747 = vmul.f32 %v704, 1.442695
      %v748 = vpow.pop %v747
      %v749 = vmul.f32 %v705, 1.442695
      %v750 = vpow.pop %v749
      %v751 = vmul.f32 %v706, 1.442695
      %v752 = vpow.pop %v751
      %v753 = vmul.f32 %v707, 1.442695
      %v754 = vpow.pop %v753
      %v755 = vmul.f32 %v708, 1.442695
      %v756 = vpow.pop %v755
      %v757 = vmul.f32 %v709, 1.442695
      %v758 = vpow.pop %v757
      %v759 = vmul.f32 %v710, 1.442695
      %v760 = vpow.pop %v759
      %v761 = vmul.f32 %v711, 1.442695
      %v762 = vpow.pop %v761
      %v763 = vmul.f32 %v712, 1.442695
      %v764 = vpow.pop %v763
      %v765 = vmul.f32 %v713, 1.442695
      %v766 = vpow.pop %v765
      %v767 = vmul.f32 %v714, 1.442695
      %v768 = vpow.pop %v767
      %v769 = vmul.f32 %v715, 1.442695
      %v770 = vpow.pop %v769
      %v771 = vmul.f32 %v716, 1.442695
      %v772 = vpow.pop %v771
      %v773 = vmul.f32 %v717, 1.442695
      %v774 = vpow.pop %v773
      %v775 = vmul.f32 %v718, 1.442695
      %v776 = vpow.pop %v775
      %v777 = vmul.f32 %v719, 1.442695
      %v778 = vpow.pop %v777
      %v779 = vmul.f32 %v720, 1.442695
      %v780 = vpow.pop %v779
      %v781 = vmul.f32 %v721, 1.442695
      %v782 = vpow.pop %v781
      %v783 = vmul.f32 %v722, 1.442695
      %v784 = vpow.pop %v783
      %v785 = vmul.f32 %v723, 1.442695
      %v786 = vpow.pop %v785
      %v787 = vmul.f32 %v724, 1.442695
      %v788 = vpow.pop %v787
      %vm789 = vcmp.ge.f32.partialorder %v535, 0.0
      %vm790 = vcmp.ge.f32.partialorder %v538, 0.0
      %vm791 = vcmp.ge.f32.partialorder %v543, 0.0
      %vm792 = vcmp.ge.f32.partialorder %v546, 0.0
      %vm793 = vcmp.ge.f32.partialorder %v551, 0.0
      %vm794 = vcmp.ge.f32.partialorder %v554, 0.0
      %vm795 = vcmp.ge.f32.partialorder %v559, 0.0
      %vm796 = vcmp.ge.f32.partialorder %v562, 0.0
      %vm797 = vcmp.ge.f32.partialorder %v567, 0.0
      %vm798 = vcmp.ge.f32.partialorder %v570, 0.0
      %vm799 = vcmp.ge.f32.partialorder %v575, 0.0
      %vm800 = vcmp.ge.f32.partialorder %v578, 0.0
      %vm801 = vcmp.ge.f32.partialorder %v583, 0.0
      %vm802 = vcmp.ge.f32.partialorder %v586, 0.0
      %vm803 = vcmp.ge.f32.partialorder %v591, 0.0
      %vm804 = vcmp.ge.f32.partialorder %v594, 0.0
      %vm805 = vcmp.ge.f32.partialorder %v599, 0.0
      %vm806 = vcmp.ge.f32.partialorder %v602, 0.0
      %vm807 = vcmp.ge.f32.partialorder %v607, 0.0
      %vm808 = vcmp.ge.f32.partialorder %v610, 0.0
      %vm809 = vcmp.ge.f32.partialorder %v615, 0.0
      %vm810 = vcmp.ge.f32.partialorder %v618, 0.0
      %vm811 = vcmp.ge.f32.partialorder %v623, 0.0
      %vm812 = vcmp.ge.f32.partialorder %v626, 0.0
      %vm813 = vcmp.ge.f32.partialorder %v631, 0.0
      %vm814 = vcmp.ge.f32.partialorder %v634, 0.0
      %vm815 = vcmp.ge.f32.partialorder %v639, 0.0
      %vm816 = vcmp.ge.f32.partialorder %v642, 0.0
      %vm817 = vcmp.ge.f32.partialorder %v647, 0.0
      %vm818 = vcmp.ge.f32.partialorder %v650, 0.0
      %vm819 = vcmp.ge.f32.partialorder %v655, 0.0
      %vm820 = vcmp.ge.f32.partialorder %v658, 0.0
      %v821 = vadd.f32 %v726, 1.0
      %v822 = vadd.f32 %v728, 1.0
      %v823 = vadd.f32 %v730, 1.0
      %v824 = vadd.f32 %v732, 1.0
      %v825 = vadd.f32 %v734, 1.0
      %v826 = vadd.f32 %v736, 1.0
      %v827 = vadd.f32 %v738, 1.0
      %v828 = vadd.f32 %v740, 1.0
      %v829 = vadd.f32 %v742, 1.0
      %v830 = vadd.f32 %v744, 1.0
      %v831 = vadd.f32 %v746, 1.0
      %v832 = vadd.f32 %v748, 1.0
      %v833 = vadd.f32 %v750, 1.0
      %v834 = vadd.f32 %v752, 1.0
      %v835 = vadd.f32 %v754, 1.0
      %v836 = vadd.f32 %v756, 1.0
      %v837 = vadd.f32 %v758, 1.0
      %v838 = vadd.f32 %v760, 1.0
      %v839 = vadd.f32 %v762, 1.0
      %v840 = vadd.f32 %v764, 1.0
      %v841 = vadd.f32 %v766, 1.0
      %v842 = vadd.f32 %v768, 1.0
      %v843 = vadd.f32 %v770, 1.0
      %v844 = vadd.f32 %v772, 1.0
      %v845 = vadd.f32 %v774, 1.0
      %v846 = vadd.f32 %v776, 1.0
      %v847 = vadd.f32 %v778, 1.0
      %v848 = vadd.f32 %v780, 1.0
      %v849 = vadd.f32 %v782, 1.0
      %v850 = vadd.f32 %v784, 1.0
      %v851 = vadd.f32 %v786, 1.0
      %v852 = vadd.f32 %v788, 1.0
      %v853 = vrcp.pop %v821
      %v854 = vmul.f32 1.0, %v853
      %v855 = vrcp.pop %v822
      %v856 = vmul.f32 1.0, %v855
      %v857 = vrcp.pop %v823
      %v858 = vmul.f32 1.0, %v857
      %v859 = vrcp.pop %v824
      %v860 = vmul.f32 1.0, %v859
      %v861 = vrcp.pop %v825
      %v862 = vmul.f32 1.0, %v861
      %v863 = vrcp.pop %v826
      %v864 = vmul.f32 1.0, %v863
      %v865 = vrcp.pop %v827
      %v866 = vmul.f32 1.0, %v865
      %v867 = vrcp.pop %v828
      %v868 = vmul.f32 1.0, %v867
      %v869 = vrcp.pop %v829
      %v870 = vmul.f32 1.0, %v869
      %v871 = vrcp.pop %v830
      %v872 = vmul.f32 1.0, %v871
      %v873 = vrcp.pop %v831
      %v874 = vmul.f32 1.0, %v873
      %v875 = vrcp.pop %v832
      %v876 = vmul.f32 1.0, %v875
      %v877 = vrcp.pop %v833
      %v878 = vmul.f32 1.0, %v877
      %v879 = vrcp.pop %v834
      %v880 = vmul.f32 1.0, %v879
      %v881 = vrcp.pop %v835
      %v882 = vmul.f32 1.0, %v881
      %v883 = vrcp.pop %v836
      %v884 = vmul.f32 1.0, %v883
      %v885 = vrcp.pop %v837
      %v886 = vmul.f32 1.0, %v885
      %v887 = vrcp.pop %v838
      %v888 = vmul.f32 1.0, %v887
      %v889 = vrcp.pop %v839
      %v890 = vmul.f32 1.0, %v889
      %v891 = vrcp.pop %v840
      %v892 = vmul.f32 1.0, %v891
      %v893 = vrcp.pop %v841
      %v894 = vmul.f32 1.0, %v893
      %v895 = vrcp.pop %v842
      %v896 = vmul.f32 1.0, %v895
      %v897 = vrcp.pop %v843
      %v898 = vmul.f32 1.0, %v897
      %v899 = vrcp.pop %v844
      %v900 = vmul.f32 1.0, %v899
      %v901 = vrcp.pop %v845
      %v902 = vmul.f32 1.0, %v901
      %v903 = vrcp.pop %v846
      %v904 = vmul.f32 1.0, %v903
      %v905 = vrcp.pop %v847
      %v906 = vmul.f32 1.0, %v905
      %v907 = vrcp.pop %v848
      %v908 = vmul.f32 1.0, %v907
      %v909 = vrcp.pop %v849
      %v910 = vmul.f32 1.0, %v909
      %v911 = vrcp.pop %v850
      %v912 = vmul.f32 1.0, %v911
      %v913 = vrcp.pop %v851
      %v914 = vmul.f32 1.0, %v913
      %v915 = vrcp.pop %v852
      %v916 = vmul.f32 1.0, %v915
      %v917 = vmul.f32 %v726, %v853
      %v918 = vmul.f32 %v728, %v855
      %v919 = vmul.f32 %v730, %v857
      %v920 = vmul.f32 %v732, %v859
      %v921 = vmul.f32 %v734, %v861
      %v922 = vmul.f32 %v736, %v863
      %v923 = vmul.f32 %v738, %v865
      %v924 = vmul.f32 %v740, %v867
      %v925 = vmul.f32 %v742, %v869
      %v926 = vmul.f32 %v744, %v871
      %v927 = vmul.f32 %v746, %v873
      %v928 = vmul.f32 %v748, %v875
      %v929 = vmul.f32 %v750, %v877
      %v930 = vmul.f32 %v752, %v879
      %v931 = vmul.f32 %v754, %v881
      %v932 = vmul.f32 %v756, %v883
      %v933 = vmul.f32 %v758, %v885
      %v934 = vmul.f32 %v760, %v887
      %v935 = vmul.f32 %v762, %v889
      %v936 = vmul.f32 %v764, %v891
      %v937 = vmul.f32 %v766, %v893
      %v938 = vmul.f32 %v768, %v895
      %v939 = vmul.f32 %v770, %v897
      %v940 = vmul.f32 %v772, %v899
      %v941 = vmul.f32 %v774, %v901
      %v942 = vmul.f32 %v776, %v903
      %v943 = vmul.f32 %v778, %v905
      %v944 = vmul.f32 %v780, %v907
      %v945 = vmul.f32 %v782, %v909
      %v946 = vmul.f32 %v784, %v911
      %v947 = vmul.f32 %v786, %v913
      %v948 = vmul.f32 %v788, %v915
      %v949 = vsel %vm789, %v854, %v917
      %v950 = vsel %vm790, %v856, %v918
      %v951 = vsel %vm791, %v858, %v919
      %v952 = vsel %vm792, %v860, %v920
      %v953 = vsel %vm793, %v862, %v921
      %v954 = vsel %vm794, %v864, %v922
      %v955 = vsel %vm795, %v866, %v923
      %v956 = vsel %vm796, %v868, %v924
      %v957 = vsel %vm797, %v870, %v925
      %v958 = vsel %vm798, %v872, %v926
      %v959 = vsel %vm799, %v874, %v927
      %v960 = vsel %vm800, %v876, %v928
      %v961 = vsel %vm801, %v878, %v929
      %v962 = vsel %vm802, %v880, %v930
      %v963 = vsel %vm803, %v882, %v931
      %v964 = vsel %vm804, %v884, %v932
      %v965 = vsel %vm805, %v886, %v933
      %v966 = vsel %vm806, %v888, %v934
      %v967 = vsel %vm807, %v890, %v935
      %v968 = vsel %vm808, %v892, %v936
      %v969 = vsel %vm809, %v894, %v937
      %v970 = vsel %vm810, %v896, %v938
      %v971 = vsel %vm811, %v898, %v939
      %v972 = vsel %vm812, %v900, %v940
      %v973 = vsel %vm813, %v902, %v941
      %v974 = vsel %vm814, %v904, %v942
      %v975 = vsel %vm815, %v906, %v943
      %v976 = vsel %vm816, %v908, %v944
      %v977 = vsel %vm817, %v910, %v945
      %v978 = vsel %vm818, %v912, %v946
      %v979 = vsel %vm819, %v914, %v947
      %v980 = vsel %vm820, %v916, %v948
      %v981 = vpack.c.bf16 %v950, %v949
      %v982 = vpack.c.bf16 %v952, %v951
      %v983 = vpack.c.bf16 %v954, %v953
      %v984 = vpack.c.bf16 %v956, %v955
      %v985 = vpack.c.bf16 %v958, %v957
      %v986 = vpack.c.bf16 %v960, %v959
      %v987 = vpack.c.bf16 %v962, %v961
      %v988 = vpack.c.bf16 %v964, %v963
      %v989 = vpack.c.bf16 %v966, %v965
      %v990 = vpack.c.bf16 %v968, %v967
      %v991 = vpack.c.bf16 %v970, %v969
      %v992 = vpack.c.bf16 %v972, %v971
      %v993 = vpack.c.bf16 %v974, %v973
      %v994 = vpack.c.bf16 %v976, %v975
      %v995 = vpack.c.bf16 %v978, %v977
      %v996 = vpack.c.bf16 %v980, %v979
      %v997 = vld [vmem:[%s5] sm:$0xf]
      %v998 = vld [vmem:[%s6] sm:$0x1]
      %v1000 = vlaneseq
      %v1001 = vshrl.u32 %v1000, 7
      %v1002 = vsub.s32 0, %v1001
      %v1003 = vrot.slane %v998, %v1002
      %vm1005 = vcmask 64512
      %v1007 = vsel %vm1005, %v981, 0
      %v1010 = vsel %vm1005, %v982, 0
      %v1013 = vsel %vm1005, %v983, 0
      %v1016 = vsel %vm1005, %v984, 0
      %v1019 = vsel %vm1005, %v985, 0
      %v1022 = vsel %vm1005, %v986, 0
      %v1025 = vsel %vm1005, %v987, 0
      %v1028 = vsel %vm1005, %v988, 0
      %v1031 = vsel %vm1005, %v989, 0
      %v1034 = vsel %vm1005, %v990, 0
      %v1037 = vsel %vm1005, %v991, 0
      %v1040 = vsel %vm1005, %v992, 0
      %v1043 = vsel %vm1005, %v993, 0
      %v1046 = vsel %vm1005, %v994, 0
      %v1049 = vsel %vm1005, %v995, 0
      %v1052 = vsel %vm1005, %v996, 0
      %vm1054 = vcmask 1043456
      %v1056 = vsel %vm1054, %v997, 0
      %1058 = vmatprep.subr.bf16.mxu0 0
      %1059 = vmatpush1.bf16.msra.mxu0 %v1056
      %1060 = vmatprep.subr.bf16.mxu0 0
      %1061 = vmatpush1.bf16.msra.mxu0 0
      %1062 = vmatprep.subr.bf16.mxu0 0
      %1063 = vmatpush1.bf16.msra.mxu0 0
      %1064 = vmatprep.subr.bf16.mxu0 0
      %1065 = vmatpush1.bf16.msra.mxu0 0
      %1066 = vmatprep.subr.bf16.mxu0 0
      %1067 = vmatpush1.bf16.msra.mxu0 0
      %1068 = vmatprep.subr.bf16.mxu0 0
      %1069 = vmatpush1.bf16.msra.mxu0 0
      %1070 = vmatprep.subr.bf16.mxu0 0
      %1071 = vmatpush1.bf16.msra.mxu0 0
      %1072 = vmatprep.subr.bf16.mxu0 0
      %1073 = vmatpush1.bf16.msra.mxu0 0
      %1074 = vmatprep.subr.bf16.mxu0 0
      %1075 = vmatpush1.bf16.msra.mxu0 0
      %1076 = vmatprep.subr.bf16.mxu0 0
      %1077 = vmatpush1.bf16.msra.mxu0 0
      %1078 = vmatprep.subr.bf16.mxu0 0
      %1079 = vmatpush1.bf16.msra.mxu0 0
      %1080 = vmatprep.subr.bf16.mxu0 0
      %1081 = vmatpush1.bf16.msra.mxu0 0
      %1082 = vmatprep.subr.bf16.mxu0 0
      %1083 = vmatpush1.bf16.msra.mxu0 0
      %1084 = vmatprep.subr.bf16.mxu0 0
      %1085 = vmatpush1.bf16.msra.mxu0 0
      %1086 = vmatprep.subr.bf16.mxu0 0
      %1087 = vmatpush1.bf16.msra.mxu0 0
      %1088 = vmatprep.subr.bf16.mxu0 0
      %1089 = vmatpush1.bf16.msra.mxu0 0
      %1090 = vmatprep.mubr.bf16.mxu0 0
      %1091 = vmatmul.mubr.bf16.gmra.mrb[0].mxu0 %v1007
      %v1092 = vpop.f32.mrb[0].mxu0
      %v1093 = vadd.f32 %v1003, %v1092
      %v1094 = vpop.f32.mrb[0].mxu0
      %v1095 = vpop.f32.mrb[0].mxu0
      %v1096 = vadd.f32 %v1003, %v1095
      %v1097 = vpop.f32.mrb[0].mxu0
      %1098 = vmatprep.mubr.bf16.mxu0 0
      %1099 = vmatmul.mubr.bf16.gmra.mrb[0].mxu0 %v1010
      %v1100 = vpop.f32.mrb[0].mxu0
      %v1101 = vadd.f32 %v1003, %v1100
      %v1102 = vpop.f32.mrb[0].mxu0
      %v1103 = vpop.f32.mrb[0].mxu0
      %v1104 = vadd.f32 %v1003, %v1103
      %v1105 = vpop.f32.mrb[0].mxu0
      %1106 = vmatprep.mubr.bf16.mxu0 0
      %1107 = vmatmul.mubr.bf16.gmra.mrb[0].mxu0 %v1013
      %v1108 = vpop.f32.mrb[0].mxu0
      %v1109 = vadd.f32 %v1003, %v1108
      %v1110 = vpop.f32.mrb[0].mxu0
      %v1111 = vpop.f32.mrb[0].mxu0
      %v1112 = vadd.f32 %v1003, %v1111
      %v1113 = vpop.f32.mrb[0].mxu0
      %1114 = vmatprep.mubr.bf16.mxu0 0
      %1115 = vmatmul.mubr.bf16.gmra.mrb[0].mxu0 %v1016
      %v1116 = vpop.f32.mrb[0].mxu0
      %v1117 = vadd.f32 %v1003, %v1116
      %v1118 = vpop.f32.mrb[0].mxu0
      %v1119 = vpop.f32.mrb[0].mxu0
      %v1120 = vadd.f32 %v1003, %v1119
      %v1121 = vpop.f32.mrb[0].mxu0
      %1122 = vmatprep.mubr.bf16.mxu0 0
      %1123 = vmatmul.mubr.bf16.gmra.mrb[0].mxu0 %v1019
      %v1124 = vpop.f32.mrb[0].mxu0
      %v1125 = vadd.f32 %v1003, %v1124
      %v1126 = vpop.f32.mrb[0].mxu0
      %v1127 = vpop.f32.mrb[0].mxu0
      %v1128 = vadd.f32 %v1003, %v1127
      %v1129 = vpop.f32.mrb[0].mxu0
      %1130 = vmatprep.mubr.bf16.mxu0 0
      %1131 = vmatmul.mubr.bf16.gmra.mrb[0].mxu0 %v1022
      %v1132 = vpop.f32.mrb[0].mxu0
      %v1133 = vadd.f32 %v1003, %v1132
      %v1134 = vpop.f32.mrb[0].mxu0
      %v1135 = vpop.f32.mrb[0].mxu0
      %v1136 = vadd.f32 %v1003, %v1135
      %v1137 = vpop.f32.mrb[0].mxu0
      %1138 = vmatprep.mubr.bf16.mxu0 0
      %1139 = vmatmul.mubr.bf16.gmra.mrb[0].mxu0 %v1025
      %v1140 = vpop.f32.mrb[0].mxu0
      %v1141 = vadd.f32 %v1003, %v1140
      %v1142 = vpop.f32.mrb[0].mxu0
      %v1143 = vpop.f32.mrb[0].mxu0
      %v1144 = vadd.f32 %v1003, %v1143
      %v1145 = vpop.f32.mrb[0].mxu0
      %1146 = vmatprep.mubr.bf16.mxu0 0
      %1147 = vmatmul.mubr.bf16.gmra.mrb[0].mxu0 %v1028
      %v1148 = vpop.f32.mrb[0].mxu0
      %v1149 = vadd.f32 %v1003, %v1148
      %v1150 = vpop.f32.mrb[0].mxu0
      %v1151 = vpop.f32.mrb[0].mxu0
      %v1152 = vadd.f32 %v1003, %v1151
      %v1153 = vpop.f32.mrb[0].mxu0
      %1154 = vmatprep.mubr.bf16.mxu0 0
      %1155 = vmatmul.mubr.bf16.gmra.mrb[0].mxu0 %v1031
      %v1156 = vpop.f32.mrb[0].mxu0
      %v1157 = vadd.f32 %v1003, %v1156
      %v1158 = vpop.f32.mrb[0].mxu0
      %v1159 = vpop.f32.mrb[0].mxu0
      %v1160 = vadd.f32 %v1003, %v1159
      %v1161 = vpop.f32.mrb[0].mxu0
      %1162 = vmatprep.mubr.bf16.mxu0 0
      %1163 = vmatmul.mubr.bf16.gmra.mrb[0].mxu0 %v1034
      %v1164 = vpop.f32.mrb[0].mxu0
      %v1165 = vadd.f32 %v1003, %v1164
      %v1166 = vpop.f32.mrb[0].mxu0
      %v1167 = vpop.f32.mrb[0].mxu0
      %v1168 = vadd.f32 %v1003, %v1167
      %v1169 = vpop.f32.mrb[0].mxu0
      %1170 = vmatprep.mubr.bf16.mxu0 0
      %1171 = vmatmul.mubr.bf16.gmra.mrb[0].mxu0 %v1037
      %v1172 = vpop.f32.mrb[0].mxu0
      %v1173 = vadd.f32 %v1003, %v1172
      %v1174 = vpop.f32.mrb[0].mxu0
      %v1175 = vpop.f32.mrb[0].mxu0
      %v1176 = vadd.f32 %v1003, %v1175
      %v1177 = vpop.f32.mrb[0].mxu0
      %1178 = vmatprep.mubr.bf16.mxu0 0
      %1179 = vmatmul.mubr.bf16.gmra.mrb[0].mxu0 %v1040
      %v1180 = vpop.f32.mrb[0].mxu0
      %v1181 = vadd.f32 %v1003, %v1180
      %v1182 = vpop.f32.mrb[0].mxu0
      %v1183 = vpop.f32.mrb[0].mxu0
      %v1184 = vadd.f32 %v1003, %v1183
      %v1185 = vpop.f32.mrb[0].mxu0
      %1186 = vmatprep.mubr.bf16.mxu0 0
      %1187 = vmatmul.mubr.bf16.gmra.mrb[0].mxu0 %v1043
      %v1188 = vpop.f32.mrb[0].mxu0
      %v1189 = vadd.f32 %v1003, %v1188
      %v1190 = vpop.f32.mrb[0].mxu0
      %v1191 = vpop.f32.mrb[0].mxu0
      %v1192 = vadd.f32 %v1003, %v1191
      %v1193 = vpop.f32.mrb[0].mxu0
      %1194 = vmatprep.mubr.bf16.mxu0 0
      %1195 = vmatmul.mubr.bf16.gmra.mrb[0].mxu0 %v1046
      %v1196 = vpop.f32.mrb[0].mxu0
      %v1197 = vadd.f32 %v1003, %v1196
      %v1198 = vpop.f32.mrb[0].mxu0
      %v1199 = vpop.f32.mrb[0].mxu0
      %v1200 = vadd.f32 %v1003, %v1199
      %v1201 = vpop.f32.mrb[0].mxu0
      %1202 = vmatprep.mubr.bf16.mxu0 0
      %1203 = vmatmul.mubr.bf16.gmra.mrb[0].mxu0 %v1049
      %v1204 = vpop.f32.mrb[0].mxu0
      %v1205 = vadd.f32 %v1003, %v1204
      %v1206 = vpop.f32.mrb[0].mxu0
      %v1207 = vpop.f32.mrb[0].mxu0
      %v1208 = vadd.f32 %v1003, %v1207
      %v1209 = vpop.f32.mrb[0].mxu0
      %1210 = vmatprep.mubr.bf16.mxu0 0
      %1211 = vmatmul.mubr.bf16.gmra.mrb[0].mxu0 %v1052
      %v1212 = vpop.f32.mrb[0].mxu0
      %v1213 = vadd.f32 %v1003, %v1212
      %v1214 = vpop.f32.mrb[0].mxu0
      %v1215 = vpop.f32.mrb[0].mxu0
      %v1216 = vadd.f32 %v1003, %v1215
      %v1217 = vpop.f32.mrb[0].mxu0
      %1218 = vdwg.mxu0
      %v1219 = vand.u32 2147483647, %v1093
      %v1220 = vand.u32 2147483647, %v1096
      %v1221 = vand.u32 2147483647, %v1101
      %v1222 = vand.u32 2147483647, %v1104
      %v1223 = vand.u32 2147483647, %v1109
      %v1224 = vand.u32 2147483647, %v1112
      %v1225 = vand.u32 2147483647, %v1117
      %v1226 = vand.u32 2147483647, %v1120
      %v1227 = vand.u32 2147483647, %v1125
      %v1228 = vand.u32 2147483647, %v1128
      %v1229 = vand.u32 2147483647, %v1133
      %v1230 = vand.u32 2147483647, %v1136
      %v1231 = vand.u32 2147483647, %v1141
      %v1232 = vand.u32 2147483647, %v1144
      %v1233 = vand.u32 2147483647, %v1149
      %v1234 = vand.u32 2147483647, %v1152
      %v1235 = vand.u32 2147483647, %v1157
      %v1236 = vand.u32 2147483647, %v1160
      %v1237 = vand.u32 2147483647, %v1165
      %v1238 = vand.u32 2147483647, %v1168
      %v1239 = vand.u32 2147483647, %v1173
      %v1240 = vand.u32 2147483647, %v1176
      %v1241 = vand.u32 2147483647, %v1181
      %v1242 = vand.u32 2147483647, %v1184
      %v1243 = vand.u32 2147483647, %v1189
      %v1244 = vand.u32 2147483647, %v1192
      %v1245 = vand.u32 2147483647, %v1197
      %v1246 = vand.u32 2147483647, %v1200
      %v1247 = vand.u32 2147483647, %v1205
      %v1248 = vand.u32 2147483647, %v1208
      %v1249 = vand.u32 2147483647, %v1213
      %v1250 = vand.u32 2147483647, %v1216
      %v1251 = vsub.f32 0.0, %v1219
      %v1252 = vsub.f32 0.0, %v1220
      %v1253 = vsub.f32 0.0, %v1221
      %v1254 = vsub.f32 0.0, %v1222
      %v1255 = vsub.f32 0.0, %v1223
      %v1256 = vsub.f32 0.0, %v1224
      %v1257 = vsub.f32 0.0, %v1225
      %v1258 = vsub.f32 0.0, %v1226
      %v1259 = vsub.f32 0.0, %v1227
      %v1260 = vsub.f32 0.0, %v1228
      %v1261 = vsub.f32 0.0, %v1229
      %v1262 = vsub.f32 0.0, %v1230
      %v1263 = vsub.f32 0.0, %v1231
      %v1264 = vsub.f32 0.0, %v1232
      %v1265 = vsub.f32 0.0, %v1233
      %v1266 = vsub.f32 0.0, %v1234
      %v1267 = vsub.f32 0.0, %v1235
      %v1268 = vsub.f32 0.0, %v1236
      %v1269 = vsub.f32 0.0, %v1237
      %v1270 = vsub.f32 0.0, %v1238
      %v1271 = vsub.f32 0.0, %v1239
      %v1272 = vsub.f32 0.0, %v1240
      %v1273 = vsub.f32 0.0, %v1241
      %v1274 = vsub.f32 0.0, %v1242
      %v1275 = vsub.f32 0.0, %v1243
      %v1276 = vsub.f32 0.0, %v1244
      %v1277 = vsub.f32 0.0, %v1245
      %v1278 = vsub.f32 0.0, %v1246
      %v1279 = vsub.f32 0.0, %v1247
      %v1280 = vsub.f32 0.0, %v1248
      %v1281 = vsub.f32 0.0, %v1249
      %v1282 = vsub.f32 0.0, %v1250
      %v1283 = vmul.f32 %v1251, 1.442695
      %v1284 = vpow.pop %v1283
      %v1285 = vmul.f32 %v1252, 1.442695
      %v1286 = vpow.pop %v1285
      %v1287 = vmul.f32 %v1253, 1.442695
      %v1288 = vpow.pop %v1287
      %v1289 = vmul.f32 %v1254, 1.442695
      %v1290 = vpow.pop %v1289
      %v1291 = vmul.f32 %v1255, 1.442695
      %v1292 = vpow.pop %v1291
      %v1293 = vmul.f32 %v1256, 1.442695
      %v1294 = vpow.pop %v1293
      %v1295 = vmul.f32 %v1257, 1.442695
      %v1296 = vpow.pop %v1295
      %v1297 = vmul.f32 %v1258, 1.442695
      %v1298 = vpow.pop %v1297
      %v1299 = vmul.f32 %v1259, 1.442695
      %v1300 = vpow.pop %v1299
      %v1301 = vmul.f32 %v1260, 1.442695
      %v1302 = vpow.pop %v1301
      %v1303 = vmul.f32 %v1261, 1.442695
      %v1304 = vpow.pop %v1303
      %v1305 = vmul.f32 %v1262, 1.442695
      %v1306 = vpow.pop %v1305
      %v1307 = vmul.f32 %v1263, 1.442695
      %v1308 = vpow.pop %v1307
      %v1309 = vmul.f32 %v1264, 1.442695
      %v1310 = vpow.pop %v1309
      %v1311 = vmul.f32 %v1265, 1.442695
      %v1312 = vpow.pop %v1311
      %v1313 = vmul.f32 %v1266, 1.442695
      %v1314 = vpow.pop %v1313
      %v1315 = vmul.f32 %v1267, 1.442695
      %v1316 = vpow.pop %v1315
      %v1317 = vmul.f32 %v1268, 1.442695
      %v1318 = vpow.pop %v1317
      %v1319 = vmul.f32 %v1269, 1.442695
      %v1320 = vpow.pop %v1319
      %v1321 = vmul.f32 %v1270, 1.442695
      %v1322 = vpow.pop %v1321
      %v1323 = vmul.f32 %v1271, 1.442695
      %v1324 = vpow.pop %v1323
      %v1325 = vmul.f32 %v1272, 1.442695
      %v1326 = vpow.pop %v1325
      %v1327 = vmul.f32 %v1273, 1.442695
      %v1328 = vpow.pop %v1327
      %v1329 = vmul.f32 %v1274, 1.442695
      %v1330 = vpow.pop %v1329
      %v1331 = vmul.f32 %v1275, 1.442695
      %v1332 = vpow.pop %v1331
      %v1333 = vmul.f32 %v1276, 1.442695
      %v1334 = vpow.pop %v1333
      %v1335 = vmul.f32 %v1277, 1.442695
      %v1336 = vpow.pop %v1335
      %v1337 = vmul.f32 %v1278, 1.442695
      %v1338 = vpow.pop %v1337
      %v1339 = vmul.f32 %v1279, 1.442695
      %v1340 = vpow.pop %v1339
      %v1341 = vmul.f32 %v1280, 1.442695
      %v1342 = vpow.pop %v1341
      %v1343 = vmul.f32 %v1281, 1.442695
      %v1344 = vpow.pop %v1343
      %v1345 = vmul.f32 %v1282, 1.442695
      %v1346 = vpow.pop %v1345
      %vm1347 = vcmp.ge.f32.partialorder %v1093, 0.0
      %vm1348 = vcmp.ge.f32.partialorder %v1096, 0.0
      %vm1349 = vcmp.ge.f32.partialorder %v1101, 0.0
      %vm1350 = vcmp.ge.f32.partialorder %v1104, 0.0
      %vm1351 = vcmp.ge.f32.partialorder %v1109, 0.0
      %vm1352 = vcmp.ge.f32.partialorder %v1112, 0.0
      %vm1353 = vcmp.ge.f32.partialorder %v1117, 0.0
      %vm1354 = vcmp.ge.f32.partialorder %v1120, 0.0
      %vm1355 = vcmp.ge.f32.partialorder %v1125, 0.0
      %vm1356 = vcmp.ge.f32.partialorder %v1128, 0.0
      %vm1357 = vcmp.ge.f32.partialorder %v1133, 0.0
      %vm1358 = vcmp.ge.f32.partialorder %v1136, 0.0
      %vm1359 = vcmp.ge.f32.partialorder %v1141, 0.0
      %vm1360 = vcmp.ge.f32.partialorder %v1144, 0.0
      %vm1361 = vcmp.ge.f32.partialorder %v1149, 0.0
      %vm1362 = vcmp.ge.f32.partialorder %v1152, 0.0
      %vm1363 = vcmp.ge.f32.partialorder %v1157, 0.0
      %vm1364 = vcmp.ge.f32.partialorder %v1160, 0.0
      %vm1365 = vcmp.ge.f32.partialorder %v1165, 0.0
      %vm1366 = vcmp.ge.f32.partialorder %v1168, 0.0
      %vm1367 = vcmp.ge.f32.partialorder %v1173, 0.0
      %vm1368 = vcmp.ge.f32.partialorder %v1176, 0.0
      %vm1369 = vcmp.ge.f32.partialorder %v1181, 0.0
      %vm1370 = vcmp.ge.f32.partialorder %v1184, 0.0
      %vm1371 = vcmp.ge.f32.partialorder %v1189, 0.0
      %vm1372 = vcmp.ge.f32.partialorder %v1192, 0.0
      %vm1373 = vcmp.ge.f32.partialorder %v1197, 0.0
      %vm1374 = vcmp.ge.f32.partialorder %v1200, 0.0
      %vm1375 = vcmp.ge.f32.partialorder %v1205, 0.0
      %vm1376 = vcmp.ge.f32.partialorder %v1208, 0.0
      %vm1377 = vcmp.ge.f32.partialorder %v1213, 0.0
      %vm1378 = vcmp.ge.f32.partialorder %v1216, 0.0
      %v1379 = vadd.f32 %v1284, 1.0
      %v1380 = vadd.f32 %v1286, 1.0
      %v1381 = vadd.f32 %v1288, 1.0
      %v1382 = vadd.f32 %v1290, 1.0
      %v1383 = vadd.f32 %v1292, 1.0
      %v1384 = vadd.f32 %v1294, 1.0
      %v1385 = vadd.f32 %v1296, 1.0
      %v1386 = vadd.f32 %v1298, 1.0
      %v1387 = vadd.f32 %v1300, 1.0
      %v1388 = vadd.f32 %v1302, 1.0
      %v1389 = vadd.f32 %v1304, 1.0
      %v1390 = vadd.f32 %v1306, 1.0
      %v1391 = vadd.f32 %v1308, 1.0
      %v1392 = vadd.f32 %v1310, 1.0
      %v1393 = vadd.f32 %v1312, 1.0
      %v1394 = vadd.f32 %v1314, 1.0
      %v1395 = vadd.f32 %v1316, 1.0
      %v1396 = vadd.f32 %v1318, 1.0
      %v1397 = vadd.f32 %v1320, 1.0
      %v1398 = vadd.f32 %v1322, 1.0
      %v1399 = vadd.f32 %v1324, 1.0
      %v1400 = vadd.f32 %v1326, 1.0
      %v1401 = vadd.f32 %v1328, 1.0
      %v1402 = vadd.f32 %v1330, 1.0
      %v1403 = vadd.f32 %v1332, 1.0
      %v1404 = vadd.f32 %v1334, 1.0
      %v1405 = vadd.f32 %v1336, 1.0
      %v1406 = vadd.f32 %v1338, 1.0
      %v1407 = vadd.f32 %v1340, 1.0
      %v1408 = vadd.f32 %v1342, 1.0
      %v1409 = vadd.f32 %v1344, 1.0
      %v1410 = vadd.f32 %v1346, 1.0
      %v1411 = vrcp.pop %v1379
      %v1412 = vmul.f32 1.0, %v1411
      %v1413 = vrcp.pop %v1380
      %v1414 = vmul.f32 1.0, %v1413
      %v1415 = vrcp.pop %v1381
      %v1416 = vmul.f32 1.0, %v1415
      %v1417 = vrcp.pop %v1382
      %v1418 = vmul.f32 1.0, %v1417
      %v1419 = vrcp.pop %v1383
      %v1420 = vmul.f32 1.0, %v1419
      %v1421 = vrcp.pop %v1384
      %v1422 = vmul.f32 1.0, %v1421
      %v1423 = vrcp.pop %v1385
      %v1424 = vmul.f32 1.0, %v1423
      %v1425 = vrcp.pop %v1386
      %v1426 = vmul.f32 1.0, %v1425
      %v1427 = vrcp.pop %v1387
      %v1428 = vmul.f32 1.0, %v1427
      %v1429 = vrcp.pop %v1388
      %v1430 = vmul.f32 1.0, %v1429
      %v1431 = vrcp.pop %v1389
      %v1432 = vmul.f32 1.0, %v1431
      %v1433 = vrcp.pop %v1390
      %v1434 = vmul.f32 1.0, %v1433
      %v1435 = vrcp.pop %v1391
      %v1436 = vmul.f32 1.0, %v1435
      %v1437 = vrcp.pop %v1392
      %v1438 = vmul.f32 1.0, %v1437
      %v1439 = vrcp.pop %v1393
      %v1440 = vmul.f32 1.0, %v1439
      %v1441 = vrcp.pop %v1394
      %v1442 = vmul.f32 1.0, %v1441
      %v1443 = vrcp.pop %v1395
      %v1444 = vmul.f32 1.0, %v1443
      %v1445 = vrcp.pop %v1396
      %v1446 = vmul.f32 1.0, %v1445
      %v1447 = vrcp.pop %v1397
      %v1448 = vmul.f32 1.0, %v1447
      %v1449 = vrcp.pop %v1398
      %v1450 = vmul.f32 1.0, %v1449
      %v1451 = vrcp.pop %v1399
      %v1452 = vmul.f32 1.0, %v1451
      %v1453 = vrcp.pop %v1400
      %v1454 = vmul.f32 1.0, %v1453
      %v1455 = vrcp.pop %v1401
      %v1456 = vmul.f32 1.0, %v1455
      %v1457 = vrcp.pop %v1402
      %v1458 = vmul.f32 1.0, %v1457
      %v1459 = vrcp.pop %v1403
      %v1460 = vmul.f32 1.0, %v1459
      %v1461 = vrcp.pop %v1404
      %v1462 = vmul.f32 1.0, %v1461
      %v1463 = vrcp.pop %v1405
      %v1464 = vmul.f32 1.0, %v1463
      %v1465 = vrcp.pop %v1406
      %v1466 = vmul.f32 1.0, %v1465
      %v1467 = vrcp.pop %v1407
      %v1468 = vmul.f32 1.0, %v1467
      %v1469 = vrcp.pop %v1408
      %v1470 = vmul.f32 1.0, %v1469
      %v1471 = vrcp.pop %v1409
      %v1472 = vmul.f32 1.0, %v1471
      %v1473 = vrcp.pop %v1410
      %v1474 = vmul.f32 1.0, %v1473
      %v1475 = vmul.f32 %v1284, %v1411
      %v1476 = vmul.f32 %v1286, %v1413
      %v1477 = vmul.f32 %v1288, %v1415
      %v1478 = vmul.f32 %v1290, %v1417
      %v1479 = vmul.f32 %v1292, %v1419
      %v1480 = vmul.f32 %v1294, %v1421
      %v1481 = vmul.f32 %v1296, %v1423
      %v1482 = vmul.f32 %v1298, %v1425
      %v1483 = vmul.f32 %v1300, %v1427
      %v1484 = vmul.f32 %v1302, %v1429
      %v1485 = vmul.f32 %v1304, %v1431
      %v1486 = vmul.f32 %v1306, %v1433
      %v1487 = vmul.f32 %v1308, %v1435
      %v1488 = vmul.f32 %v1310, %v1437
      %v1489 = vmul.f32 %v1312, %v1439
      %v1490 = vmul.f32 %v1314, %v1441
      %v1491 = vmul.f32 %v1316, %v1443
      %v1492 = vmul.f32 %v1318, %v1445
      %v1493 = vmul.f32 %v1320, %v1447
      %v1494 = vmul.f32 %v1322, %v1449
      %v1495 = vmul.f32 %v1324, %v1451
      %v1496 = vmul.f32 %v1326, %v1453
      %v1497 = vmul.f32 %v1328, %v1455
      %v1498 = vmul.f32 %v1330, %v1457
      %v1499 = vmul.f32 %v1332, %v1459
      %v1500 = vmul.f32 %v1334, %v1461
      %v1501 = vmul.f32 %v1336, %v1463
      %v1502 = vmul.f32 %v1338, %v1465
      %v1503 = vmul.f32 %v1340, %v1467
      %v1504 = vmul.f32 %v1342, %v1469
      %v1505 = vmul.f32 %v1344, %v1471
      %v1506 = vmul.f32 %v1346, %v1473
      %v1507 = vsel %vm1347, %v1412, %v1475
      %v1508 = vsel %vm1348, %v1414, %v1476
      %v1509 = vsel %vm1349, %v1416, %v1477
      %v1510 = vsel %vm1350, %v1418, %v1478
      %v1511 = vsel %vm1351, %v1420, %v1479
      %v1512 = vsel %vm1352, %v1422, %v1480
      %v1513 = vsel %vm1353, %v1424, %v1481
      %v1514 = vsel %vm1354, %v1426, %v1482
      %v1515 = vsel %vm1355, %v1428, %v1483
      %v1516 = vsel %vm1356, %v1430, %v1484
      %v1517 = vsel %vm1357, %v1432, %v1485
      %v1518 = vsel %vm1358, %v1434, %v1486
      %v1519 = vsel %vm1359, %v1436, %v1487
      %v1520 = vsel %vm1360, %v1438, %v1488
      %v1521 = vsel %vm1361, %v1440, %v1489
      %v1522 = vsel %vm1362, %v1442, %v1490
      %v1523 = vsel %vm1363, %v1444, %v1491
      %v1524 = vsel %vm1364, %v1446, %v1492
      %v1525 = vsel %vm1365, %v1448, %v1493
      %v1526 = vsel %vm1366, %v1450, %v1494
      %v1527 = vsel %vm1367, %v1452, %v1495
      %v1528 = vsel %vm1368, %v1454, %v1496
      %v1529 = vsel %vm1369, %v1456, %v1497
      %v1530 = vsel %vm1370, %v1458, %v1498
      %v1531 = vsel %vm1371, %v1460, %v1499
      %v1532 = vsel %vm1372, %v1462, %v1500
      %v1533 = vsel %vm1373, %v1464, %v1501
      %v1534 = vsel %vm1374, %v1466, %v1502
      %v1535 = vsel %vm1375, %v1468, %v1503
      %v1536 = vsel %vm1376, %v1470, %v1504
      %v1537 = vsel %vm1377, %v1472, %v1505
      %v1538 = vsel %vm1378, %v1474, %v1506
      %v1539 = vpack.c.bf16 %v1508, %v1507
      %v1540 = vpack.c.bf16 %v1510, %v1509
      %v1541 = vpack.c.bf16 %v1512, %v1511
      %v1542 = vpack.c.bf16 %v1514, %v1513
      %v1543 = vpack.c.bf16 %v1516, %v1515
      %v1544 = vpack.c.bf16 %v1518, %v1517
      %v1545 = vpack.c.bf16 %v1520, %v1519
      %v1546 = vpack.c.bf16 %v1522, %v1521
      %v1547 = vpack.c.bf16 %v1524, %v1523
      %v1548 = vpack.c.bf16 %v1526, %v1525
      %v1549 = vpack.c.bf16 %v1528, %v1527
      %v1550 = vpack.c.bf16 %v1530, %v1529
      %v1551 = vpack.c.bf16 %v1532, %v1531
      %v1552 = vpack.c.bf16 %v1534, %v1533
      %v1553 = vpack.c.bf16 %v1536, %v1535
      %v1554 = vpack.c.bf16 %v1538, %v1537
      %v1555 = vld [vmem:[%s1] sm:$0xff]
      %v1556 = vld [vmem:[%s1 + $0x8] sm:$0xff]
      %v1557 = vld [vmem:[%s1 + $0x10] sm:$0xff]
      %v1558 = vld [vmem:[%s1 + $0x18] sm:$0xff]
      %v1559 = vld [vmem:[%s1 + $0x20] sm:$0xff]
      %v1560 = vld [vmem:[%s1 + $0x28] sm:$0xff]
      %v1561 = vld [vmem:[%s1 + $0x30] sm:$0xff]
      %v1562 = vld [vmem:[%s1 + $0x38] sm:$0xff]
      %v1571 = vunpack.c.l.b16 %v1555
      %v1572 = vunpack.c.h.b16 %v1555
      %v1573 = vunpack.c.l.b16 %v1556
      %v1574 = vunpack.c.h.b16 %v1556
      %v1575 = vunpack.c.l.b16 %v1557
      %v1576 = vunpack.c.h.b16 %v1557
      %v1577 = vunpack.c.l.b16 %v1558
      %v1578 = vunpack.c.h.b16 %v1558
      %v1579 = vunpack.c.l.b16 %v1559
      %v1580 = vunpack.c.h.b16 %v1559
      %v1581 = vunpack.c.l.b16 %v1560
      %v1582 = vunpack.c.h.b16 %v1560
      %v1583 = vunpack.c.l.b16 %v1561
      %v1584 = vunpack.c.h.b16 %v1561
      %v1585 = vunpack.c.l.b16 %v1562
      %v1586 = vunpack.c.h.b16 %v1562
      %v1587 = vpack.c.b16 %v1573, %v1571
      %v1588 = vpack.c.b16 %v1574, %v1572
      %v1589 = vpack.c.b16 %v1577, %v1575
      %v1590 = vpack.c.b16 %v1578, %v1576
      %v1591 = vpack.c.b16 %v1581, %v1579
      %v1592 = vpack.c.b16 %v1582, %v1580
      %v1593 = vpack.c.b16 %v1585, %v1583
      %v1594 = vpack.c.b16 %v1586, %v1584
      %1603 = vmatprep.subr.bf16.mxu0 0
      %1604 = vmatpush1.bf16.msra.mxu0 %v1539
      %1605 = vmatprep.subr.bf16.mxu0 0
      %1606 = vmatpush1.bf16.msra.mxu0 %v1540
      %1607 = vmatprep.subr.bf16.mxu0 0
      %1608 = vmatpush1.bf16.msra.mxu0 %v1541
      %1609 = vmatprep.subr.bf16.mxu0 0
      %1610 = vmatpush1.bf16.msra.mxu0 %v1542
      %1611 = vmatprep.subr.bf16.mxu0 0
      %1612 = vmatpush1.bf16.msra.mxu0 %v1543
      %1613 = vmatprep.subr.bf16.mxu0 0
      %1614 = vmatpush1.bf16.msra.mxu0 %v1544
      %1615 = vmatprep.subr.bf16.mxu0 0
      %1616 = vmatpush1.bf16.msra.mxu0 %v1545
      %1617 = vmatprep.subr.bf16.mxu0 0
      %1618 = vmatpush1.bf16.msra.mxu0 %v1546
      %1619 = vmatprep.subr.bf16.mxu0 0
      %1620 = vmatpush1.bf16.msra.mxu0 %v1547
      %1621 = vmatprep.subr.bf16.mxu0 0
      %1622 = vmatpush1.bf16.msra.mxu0 %v1548
      %1623 = vmatprep.subr.bf16.mxu0 0
      %1624 = vmatpush1.bf16.msra.mxu0 %v1549
      %1625 = vmatprep.subr.bf16.mxu0 0
      %1626 = vmatpush1.bf16.msra.mxu0 %v1550
      %1627 = vmatprep.subr.bf16.mxu0 0
      %1628 = vmatpush1.bf16.msra.mxu0 %v1551
      %1629 = vmatprep.subr.bf16.mxu0 0
      %1630 = vmatpush1.bf16.msra.mxu0 %v1552
      %1631 = vmatprep.subr.bf16.mxu0 0
      %1632 = vmatpush1.bf16.msra.mxu0 %v1553
      %1633 = vmatprep.subr.bf16.mxu0 0
      %1634 = vmatpush1.bf16.msra.mxu0 %v1554
      %1635 = vmatprep.mubr.bf16.mxu0 %v1588
      %1636 = vmatmul.mubr.bf16.gmra.mrb[0].mxu0 %v1587
      %v1637 = vpop.f32.mrb[0].mxu0
      %v1638 = vadd.f32 0.0, %v1637
      %v1639 = vpop.f32.mrb[0].mxu0
      %v1640 = vpop.f32.mrb[0].mxu0
      %v1641 = vadd.f32 0.0, %v1640
      %v1642 = vpop.f32.mrb[0].mxu0
      %1643 = vmatprep.mubr.bf16.mxu0 %v1590
      %1644 = vmatmul.mubr.bf16.gmra.mrb[0].mxu0 %v1589
      %v1645 = vpop.f32.mrb[0].mxu0
      %v1646 = vadd.f32 0.0, %v1645
      %v1647 = vpop.f32.mrb[0].mxu0
      %v1648 = vpop.f32.mrb[0].mxu0
      %v1649 = vadd.f32 0.0, %v1648
      %v1650 = vpop.f32.mrb[0].mxu0
      %1651 = vmatprep.mubr.bf16.mxu0 %v1592
      %1652 = vmatmul.mubr.bf16.gmra.mrb[0].mxu0 %v1591
      %v1653 = vpop.f32.mrb[0].mxu0
      %v1654 = vadd.f32 0.0, %v1653
      %v1655 = vpop.f32.mrb[0].mxu0
      %v1656 = vpop.f32.mrb[0].mxu0
      %v1657 = vadd.f32 0.0, %v1656
      %v1658 = vpop.f32.mrb[0].mxu0
      %1659 = vmatprep.mubr.bf16.mxu0 %v1594
      %1660 = vmatmul.mubr.bf16.gmra.mrb[0].mxu0 %v1593
      %v1661 = vpop.f32.mrb[0].mxu0
      %v1662 = vadd.f32 0.0, %v1661
      %v1663 = vpop.f32.mrb[0].mxu0
      %v1664 = vpop.f32.mrb[0].mxu0
      %v1665 = vadd.f32 0.0, %v1664
      %v1666 = vpop.f32.mrb[0].mxu0
      %1667 = vdwg.mxu0
      %vm1668 = vcmask 130048
      %1669 = vst.msk [vmem:[#allocation2] sm:$0xff] %vm1668, %v1638
      %1670 = vst.msk [vmem:[#allocation2 + $0x10] sm:$0xff] %vm1668, %v1641
      %1671 = vst.msk [vmem:[#allocation2 + $0x20] sm:$0xff] %vm1668, %v1646
      %1672 = vst.msk [vmem:[#allocation2 + $0x30] sm:$0xff] %vm1668, %v1649
      %1673 = vst.msk [vmem:[#allocation2 + $0x40] sm:$0xff] %vm1668, %v1654
      %1674 = vst.msk [vmem:[#allocation2 + $0x50] sm:$0xff] %vm1668, %v1657
      %1675 = vst.msk [vmem:[#allocation2 + $0x60] sm:$0xff] %vm1668, %v1662
      %1676 = vst.msk [vmem:[#allocation2 + $0x70] sm:$0xff] %vm1668, %v1665
      %s1677 = scalar_lea.vmem %s1, 64
      %v1678 = vld [vmem:[%s1677] sm:$0xff]
      %v1679 = vld [vmem:[%s1677 + $0x8] sm:$0xff]
      %v1680 = vld [vmem:[%s1677 + $0x10] sm:$0xff]
      %v1681 = vld [vmem:[%s1677 + $0x18] sm:$0xff]
      %v1682 = vld [vmem:[%s1677 + $0x20] sm:$0xff]
      %v1683 = vld [vmem:[%s1677 + $0x28] sm:$0xff]
      %v1684 = vld [vmem:[%s1677 + $0x30] sm:$0xff]
      %v1685 = vld [vmem:[%s1677 + $0x38] sm:$0xff]
      %v1694 = vunpack.c.l.b16 %v1678
      %v1695 = vunpack.c.h.b16 %v1678
      %v1696 = vunpack.c.l.b16 %v1679
      %v1697 = vunpack.c.h.b16 %v1679
      %v1698 = vunpack.c.l.b16 %v1680
      %v1699 = vunpack.c.h.b16 %v1680
      %v1700 = vunpack.c.l.b16 %v1681
      %v1701 = vunpack.c.h.b16 %v1681
      %v1702 = vunpack.c.l.b16 %v1682
      %v1703 = vunpack.c.h.b16 %v1682
      %v1704 = vunpack.c.l.b16 %v1683
      %v1705 = vunpack.c.h.b16 %v1683
      %v1706 = vunpack.c.l.b16 %v1684
      %v1707 = vunpack.c.h.b16 %v1684
      %v1708 = vunpack.c.l.b16 %v1685
      %v1709 = vunpack.c.h.b16 %v1685
      %v1710 = vpack.c.b16 %v1696, %v1694
      %v1711 = vpack.c.b16 %v1697, %v1695
      %v1712 = vpack.c.b16 %v1700, %v1698
      %v1713 = vpack.c.b16 %v1701, %v1699
      %v1714 = vpack.c.b16 %v1704, %v1702
      %v1715 = vpack.c.b16 %v1705, %v1703
      %v1716 = vpack.c.b16 %v1708, %v1706
      %v1717 = vpack.c.b16 %v1709, %v1707
      %1726 = vmatprep.subr.bf16.mxu0 0
      %1727 = vmatpush1.bf16.msra.mxu0 %v1539
      %1728 = vmatprep.subr.bf16.mxu0 0
      %1729 = vmatpush1.bf16.msra.mxu0 %v1540
      %1730 = vmatprep.subr.bf16.mxu0 0
      %1731 = vmatpush1.bf16.msra.mxu0 %v1541
      %1732 = vmatprep.subr.bf16.mxu0 0
      %1733 = vmatpush1.bf16.msra.mxu0 %v1542
      %1734 = vmatprep.subr.bf16.mxu0 0
      %1735 = vmatpush1.bf16.msra.mxu0 %v1543
      %1736 = vmatprep.subr.bf16.mxu0 0
      %1737 = vmatpush1.bf16.msra.mxu0 %v1544
      %1738 = vmatprep.subr.bf16.mxu0 0
      %1739 = vmatpush1.bf16.msra.mxu0 %v1545
      %1740 = vmatprep.subr.bf16.mxu0 0
      %1741 = vmatpush1.bf16.msra.mxu0 %v1546
      %1742 = vmatprep.subr.bf16.mxu0 0
      %1743 = vmatpush1.bf16.msra.mxu0 %v1547
      %1744 = vmatprep.subr.bf16.mxu0 0
      %1745 = vmatpush1.bf16.msra.mxu0 %v1548
      %1746 = vmatprep.subr.bf16.mxu0 0
      %1747 = vmatpush1.bf16.msra.mxu0 %v1549
      %1748 = vmatprep.subr.bf16.mxu0 0
      %1749 = vmatpush1.bf16.msra.mxu0 %v1550
      %1750 = vmatprep.subr.bf16.mxu0 0
      %1751 = vmatpush1.bf16.msra.mxu0 %v1551
      %1752 = vmatprep.subr.bf16.mxu0 0
      %1753 = vmatpush1.bf16.msra.mxu0 %v1552
      %1754 = vmatprep.subr.bf16.mxu0 0
      %1755 = vmatpush1.bf16.msra.mxu0 %v1553
      %1756 = vmatprep.subr.bf16.mxu0 0
      %1757 = vmatpush1.bf16.msra.mxu0 %v1554
      %1758 = vmatprep.mubr.bf16.mxu0 %v1711
      %1759 = vmatmul.mubr.bf16.gmra.mrb[0].mxu0 %v1710
      %v1760 = vpop.f32.mrb[0].mxu0
      %v1761 = vadd.f32 0.0, %v1760
      %v1762 = vpop.f32.mrb[0].mxu0
      %v1763 = vpop.f32.mrb[0].mxu0
      %v1764 = vadd.f32 0.0, %v1763
      %v1765 = vpop.f32.mrb[0].mxu0
      %1766 = vmatprep.mubr.bf16.mxu0 %v1713
      %1767 = vmatmul.mubr.bf16.gmra.mrb[0].mxu0 %v1712
      %v1768 = vpop.f32.mrb[0].mxu0
      %v1769 = vadd.f32 0.0, %v1768
      %v1770 = vpop.f32.mrb[0].mxu0
      %v1771 = vpop.f32.mrb[0].mxu0
      %v1772 = vadd.f32 0.0, %v1771
      %v1773 = vpop.f32.mrb[0].mxu0
      %1774 = vmatprep.mubr.bf16.mxu0 %v1715
      %1775 = vmatmul.mubr.bf16.gmra.mrb[0].mxu0 %v1714
      %v1776 = vpop.f32.mrb[0].mxu0
      %v1777 = vadd.f32 0.0, %v1776
      %v1778 = vpop.f32.mrb[0].mxu0
      %v1779 = vpop.f32.mrb[0].mxu0
      %v1780 = vadd.f32 0.0, %v1779
      %v1781 = vpop.f32.mrb[0].mxu0
      %1782 = vmatprep.mubr.bf16.mxu0 %v1717
      %1783 = vmatmul.mubr.bf16.gmra.mrb[0].mxu0 %v1716
      %v1784 = vpop.f32.mrb[0].mxu0
      %v1785 = vadd.f32 0.0, %v1784
      %v1786 = vpop.f32.mrb[0].mxu0
      %v1787 = vpop.f32.mrb[0].mxu0
      %v1788 = vadd.f32 0.0, %v1787
      %v1789 = vpop.f32.mrb[0].mxu0
      %1790 = vdwg.mxu0
      %1799 = vrot.lane.b32.xlu0 %v1761, 16
      %v1800 = vpop.permute.xlu0 %1799
      %1801 = vrot.lane.b32.xlu0 %v1764, 16
      %v1802 = vpop.permute.xlu0 %1801
      %1803 = vrot.lane.b32.xlu0 %v1769, 16
      %v1804 = vpop.permute.xlu0 %1803
      %1805 = vrot.lane.b32.xlu0 %v1772, 16
      %v1806 = vpop.permute.xlu0 %1805
      %1807 = vrot.lane.b32.xlu0 %v1777, 16
      %v1808 = vpop.permute.xlu0 %1807
      %1809 = vrot.lane.b32.xlu0 %v1780, 16
      %v1810 = vpop.permute.xlu0 %1809
      %1811 = vrot.lane.b32.xlu0 %v1785, 16
      %v1812 = vpop.permute.xlu0 %1811
      %1813 = vrot.lane.b32.xlu0 %v1788, 16
      %v1814 = vpop.permute.xlu0 %1813
      %vm1823 = vcmask 261248
      %1824 = vst.msk [vmem:[#allocation2] sm:$0xff] %vm1823, %v1800
      %1825 = vst.msk [vmem:[#allocation2 + $0x10] sm:$0xff] %vm1823, %v1802
      %1826 = vst.msk [vmem:[#allocation2 + $0x20] sm:$0xff] %vm1823, %v1804
      %1827 = vst.msk [vmem:[#allocation2 + $0x30] sm:$0xff] %vm1823, %v1806
      %1828 = vst.msk [vmem:[#allocation2 + $0x40] sm:$0xff] %vm1823, %v1808
      %1829 = vst.msk [vmem:[#allocation2 + $0x50] sm:$0xff] %vm1823, %v1810
      %1830 = vst.msk [vmem:[#allocation2 + $0x60] sm:$0xff] %vm1823, %v1812
      %1831 = vst.msk [vmem:[#allocation2 + $0x70] sm:$0xff] %vm1823, %v1814
      %s1832 = scalar_lea.vmem %s1, 128
      %v1833 = vld [vmem:[%s1832] sm:$0xff]
      %v1834 = vld [vmem:[%s1832 + $0x8] sm:$0xff]
      %v1835 = vld [vmem:[%s1832 + $0x10] sm:$0xff]
      %v1836 = vld [vmem:[%s1832 + $0x18] sm:$0xff]
      %v1837 = vld [vmem:[%s1832 + $0x20] sm:$0xff]
      %v1838 = vld [vmem:[%s1832 + $0x28] sm:$0xff]
      %v1839 = vld [vmem:[%s1832 + $0x30] sm:$0xff]
      %v1840 = vld [vmem:[%s1832 + $0x38] sm:$0xff]
      %v1849 = vunpack.c.l.b16 %v1833
      %v1850 = vunpack.c.h.b16 %v1833
      %v1851 = vunpack.c.l.b16 %v1834
      %v1852 = vunpack.c.h.b16 %v1834
      %v1853 = vunpack.c.l.b16 %v1835
      %v1854 = vunpack.c.h.b16 %v1835
      %v1855 = vunpack.c.l.b16 %v1836
      %v1856 = vunpack.c.h.b16 %v1836
      %v1857 = vunpack.c.l.b16 %v1837
      %v1858 = vunpack.c.h.b16 %v1837
      %v1859 = vunpack.c.l.b16 %v1838
      %v1860 = vunpack.c.h.b16 %v1838
      %v1861 = vunpack.c.l.b16 %v1839
      %v1862 = vunpack.c.h.b16 %v1839
      %v1863 = vunpack.c.l.b16 %v1840
      %v1864 = vunpack.c.h.b16 %v1840
      %v1865 = vpack.c.b16 %v1851, %v1849
      %v1866 = vpack.c.b16 %v1852, %v1850
      %v1867 = vpack.c.b16 %v1855, %v1853
      %v1868 = vpack.c.b16 %v1856, %v1854
      %v1869 = vpack.c.b16 %v1859, %v1857
      %v1870 = vpack.c.b16 %v1860, %v1858
      %v1871 = vpack.c.b16 %v1863, %v1861
      %v1872 = vpack.c.b16 %v1864, %v1862
      %1881 = vmatprep.subr.bf16.mxu0 0
      %1882 = vmatpush1.bf16.msra.mxu0 %v1539
      %1883 = vmatprep.subr.bf16.mxu0 0
      %1884 = vmatpush1.bf16.msra.mxu0 %v1540
      %1885 = vmatprep.subr.bf16.mxu0 0
      %1886 = vmatpush1.bf16.msra.mxu0 %v1541
      %1887 = vmatprep.subr.bf16.mxu0 0
      %1888 = vmatpush1.bf16.msra.mxu0 %v1542
      %1889 = vmatprep.subr.bf16.mxu0 0
      %1890 = vmatpush1.bf16.msra.mxu0 %v1543
      %1891 = vmatprep.subr.bf16.mxu0 0
      %1892 = vmatpush1.bf16.msra.mxu0 %v1544
      %1893 = vmatprep.subr.bf16.mxu0 0
      %1894 = vmatpush1.bf16.msra.mxu0 %v1545
      %1895 = vmatprep.subr.bf16.mxu0 0
      %1896 = vmatpush1.bf16.msra.mxu0 %v1546
      %1897 = vmatprep.subr.bf16.mxu0 0
      %1898 = vmatpush1.bf16.msra.mxu0 %v1547
      %1899 = vmatprep.subr.bf16.mxu0 0
      %1900 = vmatpush1.bf16.msra.mxu0 %v1548
      %1901 = vmatprep.subr.bf16.mxu0 0
      %1902 = vmatpush1.bf16.msra.mxu0 %v1549
      %1903 = vmatprep.subr.bf16.mxu0 0
      %1904 = vmatpush1.bf16.msra.mxu0 %v1550
      %1905 = vmatprep.subr.bf16.mxu0 0
      %1906 = vmatpush1.bf16.msra.mxu0 %v1551
      %1907 = vmatprep.subr.bf16.mxu0 0
      %1908 = vmatpush1.bf16.msra.mxu0 %v1552
      %1909 = vmatprep.subr.bf16.mxu0 0
      %1910 = vmatpush1.bf16.msra.mxu0 %v1553
      %1911 = vmatprep.subr.bf16.mxu0 0
      %1912 = vmatpush1.bf16.msra.mxu0 %v1554
      %1913 = vmatprep.mubr.bf16.mxu0 %v1866
      %1914 = vmatmul.mubr.bf16.gmra.mrb[0].mxu0 %v1865
      %v1915 = vpop.f32.mrb[0].mxu0
      %v1916 = vadd.f32 0.0, %v1915
      %v1917 = vpop.f32.mrb[0].mxu0
      %v1918 = vpop.f32.mrb[0].mxu0
      %v1919 = vadd.f32 0.0, %v1918
      %v1920 = vpop.f32.mrb[0].mxu0
      %1921 = vmatprep.mubr.bf16.mxu0 %v1868
      %1922 = vmatmul.mubr.bf16.gmra.mrb[0].mxu0 %v1867
      %v1923 = vpop.f32.mrb[0].mxu0
      %v1924 = vadd.f32 0.0, %v1923
      %v1925 = vpop.f32.mrb[0].mxu0
      %v1926 = vpop.f32.mrb[0].mxu0
      %v1927 = vadd.f32 0.0, %v1926
      %v1928 = vpop.f32.mrb[0].mxu0
      %1929 = vmatprep.mubr.bf16.mxu0 %v1870
      %1930 = vmatmul.mubr.bf16.gmra.mrb[0].mxu0 %v1869
      %v1931 = vpop.f32.mrb[0].mxu0
      %v1932 = vadd.f32 0.0, %v1931
      %v1933 = vpop.f32.mrb[0].mxu0
      %v1934 = vpop.f32.mrb[0].mxu0
      %v1935 = vadd.f32 0.0, %v1934
      %v1936 = vpop.f32.mrb[0].mxu0
      %1937 = vmatprep.mubr.bf16.mxu0 %v1872
      %1938 = vmatmul.mubr.bf16.gmra.mrb[0].mxu0 %v1871
      %v1939 = vpop.f32.mrb[0].mxu0
      %v1940 = vadd.f32 0.0, %v1939
      %v1941 = vpop.f32.mrb[0].mxu0
      %v1942 = vpop.f32.mrb[0].mxu0
      %v1943 = vadd.f32 0.0, %v1942
      %v1944 = vpop.f32.mrb[0].mxu0
      %1945 = vdwg.mxu0
      %1954 = vrot.lane.b32.xlu0 %v1916, 32
      %v1955 = vpop.permute.xlu0 %1954
      %1956 = vrot.lane.b32.xlu0 %v1919, 32
      %v1957 = vpop.permute.xlu0 %1956
      %1958 = vrot.lane.b32.xlu0 %v1924, 32
      %v1959 = vpop.permute.xlu0 %1958
      %1960 = vrot.lane.b32.xlu0 %v1927, 32
      %v1961 = vpop.permute.xlu0 %1960
      %1962 = vrot.lane.b32.xlu0 %v1932, 32
      %v1963 = vpop.permute.xlu0 %1962
      %1964 = vrot.lane.b32.xlu0 %v1935, 32
      %v1965 = vpop.permute.xlu0 %1964
      %1966 = vrot.lane.b32.xlu0 %v1940, 32
      %v1967 = vpop.permute.xlu0 %1966
      %1968 = vrot.lane.b32.xlu0 %v1943, 32
      %v1969 = vpop.permute.xlu0 %1968
      %vm1978 = vcmask 392448
      %1979 = vst.msk [vmem:[#allocation2] sm:$0xff] %vm1978, %v1955
      %1980 = vst.msk [vmem:[#allocation2 + $0x10] sm:$0xff] %vm1978, %v1957
      %1981 = vst.msk [vmem:[#allocation2 + $0x20] sm:$0xff] %vm1978, %v1959
      %1982 = vst.msk [vmem:[#allocation2 + $0x30] sm:$0xff] %vm1978, %v1961
      %1983 = vst.msk [vmem:[#allocation2 + $0x40] sm:$0xff] %vm1978, %v1963
      %1984 = vst.msk [vmem:[#allocation2 + $0x50] sm:$0xff] %vm1978, %v1965
      %1985 = vst.msk [vmem:[#allocation2 + $0x60] sm:$0xff] %vm1978, %v1967
      %1986 = vst.msk [vmem:[#allocation2 + $0x70] sm:$0xff] %vm1978, %v1969
      %s1987 = scalar_lea.vmem %s1, 192
      %v1988 = vld [vmem:[%s1987] sm:$0xff]
      %v1989 = vld [vmem:[%s1987 + $0x8] sm:$0xff]
      %v1990 = vld [vmem:[%s1987 + $0x10] sm:$0xff]
      %v1991 = vld [vmem:[%s1987 + $0x18] sm:$0xff]
      %v1992 = vld [vmem:[%s1987 + $0x20] sm:$0xff]
      %v1993 = vld [vmem:[%s1987 + $0x28] sm:$0xff]
      %v1994 = vld [vmem:[%s1987 + $0x30] sm:$0xff]
      %v1995 = vld [vmem:[%s1987 + $0x38] sm:$0xff]
      %v2004 = vunpack.c.l.b16 %v1988
      %v2005 = vunpack.c.h.b16 %v1988
      %v2006 = vunpack.c.l.b16 %v1989
      %v2007 = vunpack.c.h.b16 %v1989
      %v2008 = vunpack.c.l.b16 %v1990
      %v2009 = vunpack.c.h.b16 %v1990
      %v2010 = vunpack.c.l.b16 %v1991
      %v2011 = vunpack.c.h.b16 %v1991
      %v2012 = vunpack.c.l.b16 %v1992
      %v2013 = vunpack.c.h.b16 %v1992
      %v2014 = vunpack.c.l.b16 %v1993
      %v2015 = vunpack.c.h.b16 %v1993
      %v2016 = vunpack.c.l.b16 %v1994
      %v2017 = vunpack.c.h.b16 %v1994
      %v2018 = vunpack.c.l.b16 %v1995
      %v2019 = vunpack.c.h.b16 %v1995
      %v2020 = vpack.c.b16 %v2006, %v2004
      %v2021 = vpack.c.b16 %v2007, %v2005
      %v2022 = vpack.c.b16 %v2010, %v2008
      %v2023 = vpack.c.b16 %v2011, %v2009
      %v2024 = vpack.c.b16 %v2014, %v2012
      %v2025 = vpack.c.b16 %v2015, %v2013
      %v2026 = vpack.c.b16 %v2018, %v2016
      %v2027 = vpack.c.b16 %v2019, %v2017
      %2036 = vmatprep.subr.bf16.mxu0 0
      %2037 = vmatpush1.bf16.msra.mxu0 %v1539
      %2038 = vmatprep.subr.bf16.mxu0 0
      %2039 = vmatpush1.bf16.msra.mxu0 %v1540
      %2040 = vmatprep.subr.bf16.mxu0 0
      %2041 = vmatpush1.bf16.msra.mxu0 %v1541
      %2042 = vmatprep.subr.bf16.mxu0 0
      %2043 = vmatpush1.bf16.msra.mxu0 %v1542
      %2044 = vmatprep.subr.bf16.mxu0 0
      %2045 = vmatpush1.bf16.msra.mxu0 %v1543
      %2046 = vmatprep.subr.bf16.mxu0 0
      %2047 = vmatpush1.bf16.msra.mxu0 %v1544
      %2048 = vmatprep.subr.bf16.mxu0 0
      %2049 = vmatpush1.bf16.msra.mxu0 %v1545
      %2050 = vmatprep.subr.bf16.mxu0 0
      %2051 = vmatpush1.bf16.msra.mxu0 %v1546
      %2052 = vmatprep.subr.bf16.mxu0 0
      %2053 = vmatpush1.bf16.msra.mxu0 %v1547
      %2054 = vmatprep.subr.bf16.mxu0 0
      %2055 = vmatpush1.bf16.msra.mxu0 %v1548
      %2056 = vmatprep.subr.bf16.mxu0 0
      %2057 = vmatpush1.bf16.msra.mxu0 %v1549
      %2058 = vmatprep.subr.bf16.mxu0 0
      %2059 = vmatpush1.bf16.msra.mxu0 %v1550
      %2060 = vmatprep.subr.bf16.mxu0 0
      %2061 = vmatpush1.bf16.msra.mxu0 %v1551
      %2062 = vmatprep.subr.bf16.mxu0 0
      %2063 = vmatpush1.bf16.msra.mxu0 %v1552
      %2064 = vmatprep.subr.bf16.mxu0 0
      %2065 = vmatpush1.bf16.msra.mxu0 %v1553
      %2066 = vmatprep.subr.bf16.mxu0 0
      %2067 = vmatpush1.bf16.msra.mxu0 %v1554
      %2068 = vmatprep.mubr.bf16.mxu0 %v2021
      %2069 = vmatmul.mubr.bf16.gmra.mrb[0].mxu0 %v2020
      %v2070 = vpop.f32.mrb[0].mxu0
      %v2071 = vadd.f32 0.0, %v2070
      %v2072 = vpop.f32.mrb[0].mxu0
      %v2073 = vpop.f32.mrb[0].mxu0
      %v2074 = vadd.f32 0.0, %v2073
      %v2075 = vpop.f32.mrb[0].mxu0
      %2076 = vmatprep.mubr.bf16.mxu0 %v2023
      %2077 = vmatmul.mubr.bf16.gmra.mrb[0].mxu0 %v2022
      %v2078 = vpop.f32.mrb[0].mxu0
      %v2079 = vadd.f32 0.0, %v2078
      %v2080 = vpop.f32.mrb[0].mxu0
      %v2081 = vpop.f32.mrb[0].mxu0
      %v2082 = vadd.f32 0.0, %v2081
      %v2083 = vpop.f32.mrb[0].mxu0
      %2084 = vmatprep.mubr.bf16.mxu0 %v2025
      %2085 = vmatmul.mubr.bf16.gmra.mrb[0].mxu0 %v2024
      %v2086 = vpop.f32.mrb[0].mxu0
      %v2087 = vadd.f32 0.0, %v2086
      %v2088 = vpop.f32.mrb[0].mxu0
      %v2089 = vpop.f32.mrb[0].mxu0
      %v2090 = vadd.f32 0.0, %v2089
      %v2091 = vpop.f32.mrb[0].mxu0
      %2092 = vmatprep.mubr.bf16.mxu0 %v2027
      %2093 = vmatmul.mubr.bf16.gmra.mrb[0].mxu0 %v2026
      %v2094 = vpop.f32.mrb[0].mxu0
      %v2095 = vadd.f32 0.0, %v2094
      %v2096 = vpop.f32.mrb[0].mxu0
      %v2097 = vpop.f32.mrb[0].mxu0
      %v2098 = vadd.f32 0.0, %v2097
      %v2099 = vpop.f32.mrb[0].mxu0
      %2100 = vdwg.mxu0
      %2109 = vrot.lane.b32.xlu0 %v2071, 48
      %v2110 = vpop.permute.xlu0 %2109
      %2111 = vrot.lane.b32.xlu0 %v2074, 48
      %v2112 = vpop.permute.xlu0 %2111
      %2113 = vrot.lane.b32.xlu0 %v2079, 48
      %v2114 = vpop.permute.xlu0 %2113
      %2115 = vrot.lane.b32.xlu0 %v2082, 48
      %v2116 = vpop.permute.xlu0 %2115
      %2117 = vrot.lane.b32.xlu0 %v2087, 48
      %v2118 = vpop.permute.xlu0 %2117
      %2119 = vrot.lane.b32.xlu0 %v2090, 48
      %v2120 = vpop.permute.xlu0 %2119
      %2121 = vrot.lane.b32.xlu0 %v2095, 48
      %v2122 = vpop.permute.xlu0 %2121
      %2123 = vrot.lane.b32.xlu0 %v2098, 48
      %v2124 = vpop.permute.xlu0 %2123
      %vm2133 = vcmask 523648
      %2134 = vst.msk [vmem:[#allocation2] sm:$0xff] %vm2133, %v2110
      %2135 = vst.msk [vmem:[#allocation2 + $0x10] sm:$0xff] %vm2133, %v2112
      %2136 = vst.msk [vmem:[#allocation2 + $0x20] sm:$0xff] %vm2133, %v2114
      %2137 = vst.msk [vmem:[#allocation2 + $0x30] sm:$0xff] %vm2133, %v2116
      %2138 = vst.msk [vmem:[#allocation2 + $0x40] sm:$0xff] %vm2133, %v2118
      %2139 = vst.msk [vmem:[#allocation2 + $0x50] sm:$0xff] %vm2133, %v2120
      %2140 = vst.msk [vmem:[#allocation2 + $0x60] sm:$0xff] %vm2133, %v2122
      %2141 = vst.msk [vmem:[#allocation2 + $0x70] sm:$0xff] %vm2133, %v2124
      %s2142 = scalar_lea.vmem %s1, 256
      %v2143 = vld [vmem:[%s2142] sm:$0xff]
      %v2144 = vld [vmem:[%s2142 + $0x8] sm:$0xff]
      %v2145 = vld [vmem:[%s2142 + $0x10] sm:$0xff]
      %v2146 = vld [vmem:[%s2142 + $0x18] sm:$0xff]
      %v2147 = vld [vmem:[%s2142 + $0x20] sm:$0xff]
      %v2148 = vld [vmem:[%s2142 + $0x28] sm:$0xff]
      %v2149 = vld [vmem:[%s2142 + $0x30] sm:$0xff]
      %v2150 = vld [vmem:[%s2142 + $0x38] sm:$0xff]
      %v2159 = vunpack.c.l.b16 %v2143
      %v2160 = vunpack.c.h.b16 %v2143
      %v2161 = vunpack.c.l.b16 %v2144
      %v2162 = vunpack.c.h.b16 %v2144
      %v2163 = vunpack.c.l.b16 %v2145
      %v2164 = vunpack.c.h.b16 %v2145
      %v2165 = vunpack.c.l.b16 %v2146
      %v2166 = vunpack.c.h.b16 %v2146
      %v2167 = vunpack.c.l.b16 %v2147
      %v2168 = vunpack.c.h.b16 %v2147
      %v2169 = vunpack.c.l.b16 %v2148
      %v2170 = vunpack.c.h.b16 %v2148
      %v2171 = vunpack.c.l.b16 %v2149
      %v2172 = vunpack.c.h.b16 %v2149
      %v2173 = vunpack.c.l.b16 %v2150
      %v2174 = vunpack.c.h.b16 %v2150
      %v2175 = vpack.c.b16 %v2161, %v2159
      %v2176 = vpack.c.b16 %v2162, %v2160
      %v2177 = vpack.c.b16 %v2165, %v2163
      %v2178 = vpack.c.b16 %v2166, %v2164
      %v2179 = vpack.c.b16 %v2169, %v2167
      %v2180 = vpack.c.b16 %v2170, %v2168
      %v2181 = vpack.c.b16 %v2173, %v2171
      %v2182 = vpack.c.b16 %v2174, %v2172
      %2191 = vmatprep.subr.bf16.mxu0 0
      %2192 = vmatpush1.bf16.msra.mxu0 %v1539
      %2193 = vmatprep.subr.bf16.mxu0 0
      %2194 = vmatpush1.bf16.msra.mxu0 %v1540
      %2195 = vmatprep.subr.bf16.mxu0 0
      %2196 = vmatpush1.bf16.msra.mxu0 %v1541
      %2197 = vmatprep.subr.bf16.mxu0 0
      %2198 = vmatpush1.bf16.msra.mxu0 %v1542
      %2199 = vmatprep.subr.bf16.mxu0 0
      %2200 = vmatpush1.bf16.msra.mxu0 %v1543
      %2201 = vmatprep.subr.bf16.mxu0 0
      %2202 = vmatpush1.bf16.msra.mxu0 %v1544
      %2203 = vmatprep.subr.bf16.mxu0 0
      %2204 = vmatpush1.bf16.msra.mxu0 %v1545
      %2205 = vmatprep.subr.bf16.mxu0 0
      %2206 = vmatpush1.bf16.msra.mxu0 %v1546
      %2207 = vmatprep.subr.bf16.mxu0 0
      %2208 = vmatpush1.bf16.msra.mxu0 %v1547
      %2209 = vmatprep.subr.bf16.mxu0 0
      %2210 = vmatpush1.bf16.msra.mxu0 %v1548
      %2211 = vmatprep.subr.bf16.mxu0 0
      %2212 = vmatpush1.bf16.msra.mxu0 %v1549
      %2213 = vmatprep.subr.bf16.mxu0 0
      %2214 = vmatpush1.bf16.msra.mxu0 %v1550
      %2215 = vmatprep.subr.bf16.mxu0 0
      %2216 = vmatpush1.bf16.msra.mxu0 %v1551
      %2217 = vmatprep.subr.bf16.mxu0 0
      %2218 = vmatpush1.bf16.msra.mxu0 %v1552
      %2219 = vmatprep.subr.bf16.mxu0 0
      %2220 = vmatpush1.bf16.msra.mxu0 %v1553
      %2221 = vmatprep.subr.bf16.mxu0 0
      %2222 = vmatpush1.bf16.msra.mxu0 %v1554
      %2223 = vmatprep.mubr.bf16.mxu0 %v2176
      %2224 = vmatmul.mubr.bf16.gmra.mrb[0].mxu0 %v2175
      %v2225 = vpop.f32.mrb[0].mxu0
      %v2226 = vadd.f32 0.0, %v2225
      %v2227 = vpop.f32.mrb[0].mxu0
      %v2228 = vpop.f32.mrb[0].mxu0
      %v2229 = vadd.f32 0.0, %v2228
      %v2230 = vpop.f32.mrb[0].mxu0
      %2231 = vmatprep.mubr.bf16.mxu0 %v2178
      %2232 = vmatmul.mubr.bf16.gmra.mrb[0].mxu0 %v2177
      %v2233 = vpop.f32.mrb[0].mxu0
      %v2234 = vadd.f32 0.0, %v2233
      %v2235 = vpop.f32.mrb[0].mxu0
      %v2236 = vpop.f32.mrb[0].mxu0
      %v2237 = vadd.f32 0.0, %v2236
      %v2238 = vpop.f32.mrb[0].mxu0
      %2239 = vmatprep.mubr.bf16.mxu0 %v2180
      %2240 = vmatmul.mubr.bf16.gmra.mrb[0].mxu0 %v2179
      %v2241 = vpop.f32.mrb[0].mxu0
      %v2242 = vadd.f32 0.0, %v2241
      %v2243 = vpop.f32.mrb[0].mxu0
      %v2244 = vpop.f32.mrb[0].mxu0
      %v2245 = vadd.f32 0.0, %v2244
      %v2246 = vpop.f32.mrb[0].mxu0
      %2247 = vmatprep.mubr.bf16.mxu0 %v2182
      %2248 = vmatmul.mubr.bf16.gmra.mrb[0].mxu0 %v2181
      %v2249 = vpop.f32.mrb[0].mxu0
      %v2250 = vadd.f32 0.0, %v2249
      %v2251 = vpop.f32.mrb[0].mxu0
      %v2252 = vpop.f32.mrb[0].mxu0
      %v2253 = vadd.f32 0.0, %v2252
      %v2254 = vpop.f32.mrb[0].mxu0
      %2255 = vdwg.mxu0
      %2264 = vrot.lane.b32.xlu0 %v2226, 64
      %v2265 = vpop.permute.xlu0 %2264
      %2266 = vrot.lane.b32.xlu0 %v2229, 64
      %v2267 = vpop.permute.xlu0 %2266
      %2268 = vrot.lane.b32.xlu0 %v2234, 64
      %v2269 = vpop.permute.xlu0 %2268
      %2270 = vrot.lane.b32.xlu0 %v2237, 64
      %v2271 = vpop.permute.xlu0 %2270
      %2272 = vrot.lane.b32.xlu0 %v2242, 64
      %v2273 = vpop.permute.xlu0 %2272
      %2274 = vrot.lane.b32.xlu0 %v2245, 64
      %v2275 = vpop.permute.xlu0 %2274
      %2276 = vrot.lane.b32.xlu0 %v2250, 64
      %v2277 = vpop.permute.xlu0 %2276
      %2278 = vrot.lane.b32.xlu0 %v2253, 64
      %v2279 = vpop.permute.xlu0 %2278
      %vm2288 = vcmask 654848
      %2289 = vst.msk [vmem:[#allocation2] sm:$0xff] %vm2288, %v2265
      %2290 = vst.msk [vmem:[#allocation2 + $0x10] sm:$0xff] %vm2288, %v2267
      %2291 = vst.msk [vmem:[#allocation2 + $0x20] sm:$0xff] %vm2288, %v2269
      %2292 = vst.msk [vmem:[#allocation2 + $0x30] sm:$0xff] %vm2288, %v2271
      %2293 = vst.msk [vmem:[#allocation2 + $0x40] sm:$0xff] %vm2288, %v2273
      %2294 = vst.msk [vmem:[#allocation2 + $0x50] sm:$0xff] %vm2288, %v2275
      %2295 = vst.msk [vmem:[#allocation2 + $0x60] sm:$0xff] %vm2288, %v2277
      %2296 = vst.msk [vmem:[#allocation2 + $0x70] sm:$0xff] %vm2288, %v2279
      %s2297 = scalar_lea.vmem %s1, 320
      %v2298 = vld [vmem:[%s2297] sm:$0xff]
      %v2299 = vld [vmem:[%s2297 + $0x8] sm:$0xff]
      %v2300 = vld [vmem:[%s2297 + $0x10] sm:$0xff]
      %v2301 = vld [vmem:[%s2297 + $0x18] sm:$0xff]
      %v2302 = vld [vmem:[%s2297 + $0x20] sm:$0xff]
      %v2303 = vld [vmem:[%s2297 + $0x28] sm:$0xff]
      %v2304 = vld [vmem:[%s2297 + $0x30] sm:$0xff]
      %v2305 = vld [vmem:[%s2297 + $0x38] sm:$0xff]
      %v2314 = vunpack.c.l.b16 %v2298
      %v2315 = vunpack.c.h.b16 %v2298
      %v2316 = vunpack.c.l.b16 %v2299
      %v2317 = vunpack.c.h.b16 %v2299
      %v2318 = vunpack.c.l.b16 %v2300
      %v2319 = vunpack.c.h.b16 %v2300
      %v2320 = vunpack.c.l.b16 %v2301
      %v2321 = vunpack.c.h.b16 %v2301
      %v2322 = vunpack.c.l.b16 %v2302
      %v2323 = vunpack.c.h.b16 %v2302
      %v2324 = vunpack.c.l.b16 %v2303
      %v2325 = vunpack.c.h.b16 %v2303
      %v2326 = vunpack.c.l.b16 %v2304
      %v2327 = vunpack.c.h.b16 %v2304
      %v2328 = vunpack.c.l.b16 %v2305
      %v2329 = vunpack.c.h.b16 %v2305
      %v2330 = vpack.c.b16 %v2316, %v2314
      %v2331 = vpack.c.b16 %v2317, %v2315
      %v2332 = vpack.c.b16 %v2320, %v2318
      %v2333 = vpack.c.b16 %v2321, %v2319
      %v2334 = vpack.c.b16 %v2324, %v2322
      %v2335 = vpack.c.b16 %v2325, %v2323
      %v2336 = vpack.c.b16 %v2328, %v2326
      %v2337 = vpack.c.b16 %v2329, %v2327
      %2346 = vmatprep.subr.bf16.mxu0 0
      %2347 = vmatpush1.bf16.msra.mxu0 %v1539
      %2348 = vmatprep.subr.bf16.mxu0 0
      %2349 = vmatpush1.bf16.msra.mxu0 %v1540
      %2350 = vmatprep.subr.bf16.mxu0 0
      %2351 = vmatpush1.bf16.msra.mxu0 %v1541
      %2352 = vmatprep.subr.bf16.mxu0 0
      %2353 = vmatpush1.bf16.msra.mxu0 %v1542
      %2354 = vmatprep.subr.bf16.mxu0 0
      %2355 = vmatpush1.bf16.msra.mxu0 %v1543
      %2356 = vmatprep.subr.bf16.mxu0 0
      %2357 = vmatpush1.bf16.msra.mxu0 %v1544
      %2358 = vmatprep.subr.bf16.mxu0 0
      %2359 = vmatpush1.bf16.msra.mxu0 %v1545
      %2360 = vmatprep.subr.bf16.mxu0 0
      %2361 = vmatpush1.bf16.msra.mxu0 %v1546
      %2362 = vmatprep.subr.bf16.mxu0 0
      %2363 = vmatpush1.bf16.msra.mxu0 %v1547
      %2364 = vmatprep.subr.bf16.mxu0 0
      %2365 = vmatpush1.bf16.msra.mxu0 %v1548
      %2366 = vmatprep.subr.bf16.mxu0 0
      %2367 = vmatpush1.bf16.msra.mxu0 %v1549
      %2368 = vmatprep.subr.bf16.mxu0 0
      %2369 = vmatpush1.bf16.msra.mxu0 %v1550
      %2370 = vmatprep.subr.bf16.mxu0 0
      %2371 = vmatpush1.bf16.msra.mxu0 %v1551
      %2372 = vmatprep.subr.bf16.mxu0 0
      %2373 = vmatpush1.bf16.msra.mxu0 %v1552
      %2374 = vmatprep.subr.bf16.mxu0 0
      %2375 = vmatpush1.bf16.msra.mxu0 %v1553
      %2376 = vmatprep.subr.bf16.mxu0 0
      %2377 = vmatpush1.bf16.msra.mxu0 %v1554
      %2378 = vmatprep.mubr.bf16.mxu0 %v2331
      %2379 = vmatmul.mubr.bf16.gmra.mrb[0].mxu0 %v2330
      %v2380 = vpop.f32.mrb[0].mxu0
      %v2381 = vadd.f32 0.0, %v2380
      %v2382 = vpop.f32.mrb[0].mxu0
      %v2383 = vpop.f32.mrb[0].mxu0
      %v2384 = vadd.f32 0.0, %v2383
      %v2385 = vpop.f32.mrb[0].mxu0
      %2386 = vmatprep.mubr.bf16.mxu0 %v2333
      %2387 = vmatmul.mubr.bf16.gmra.mrb[0].mxu0 %v2332
      %v2388 = vpop.f32.mrb[0].mxu0
      %v2389 = vadd.f32 0.0, %v2388
      %v2390 = vpop.f32.mrb[0].mxu0
      %v2391 = vpop.f32.mrb[0].mxu0
      %v2392 = vadd.f32 0.0, %v2391
      %v2393 = vpop.f32.mrb[0].mxu0
      %2394 = vmatprep.mubr.bf16.mxu0 %v2335
      %2395 = vmatmul.mubr.bf16.gmra.mrb[0].mxu0 %v2334
      %v2396 = vpop.f32.mrb[0].mxu0
      %v2397 = vadd.f32 0.0, %v2396
      %v2398 = vpop.f32.mrb[0].mxu0
      %v2399 = vpop.f32.mrb[0].mxu0
      %v2400 = vadd.f32 0.0, %v2399
      %v2401 = vpop.f32.mrb[0].mxu0
      %2402 = vmatprep.mubr.bf16.mxu0 %v2337
      %2403 = vmatmul.mubr.bf16.gmra.mrb[0].mxu0 %v2336
      %v2404 = vpop.f32.mrb[0].mxu0
      %v2405 = vadd.f32 0.0, %v2404
      %v2406 = vpop.f32.mrb[0].mxu0
      %v2407 = vpop.f32.mrb[0].mxu0
      %v2408 = vadd.f32 0.0, %v2407
      %v2409 = vpop.f32.mrb[0].mxu0
      %2410 = vdwg.mxu0
      %2419 = vrot.lane.b32.xlu0 %v2381, 80
      %v2420 = vpop.permute.xlu0 %2419
      %2421 = vrot.lane.b32.xlu0 %v2384, 80
      %v2422 = vpop.permute.xlu0 %2421
      %2423 = vrot.lane.b32.xlu0 %v2389, 80
      %v2424 = vpop.permute.xlu0 %2423
      %2425 = vrot.lane.b32.xlu0 %v2392, 80
      %v2426 = vpop.permute.xlu0 %2425
      %2427 = vrot.lane.b32.xlu0 %v2397, 80
      %v2428 = vpop.permute.xlu0 %2427
      %2429 = vrot.lane.b32.xlu0 %v2400, 80
      %v2430 = vpop.permute.xlu0 %2429
      %2431 = vrot.lane.b32.xlu0 %v2405, 80
      %v2432 = vpop.permute.xlu0 %2431
      %2433 = vrot.lane.b32.xlu0 %v2408, 80
      %v2434 = vpop.permute.xlu0 %2433
      %vm2443 = vcmask 786048
      %2444 = vst.msk [vmem:[#allocation2] sm:$0xff] %vm2443, %v2420
      %2445 = vst.msk [vmem:[#allocation2 + $0x10] sm:$0xff] %vm2443, %v2422
      %2446 = vst.msk [vmem:[#allocation2 + $0x20] sm:$0xff] %vm2443, %v2424
      %2447 = vst.msk [vmem:[#allocation2 + $0x30] sm:$0xff] %vm2443, %v2426
      %2448 = vst.msk [vmem:[#allocation2 + $0x40] sm:$0xff] %vm2443, %v2428
      %2449 = vst.msk [vmem:[#allocation2 + $0x50] sm:$0xff] %vm2443, %v2430
      %2450 = vst.msk [vmem:[#allocation2 + $0x60] sm:$0xff] %vm2443, %v2432
      %2451 = vst.msk [vmem:[#allocation2 + $0x70] sm:$0xff] %vm2443, %v2434
      %s2452 = scalar_lea.vmem %s1, 384
      %v2453 = vld [vmem:[%s2452] sm:$0xff]
      %v2454 = vld [vmem:[%s2452 + $0x8] sm:$0xff]
      %v2455 = vld [vmem:[%s2452 + $0x10] sm:$0xff]
      %v2456 = vld [vmem:[%s2452 + $0x18] sm:$0xff]
      %v2457 = vld [vmem:[%s2452 + $0x20] sm:$0xff]
      %v2458 = vld [vmem:[%s2452 + $0x28] sm:$0xff]
      %v2459 = vld [vmem:[%s2452 + $0x30] sm:$0xff]
      %v2460 = vld [vmem:[%s2452 + $0x38] sm:$0xff]
      %v2469 = vunpack.c.l.b16 %v2453
      %v2470 = vunpack.c.h.b16 %v2453
      %v2471 = vunpack.c.l.b16 %v2454
      %v2472 = vunpack.c.h.b16 %v2454
      %v2473 = vunpack.c.l.b16 %v2455
      %v2474 = vunpack.c.h.b16 %v2455
      %v2475 = vunpack.c.l.b16 %v2456
      %v2476 = vunpack.c.h.b16 %v2456
      %v2477 = vunpack.c.l.b16 %v2457
      %v2478 = vunpack.c.h.b16 %v2457
      %v2479 = vunpack.c.l.b16 %v2458
      %v2480 = vunpack.c.h.b16 %v2458
      %v2481 = vunpack.c.l.b16 %v2459
      %v2482 = vunpack.c.h.b16 %v2459
      %v2483 = vunpack.c.l.b16 %v2460
      %v2484 = vunpack.c.h.b16 %v2460
      %v2485 = vpack.c.b16 %v2471, %v2469
      %v2486 = vpack.c.b16 %v2472, %v2470
      %v2487 = vpack.c.b16 %v2475, %v2473
      %v2488 = vpack.c.b16 %v2476, %v2474
      %v2489 = vpack.c.b16 %v2479, %v2477
      %v2490 = vpack.c.b16 %v2480, %v2478
      %v2491 = vpack.c.b16 %v2483, %v2481
      %v2492 = vpack.c.b16 %v2484, %v2482
      %2501 = vmatprep.subr.bf16.mxu0 0
      %2502 = vmatpush1.bf16.msra.mxu0 %v1539
      %2503 = vmatprep.subr.bf16.mxu0 0
      %2504 = vmatpush1.bf16.msra.mxu0 %v1540
      %2505 = vmatprep.subr.bf16.mxu0 0
      %2506 = vmatpush1.bf16.msra.mxu0 %v1541
      %2507 = vmatprep.subr.bf16.mxu0 0
      %2508 = vmatpush1.bf16.msra.mxu0 %v1542
      %2509 = vmatprep.subr.bf16.mxu0 0
      %2510 = vmatpush1.bf16.msra.mxu0 %v1543
      %2511 = vmatprep.subr.bf16.mxu0 0
      %2512 = vmatpush1.bf16.msra.mxu0 %v1544
      %2513 = vmatprep.subr.bf16.mxu0 0
      %2514 = vmatpush1.bf16.msra.mxu0 %v1545
      %2515 = vmatprep.subr.bf16.mxu0 0
      %2516 = vmatpush1.bf16.msra.mxu0 %v1546
      %2517 = vmatprep.subr.bf16.mxu0 0
      %2518 = vmatpush1.bf16.msra.mxu0 %v1547
      %2519 = vmatprep.subr.bf16.mxu0 0
      %2520 = vmatpush1.bf16.msra.mxu0 %v1548
      %2521 = vmatprep.subr.bf16.mxu0 0
      %2522 = vmatpush1.bf16.msra.mxu0 %v1549
      %2523 = vmatprep.subr.bf16.mxu0 0
      %2524 = vmatpush1.bf16.msra.mxu0 %v1550
      %2525 = vmatprep.subr.bf16.mxu0 0
      %2526 = vmatpush1.bf16.msra.mxu0 %v1551
      %2527 = vmatprep.subr.bf16.mxu0 0
      %2528 = vmatpush1.bf16.msra.mxu0 %v1552
      %2529 = vmatprep.subr.bf16.mxu0 0
      %2530 = vmatpush1.bf16.msra.mxu0 %v1553
      %2531 = vmatprep.subr.bf16.mxu0 0
      %2532 = vmatpush1.bf16.msra.mxu0 %v1554
      %2533 = vmatprep.mubr.bf16.mxu0 %v2486
      %2534 = vmatmul.mubr.bf16.gmra.mrb[0].mxu0 %v2485
      %v2535 = vpop.f32.mrb[0].mxu0
      %v2536 = vadd.f32 0.0, %v2535
      %v2537 = vpop.f32.mrb[0].mxu0
      %v2538 = vpop.f32.mrb[0].mxu0
      %v2539 = vadd.f32 0.0, %v2538
      %v2540 = vpop.f32.mrb[0].mxu0
      %2541 = vmatprep.mubr.bf16.mxu0 %v2488
      %2542 = vmatmul.mubr.bf16.gmra.mrb[0].mxu0 %v2487
      %v2543 = vpop.f32.mrb[0].mxu0
      %v2544 = vadd.f32 0.0, %v2543
      %v2545 = vpop.f32.mrb[0].mxu0
      %v2546 = vpop.f32.mrb[0].mxu0
      %v2547 = vadd.f32 0.0, %v2546
      %v2548 = vpop.f32.mrb[0].mxu0
      %2549 = vmatprep.mubr.bf16.mxu0 %v2490
      %2550 = vmatmul.mubr.bf16.gmra.mrb[0].mxu0 %v2489
      %v2551 = vpop.f32.mrb[0].mxu0
      %v2552 = vadd.f32 0.0, %v2551
      %v2553 = vpop.f32.mrb[0].mxu0
      %v2554 = vpop.f32.mrb[0].mxu0
      %v2555 = vadd.f32 0.0, %v2554
      %v2556 = vpop.f32.mrb[0].mxu0
      %2557 = vmatprep.mubr.bf16.mxu0 %v2492
      %2558 = vmatmul.mubr.bf16.gmra.mrb[0].mxu0 %v2491
      %v2559 = vpop.f32.mrb[0].mxu0
      %v2560 = vadd.f32 0.0, %v2559
      %v2561 = vpop.f32.mrb[0].mxu0
      %v2562 = vpop.f32.mrb[0].mxu0
      %v2563 = vadd.f32 0.0, %v2562
      %v2564 = vpop.f32.mrb[0].mxu0
      %2565 = vdwg.mxu0
      %2574 = vrot.lane.b32.xlu0 %v2536, 96
      %v2575 = vpop.permute.xlu0 %2574
      %2576 = vrot.lane.b32.xlu0 %v2539, 96
      %v2577 = vpop.permute.xlu0 %2576
      %2578 = vrot.lane.b32.xlu0 %v2544, 96
      %v2579 = vpop.permute.xlu0 %2578
      %2580 = vrot.lane.b32.xlu0 %v2547, 96
      %v2581 = vpop.permute.xlu0 %2580
      %2582 = vrot.lane.b32.xlu0 %v2552, 96
      %v2583 = vpop.permute.xlu0 %2582
      %2584 = vrot.lane.b32.xlu0 %v2555, 96
      %v2585 = vpop.permute.xlu0 %2584
      %2586 = vrot.lane.b32.xlu0 %v2560, 96
      %v2587 = vpop.permute.xlu0 %2586
      %2588 = vrot.lane.b32.xlu0 %v2563, 96
      %v2589 = vpop.permute.xlu0 %2588
      %vm2598 = vcmask 917248
      %2599 = vst.msk [vmem:[#allocation2] sm:$0xff] %vm2598, %v2575
      %2600 = vst.msk [vmem:[#allocation2 + $0x10] sm:$0xff] %vm2598, %v2577
      %2601 = vst.msk [vmem:[#allocation2 + $0x20] sm:$0xff] %vm2598, %v2579
      %2602 = vst.msk [vmem:[#allocation2 + $0x30] sm:$0xff] %vm2598, %v2581
      %2603 = vst.msk [vmem:[#allocation2 + $0x40] sm:$0xff] %vm2598, %v2583
      %2604 = vst.msk [vmem:[#allocation2 + $0x50] sm:$0xff] %vm2598, %v2585
      %2605 = vst.msk [vmem:[#allocation2 + $0x60] sm:$0xff] %vm2598, %v2587
      %2606 = vst.msk [vmem:[#allocation2 + $0x70] sm:$0xff] %vm2598, %v2589
      %s2607 = scalar_lea.vmem %s1, 448
      %v2608 = vld [vmem:[%s2607] sm:$0xff]
      %v2609 = vld [vmem:[%s2607 + $0x8] sm:$0xff]
      %v2610 = vld [vmem:[%s2607 + $0x10] sm:$0xff]
      %v2611 = vld [vmem:[%s2607 + $0x18] sm:$0xff]
      %v2612 = vld [vmem:[%s2607 + $0x20] sm:$0xff]
      %v2613 = vld [vmem:[%s2607 + $0x28] sm:$0xff]
      %v2614 = vld [vmem:[%s2607 + $0x30] sm:$0xff]
      %v2615 = vld [vmem:[%s2607 + $0x38] sm:$0xff]
      %v2624 = vunpack.c.l.b16 %v2608
      %v2625 = vunpack.c.h.b16 %v2608
      %v2626 = vunpack.c.l.b16 %v2609
      %v2627 = vunpack.c.h.b16 %v2609
      %v2628 = vunpack.c.l.b16 %v2610
      %v2629 = vunpack.c.h.b16 %v2610
      %v2630 = vunpack.c.l.b16 %v2611
      %v2631 = vunpack.c.h.b16 %v2611
      %v2632 = vunpack.c.l.b16 %v2612
      %v2633 = vunpack.c.h.b16 %v2612
      %v2634 = vunpack.c.l.b16 %v2613
      %v2635 = vunpack.c.h.b16 %v2613
      %v2636 = vunpack.c.l.b16 %v2614
      %v2637 = vunpack.c.h.b16 %v2614
      %v2638 = vunpack.c.l.b16 %v2615
      %v2639 = vunpack.c.h.b16 %v2615
      %v2640 = vpack.c.b16 %v2626, %v2624
      %v2641 = vpack.c.b16 %v2627, %v2625
      %v2642 = vpack.c.b16 %v2630, %v2628
      %v2643 = vpack.c.b16 %v2631, %v2629
      %v2644 = vpack.c.b16 %v2634, %v2632
      %v2645 = vpack.c.b16 %v2635, %v2633
      %v2646 = vpack.c.b16 %v2638, %v2636
      %v2647 = vpack.c.b16 %v2639, %v2637
      %2656 = vmatprep.subr.bf16.mxu0 0
      %2657 = vmatpush1.bf16.msra.mxu0 %v1539
      %2658 = vmatprep.subr.bf16.mxu0 0
      %2659 = vmatpush1.bf16.msra.mxu0 %v1540
      %2660 = vmatprep.subr.bf16.mxu0 0
      %2661 = vmatpush1.bf16.msra.mxu0 %v1541
      %2662 = vmatprep.subr.bf16.mxu0 0
      %2663 = vmatpush1.bf16.msra.mxu0 %v1542
      %2664 = vmatprep.subr.bf16.mxu0 0
      %2665 = vmatpush1.bf16.msra.mxu0 %v1543
      %2666 = vmatprep.subr.bf16.mxu0 0
      %2667 = vmatpush1.bf16.msra.mxu0 %v1544
      %2668 = vmatprep.subr.bf16.mxu0 0
      %2669 = vmatpush1.bf16.msra.mxu0 %v1545
      %2670 = vmatprep.subr.bf16.mxu0 0
      %2671 = vmatpush1.bf16.msra.mxu0 %v1546
      %2672 = vmatprep.subr.bf16.mxu0 0
      %2673 = vmatpush1.bf16.msra.mxu0 %v1547
      %2674 = vmatprep.subr.bf16.mxu0 0
      %2675 = vmatpush1.bf16.msra.mxu0 %v1548
      %2676 = vmatprep.subr.bf16.mxu0 0
      %2677 = vmatpush1.bf16.msra.mxu0 %v1549
      %2678 = vmatprep.subr.bf16.mxu0 0
      %2679 = vmatpush1.bf16.msra.mxu0 %v1550
      %2680 = vmatprep.subr.bf16.mxu0 0
      %2681 = vmatpush1.bf16.msra.mxu0 %v1551
      %2682 = vmatprep.subr.bf16.mxu0 0
      %2683 = vmatpush1.bf16.msra.mxu0 %v1552
      %2684 = vmatprep.subr.bf16.mxu0 0
      %2685 = vmatpush1.bf16.msra.mxu0 %v1553
      %2686 = vmatprep.subr.bf16.mxu0 0
      %2687 = vmatpush1.bf16.msra.mxu0 %v1554
      %2688 = vmatprep.mubr.bf16.mxu0 %v2641
      %2689 = vmatmul.mubr.bf16.gmra.mrb[0].mxu0 %v2640
      %v2690 = vpop.f32.mrb[0].mxu0
      %v2691 = vadd.f32 0.0, %v2690
      %v2692 = vpop.f32.mrb[0].mxu0
      %v2693 = vpop.f32.mrb[0].mxu0
      %v2694 = vadd.f32 0.0, %v2693
      %v2695 = vpop.f32.mrb[0].mxu0
      %2696 = vmatprep.mubr.bf16.mxu0 %v2643
      %2697 = vmatmul.mubr.bf16.gmra.mrb[0].mxu0 %v2642
      %v2698 = vpop.f32.mrb[0].mxu0
      %v2699 = vadd.f32 0.0, %v2698
      %v2700 = vpop.f32.mrb[0].mxu0
      %v2701 = vpop.f32.mrb[0].mxu0
      %v2702 = vadd.f32 0.0, %v2701
      %v2703 = vpop.f32.mrb[0].mxu0
      %2704 = vmatprep.mubr.bf16.mxu0 %v2645
      %2705 = vmatmul.mubr.bf16.gmra.mrb[0].mxu0 %v2644
      %v2706 = vpop.f32.mrb[0].mxu0
      %v2707 = vadd.f32 0.0, %v2706
      %v2708 = vpop.f32.mrb[0].mxu0
      %v2709 = vpop.f32.mrb[0].mxu0
      %v2710 = vadd.f32 0.0, %v2709
      %v2711 = vpop.f32.mrb[0].mxu0
      %2712 = vmatprep.mubr.bf16.mxu0 %v2647
      %2713 = vmatmul.mubr.bf16.gmra.mrb[0].mxu0 %v2646
      %v2714 = vpop.f32.mrb[0].mxu0
      %v2715 = vadd.f32 0.0, %v2714
      %v2716 = vpop.f32.mrb[0].mxu0
      %v2717 = vpop.f32.mrb[0].mxu0
      %v2718 = vadd.f32 0.0, %v2717
      %v2719 = vpop.f32.mrb[0].mxu0
      %2720 = vdwg.mxu0
      %2729 = vrot.lane.b32.xlu0 %v2691, 112
      %v2730 = vpop.permute.xlu0 %2729
      %2731 = vrot.lane.b32.xlu0 %v2694, 112
      %v2732 = vpop.permute.xlu0 %2731
      %2733 = vrot.lane.b32.xlu0 %v2699, 112
      %v2734 = vpop.permute.xlu0 %2733
      %2735 = vrot.lane.b32.xlu0 %v2702, 112
      %v2736 = vpop.permute.xlu0 %2735
      %2737 = vrot.lane.b32.xlu0 %v2707, 112
      %v2738 = vpop.permute.xlu0 %2737
      %2739 = vrot.lane.b32.xlu0 %v2710, 112
      %v2740 = vpop.permute.xlu0 %2739
      %2741 = vrot.lane.b32.xlu0 %v2715, 112
      %v2742 = vpop.permute.xlu0 %2741
      %2743 = vrot.lane.b32.xlu0 %v2718, 112
      %v2744 = vpop.permute.xlu0 %2743
      %vm2753 = vcmask 1048448
      %2754 = vst.msk [vmem:[#allocation2] sm:$0xff] %vm2753, %v2730
      %2755 = vst.msk [vmem:[#allocation2 + $0x10] sm:$0xff] %vm2753, %v2732
      %2756 = vst.msk [vmem:[#allocation2 + $0x20] sm:$0xff] %vm2753, %v2734
      %2757 = vst.msk [vmem:[#allocation2 + $0x30] sm:$0xff] %vm2753, %v2736
      %2758 = vst.msk [vmem:[#allocation2 + $0x40] sm:$0xff] %vm2753, %v2738
      %2759 = vst.msk [vmem:[#allocation2 + $0x50] sm:$0xff] %vm2753, %v2740
      %2760 = vst.msk [vmem:[#allocation2 + $0x60] sm:$0xff] %vm2753, %v2742
      %2761 = vst.msk [vmem:[#allocation2 + $0x70] sm:$0xff] %vm2753, %v2744
      %s2762 = scalar_lea.vmem %s1, 512
      %v2763 = vld [vmem:[%s2762] sm:$0xff]
      %v2764 = vld [vmem:[%s2762 + $0x8] sm:$0xff]
      %v2765 = vld [vmem:[%s2762 + $0x10] sm:$0xff]
      %v2766 = vld [vmem:[%s2762 + $0x18] sm:$0xff]
      %v2767 = vld [vmem:[%s2762 + $0x20] sm:$0xff]
      %v2768 = vld [vmem:[%s2762 + $0x28] sm:$0xff]
      %v2769 = vld [vmem:[%s2762 + $0x30] sm:$0xff]
      %v2770 = vld [vmem:[%s2762 + $0x38] sm:$0xff]
      %v2779 = vunpack.c.l.b16 %v2763
      %v2780 = vunpack.c.h.b16 %v2763
      %v2781 = vunpack.c.l.b16 %v2764
      %v2782 = vunpack.c.h.b16 %v2764
      %v2783 = vunpack.c.l.b16 %v2765
      %v2784 = vunpack.c.h.b16 %v2765
      %v2785 = vunpack.c.l.b16 %v2766
      %v2786 = vunpack.c.h.b16 %v2766
      %v2787 = vunpack.c.l.b16 %v2767
      %v2788 = vunpack.c.h.b16 %v2767
      %v2789 = vunpack.c.l.b16 %v2768
      %v2790 = vunpack.c.h.b16 %v2768
      %v2791 = vunpack.c.l.b16 %v2769
      %v2792 = vunpack.c.h.b16 %v2769
      %v2793 = vunpack.c.l.b16 %v2770
      %v2794 = vunpack.c.h.b16 %v2770
      %v2795 = vpack.c.b16 %v2781, %v2779
      %v2796 = vpack.c.b16 %v2782, %v2780
      %v2797 = vpack.c.b16 %v2785, %v2783
      %v2798 = vpack.c.b16 %v2786, %v2784
      %v2799 = vpack.c.b16 %v2789, %v2787
      %v2800 = vpack.c.b16 %v2790, %v2788
      %v2801 = vpack.c.b16 %v2793, %v2791
      %v2802 = vpack.c.b16 %v2794, %v2792
      %2811 = vmatprep.subr.bf16.mxu0 0
      %2812 = vmatpush1.bf16.msra.mxu0 %v1539
      %2813 = vmatprep.subr.bf16.mxu0 0
      %2814 = vmatpush1.bf16.msra.mxu0 %v1540
      %2815 = vmatprep.subr.bf16.mxu0 0
      %2816 = vmatpush1.bf16.msra.mxu0 %v1541
      %2817 = vmatprep.subr.bf16.mxu0 0
      %2818 = vmatpush1.bf16.msra.mxu0 %v1542
      %2819 = vmatprep.subr.bf16.mxu0 0
      %2820 = vmatpush1.bf16.msra.mxu0 %v1543
      %2821 = vmatprep.subr.bf16.mxu0 0
      %2822 = vmatpush1.bf16.msra.mxu0 %v1544
      %2823 = vmatprep.subr.bf16.mxu0 0
      %2824 = vmatpush1.bf16.msra.mxu0 %v1545
      %2825 = vmatprep.subr.bf16.mxu0 0
      %2826 = vmatpush1.bf16.msra.mxu0 %v1546
      %2827 = vmatprep.subr.bf16.mxu0 0
      %2828 = vmatpush1.bf16.msra.mxu0 %v1547
      %2829 = vmatprep.subr.bf16.mxu0 0
      %2830 = vmatpush1.bf16.msra.mxu0 %v1548
      %2831 = vmatprep.subr.bf16.mxu0 0
      %2832 = vmatpush1.bf16.msra.mxu0 %v1549
      %2833 = vmatprep.subr.bf16.mxu0 0
      %2834 = vmatpush1.bf16.msra.mxu0 %v1550
      %2835 = vmatprep.subr.bf16.mxu0 0
      %2836 = vmatpush1.bf16.msra.mxu0 %v1551
      %2837 = vmatprep.subr.bf16.mxu0 0
      %2838 = vmatpush1.bf16.msra.mxu0 %v1552
      %2839 = vmatprep.subr.bf16.mxu0 0
      %2840 = vmatpush1.bf16.msra.mxu0 %v1553
      %2841 = vmatprep.subr.bf16.mxu0 0
      %2842 = vmatpush1.bf16.msra.mxu0 %v1554
      %2843 = vmatprep.mubr.bf16.mxu0 %v2796
      %2844 = vmatmul.mubr.bf16.gmra.mrb[0].mxu0 %v2795
      %v2845 = vpop.f32.mrb[0].mxu0
      %v2846 = vadd.f32 0.0, %v2845
      %v2847 = vpop.f32.mrb[0].mxu0
      %v2848 = vpop.f32.mrb[0].mxu0
      %v2849 = vadd.f32 0.0, %v2848
      %v2850 = vpop.f32.mrb[0].mxu0
      %2851 = vmatprep.mubr.bf16.mxu0 %v2798
      %2852 = vmatmul.mubr.bf16.gmra.mrb[0].mxu0 %v2797
      %v2853 = vpop.f32.mrb[0].mxu0
      %v2854 = vadd.f32 0.0, %v2853
      %v2855 = vpop.f32.mrb[0].mxu0
      %v2856 = vpop.f32.mrb[0].mxu0
      %v2857 = vadd.f32 0.0, %v2856
      %v2858 = vpop.f32.mrb[0].mxu0
      %2859 = vmatprep.mubr.bf16.mxu0 %v2800
      %2860 = vmatmul.mubr.bf16.gmra.mrb[0].mxu0 %v2799
      %v2861 = vpop.f32.mrb[0].mxu0
      %v2862 = vadd.f32 0.0, %v2861
      %v2863 = vpop.f32.mrb[0].mxu0
      %v2864 = vpop.f32.mrb[0].mxu0
      %v2865 = vadd.f32 0.0, %v2864
      %v2866 = vpop.f32.mrb[0].mxu0
      %2867 = vmatprep.mubr.bf16.mxu0 %v2802
      %2868 = vmatmul.mubr.bf16.gmra.mrb[0].mxu0 %v2801
      %v2869 = vpop.f32.mrb[0].mxu0
      %v2870 = vadd.f32 0.0, %v2869
      %v2871 = vpop.f32.mrb[0].mxu0
      %v2872 = vpop.f32.mrb[0].mxu0
      %v2873 = vadd.f32 0.0, %v2872
      %v2874 = vpop.f32.mrb[0].mxu0
      %2875 = vdwg.mxu0
      %2876 = vst.msk [vmem:[#allocation2 + $0x8] sm:$0xff] %vm1668, %v2846
      %2877 = vst.msk [vmem:[#allocation2 + $0x18] sm:$0xff] %vm1668, %v2849
      %2878 = vst.msk [vmem:[#allocation2 + $0x28] sm:$0xff] %vm1668, %v2854
      %2879 = vst.msk [vmem:[#allocation2 + $0x38] sm:$0xff] %vm1668, %v2857
      %2880 = vst.msk [vmem:[#allocation2 + $0x48] sm:$0xff] %vm1668, %v2862
      %2881 = vst.msk [vmem:[#allocation2 + $0x58] sm:$0xff] %vm1668, %v2865
      %2882 = vst.msk [vmem:[#allocation2 + $0x68] sm:$0xff] %vm1668, %v2870
      %2883 = vst.msk [vmem:[#allocation2 + $0x78] sm:$0xff] %vm1668, %v2873
      %v2884 = vld [vmem:[#allocation2] sm:$0xff]
      %v2885 = vld [vmem:[#allocation2 + $0x8] sm:$0xff]
      %v2886 = vld [vmem:[#allocation2 + $0x10] sm:$0xff]
      %v2887 = vld [vmem:[#allocation2 + $0x18] sm:$0xff]
      %v2888 = vld [vmem:[#allocation2 + $0x20] sm:$0xff]
      %v2889 = vld [vmem:[#allocation2 + $0x28] sm:$0xff]
      %v2890 = vld [vmem:[#allocation2 + $0x30] sm:$0xff]
      %v2891 = vld [vmem:[#allocation2 + $0x38] sm:$0xff]
      %v2892 = vld [vmem:[#allocation2 + $0x40] sm:$0xff]
      %v2893 = vld [vmem:[#allocation2 + $0x48] sm:$0xff]
      %v2894 = vld [vmem:[#allocation2 + $0x50] sm:$0xff]
      %v2895 = vld [vmem:[#allocation2 + $0x58] sm:$0xff]
      %v2896 = vld [vmem:[#allocation2 + $0x60] sm:$0xff]
      %v2897 = vld [vmem:[#allocation2 + $0x68] sm:$0xff]
      %v2898 = vld [vmem:[#allocation2 + $0x70] sm:$0xff]
      %v2899 = vld [vmem:[#allocation2 + $0x78] sm:$0xff]
      %v2900 = vpack.c.bf16 %v2886, %v2884
      %v2901 = vpack.c.bf16 %v2887, %v2885
      %v2902 = vpack.c.bf16 %v2890, %v2888
      %v2903 = vpack.c.bf16 %v2891, %v2889
      %v2904 = vpack.c.bf16 %v2894, %v2892
      %v2905 = vpack.c.bf16 %v2895, %v2893
      %v2906 = vpack.c.bf16 %v2898, %v2896
      %v2907 = vpack.c.bf16 %v2899, %v2897
      %v2908 = vld [vmem:[%s7] sm:$0xf]
      %v2909 = vld [vmem:[%s7 + $0x4] sm:$0xf]
      %v2910 = vld [vmem:[%s7 + $0x8] sm:$0xf]
      %v2911 = vld [vmem:[%s7 + $0xc] sm:$0xf]
      %v2912 = vld [vmem:[%s7 + $0x10] sm:$0xf]
      %v2913 = vld [vmem:[%s7 + $0x14] sm:$0xf]
      %v2914 = vld [vmem:[%s7 + $0x18] sm:$0xf]
      %v2915 = vld [vmem:[%s7 + $0x1c] sm:$0xf]
      %v2916 = vld [vmem:[%s7 + $0x20] sm:$0xf]
      %v2917 = vld [vmem:[%s7 + $0x24] sm:$0xf]
      %v2918 = vld [vmem:[%s7 + $0x28] sm:$0xf]
      %v2919 = vld [vmem:[%s7 + $0x2c] sm:$0xf]
      %v2920 = vld [vmem:[%s7 + $0x30] sm:$0xf]
      %v2921 = vld [vmem:[%s7 + $0x34] sm:$0xf]
      %v2922 = vld [vmem:[%s7 + $0x38] sm:$0xf]
      %v2923 = vld [vmem:[%s7 + $0x3c] sm:$0xf]
      %v2924 = vld [vmem:[%s7 + $0x40] sm:$0xf]
      %v2925 = vld [vmem:[%s7 + $0x44] sm:$0xf]
      %v2926 = vld [vmem:[%s8] sm:$0x1]
      %v2928 = vlaneseq
      %v2929 = vshrl.u32 %v2928, 7
      %v2930 = vsub.s32 0, %v2929
      %v2931 = vrot.slane %v2926, %v2930
      %v2951 = vunpack.c.l.b16 %v2908
      %v2952 = vunpack.c.l.b16 %v2909
      %v2953 = vunpack.c.l.b16 %v2910
      %v2954 = vunpack.c.l.b16 %v2911
      %v2955 = vunpack.c.l.b16 %v2912
      %v2956 = vunpack.c.l.b16 %v2913
      %v2957 = vunpack.c.l.b16 %v2914
      %v2958 = vunpack.c.l.b16 %v2915
      %v2959 = vunpack.c.l.b16 %v2916
      %v2960 = vunpack.c.l.b16 %v2917
      %v2961 = vunpack.c.l.b16 %v2918
      %v2962 = vunpack.c.l.b16 %v2919
      %v2963 = vunpack.c.l.b16 %v2920
      %v2964 = vunpack.c.l.b16 %v2921
      %v2965 = vunpack.c.l.b16 %v2922
      %v2966 = vunpack.c.l.b16 %v2923
      %v2967 = vunpack.c.l.b16 %v2924
      %v2968 = vunpack.c.l.b16 %v2925
      %v2969 = vpack.c.b16 %v2952, %v2951
      %v2970 = vpack.c.b16 %v2954, %v2953
      %v2971 = vpack.c.b16 %v2956, %v2955
      %v2972 = vpack.c.b16 %v2958, %v2957
      %v2973 = vpack.c.b16 %v2960, %v2959
      %v2974 = vpack.c.b16 %v2962, %v2961
      %v2975 = vpack.c.b16 %v2964, %v2963
      %v2976 = vpack.c.b16 %v2966, %v2965
      %v2977 = vpack.c.b16 %v2968, %v2967
      %v2988 = vsel %vm1668, %v2901, 0
      %v2991 = vsel %vm1668, %v2903, 0
      %v2994 = vsel %vm1668, %v2905, 0
      %v2997 = vsel %vm1668, %v2907, 0
      %2999 = vmatprep.subr.bf16.mxu0 0
      %3000 = vmatpush1.bf16.msra.mxu0 %v2969
      %3001 = vmatprep.subr.bf16.mxu0 0
      %3002 = vmatpush1.bf16.msra.mxu0 %v2970
      %3003 = vmatprep.subr.bf16.mxu0 0
      %3004 = vmatpush1.bf16.msra.mxu0 %v2971
      %3005 = vmatprep.subr.bf16.mxu0 0
      %3006 = vmatpush1.bf16.msra.mxu0 %v2972
      %3007 = vmatprep.subr.bf16.mxu0 0
      %3008 = vmatpush1.bf16.msra.mxu0 %v2973
      %3009 = vmatprep.subr.bf16.mxu0 0
      %3010 = vmatpush1.bf16.msra.mxu0 %v2974
      %3011 = vmatprep.subr.bf16.mxu0 0
      %3012 = vmatpush1.bf16.msra.mxu0 %v2975
      %3013 = vmatprep.subr.bf16.mxu0 0
      %3014 = vmatpush1.bf16.msra.mxu0 %v2976
      %3015 = vmatprep.subr.bf16.mxu0 0
      %3016 = vmatpush1.bf16.msra.mxu0 %v2977
      %3017 = vmatprep.subr.bf16.mxu0 0
      %3018 = vmatpush1.bf16.msra.mxu0 0
      %3019 = vmatprep.subr.bf16.mxu0 0
      %3020 = vmatpush1.bf16.msra.mxu0 0
      %3021 = vmatprep.subr.bf16.mxu0 0
      %3022 = vmatpush1.bf16.msra.mxu0 0
      %3023 = vmatprep.subr.bf16.mxu0 0
      %3024 = vmatpush1.bf16.msra.mxu0 0
      %3025 = vmatprep.subr.bf16.mxu0 0
      %3026 = vmatpush1.bf16.msra.mxu0 0
      %3027 = vmatprep.subr.bf16.mxu0 0
      %3028 = vmatpush1.bf16.msra.mxu0 0
      %3029 = vmatprep.subr.bf16.mxu0 0
      %3030 = vmatpush1.bf16.msra.mxu0 0
      %3031 = vmatprep.mubr.bf16.mxu0 %v2988
      %3032 = vmatmul.mubr.bf16.gmra.mrb[0].mxu0 %v2900
      %v3033 = vpop.f32.mrb[0].mxu0
      %v3034 = vadd.f32 %v2931, %v3033
      %v3035 = vpop.f32.mrb[0].mxu0
      %v3036 = vpop.f32.mrb[0].mxu0
      %v3037 = vadd.f32 %v2931, %v3036
      %v3038 = vpop.f32.mrb[0].mxu0
      %3039 = vmatprep.mubr.bf16.mxu0 %v2991
      %3040 = vmatmul.mubr.bf16.gmra.mrb[0].mxu0 %v2902
      %v3041 = vpop.f32.mrb[0].mxu0
      %v3042 = vadd.f32 %v2931, %v3041
      %v3043 = vpop.f32.mrb[0].mxu0
      %v3044 = vpop.f32.mrb[0].mxu0
      %v3045 = vadd.f32 %v2931, %v3044
      %v3046 = vpop.f32.mrb[0].mxu0
      %3047 = vmatprep.mubr.bf16.mxu0 %v2994
      %3048 = vmatmul.mubr.bf16.gmra.mrb[0].mxu0 %v2904
      %v3049 = vpop.f32.mrb[0].mxu0
      %v3050 = vadd.f32 %v2931, %v3049
      %v3051 = vpop.f32.mrb[0].mxu0
      %v3052 = vpop.f32.mrb[0].mxu0
      %v3053 = vadd.f32 %v2931, %v3052
      %v3054 = vpop.f32.mrb[0].mxu0
      %3055 = vmatprep.mubr.bf16.mxu0 %v2997
      %3056 = vmatmul.mubr.bf16.gmra.mrb[0].mxu0 %v2906
      %v3057 = vpop.f32.mrb[0].mxu0
      %v3058 = vadd.f32 %v2931, %v3057
      %v3059 = vpop.f32.mrb[0].mxu0
      %v3060 = vpop.f32.mrb[0].mxu0
      %v3061 = vadd.f32 %v2931, %v3060
      %v3062 = vpop.f32.mrb[0].mxu0
      %3063 = vdwg.mxu0
      %v3064 = vand.u32 2147483647, %v3034
      %v3065 = vand.u32 2147483647, %v3037
      %v3066 = vand.u32 2147483647, %v3042
      %v3067 = vand.u32 2147483647, %v3045
      %v3068 = vand.u32 2147483647, %v3050
      %v3069 = vand.u32 2147483647, %v3053
      %v3070 = vand.u32 2147483647, %v3058
      %v3071 = vand.u32 2147483647, %v3061
      %v3072 = vsub.f32 0.0, %v3064
      %v3073 = vsub.f32 0.0, %v3065
      %v3074 = vsub.f32 0.0, %v3066
      %v3075 = vsub.f32 0.0, %v3067
      %v3076 = vsub.f32 0.0, %v3068
      %v3077 = vsub.f32 0.0, %v3069
      %v3078 = vsub.f32 0.0, %v3070
      %v3079 = vsub.f32 0.0, %v3071
      %v3080 = vmul.f32 %v3072, 1.442695
      %v3081 = vpow.pop %v3080
      %v3082 = vmul.f32 %v3073, 1.442695
      %v3083 = vpow.pop %v3082
      %v3084 = vmul.f32 %v3074, 1.442695
      %v3085 = vpow.pop %v3084
      %v3086 = vmul.f32 %v3075, 1.442695
      %v3087 = vpow.pop %v3086
      %v3088 = vmul.f32 %v3076, 1.442695
      %v3089 = vpow.pop %v3088
      %v3090 = vmul.f32 %v3077, 1.442695
      %v3091 = vpow.pop %v3090
      %v3092 = vmul.f32 %v3078, 1.442695
      %v3093 = vpow.pop %v3092
      %v3094 = vmul.f32 %v3079, 1.442695
      %v3095 = vpow.pop %v3094
      %vm3096 = vcmp.ge.f32.partialorder %v3034, 0.0
      %vm3097 = vcmp.ge.f32.partialorder %v3037, 0.0
      %vm3098 = vcmp.ge.f32.partialorder %v3042, 0.0
      %vm3099 = vcmp.ge.f32.partialorder %v3045, 0.0
      %vm3100 = vcmp.ge.f32.partialorder %v3050, 0.0
      %vm3101 = vcmp.ge.f32.partialorder %v3053, 0.0
      %vm3102 = vcmp.ge.f32.partialorder %v3058, 0.0
      %vm3103 = vcmp.ge.f32.partialorder %v3061, 0.0
      %v3104 = vadd.f32 %v3081, 1.0
      %v3105 = vadd.f32 %v3083, 1.0
      %v3106 = vadd.f32 %v3085, 1.0
      %v3107 = vadd.f32 %v3087, 1.0
      %v3108 = vadd.f32 %v3089, 1.0
      %v3109 = vadd.f32 %v3091, 1.0
      %v3110 = vadd.f32 %v3093, 1.0
      %v3111 = vadd.f32 %v3095, 1.0
      %v3112 = vrcp.pop %v3104
      %v3113 = vmul.f32 1.0, %v3112
      %v3114 = vrcp.pop %v3105
      %v3115 = vmul.f32 1.0, %v3114
      %v3116 = vrcp.pop %v3106
      %v3117 = vmul.f32 1.0, %v3116
      %v3118 = vrcp.pop %v3107
      %v3119 = vmul.f32 1.0, %v3118
      %v3120 = vrcp.pop %v3108
      %v3121 = vmul.f32 1.0, %v3120
      %v3122 = vrcp.pop %v3109
      %v3123 = vmul.f32 1.0, %v3122
      %v3124 = vrcp.pop %v3110
      %v3125 = vmul.f32 1.0, %v3124
      %v3126 = vrcp.pop %v3111
      %v3127 = vmul.f32 1.0, %v3126
      %v3128 = vmul.f32 %v3081, %v3112
      %v3129 = vmul.f32 %v3083, %v3114
      %v3130 = vmul.f32 %v3085, %v3116
      %v3131 = vmul.f32 %v3087, %v3118
      %v3132 = vmul.f32 %v3089, %v3120
      %v3133 = vmul.f32 %v3091, %v3122
      %v3134 = vmul.f32 %v3093, %v3124
      %v3135 = vmul.f32 %v3095, %v3126
      %v3136 = vsel %vm3096, %v3113, %v3128
      %v3137 = vsel %vm3097, %v3115, %v3129
      %v3138 = vsel %vm3098, %v3117, %v3130
      %v3139 = vsel %vm3099, %v3119, %v3131
      %v3140 = vsel %vm3100, %v3121, %v3132
      %v3141 = vsel %vm3101, %v3123, %v3133
      %v3142 = vsel %vm3102, %v3125, %v3134
      %v3143 = vsel %vm3103, %v3127, %v3135
      %v3144 = vpack.c.bf16 %v3137, %v3136
      %v3145 = vpack.c.bf16 %v3139, %v3138
      %v3146 = vpack.c.bf16 %v3141, %v3140
      %v3147 = vpack.c.bf16 %v3143, %v3142
      %v3148 = vld [vmem:[%s9] sm:$0xff]
      %v3149 = vld [vmem:[%s9 + $0x8] sm:$0xff]
      %v3150 = vld [vmem:[%s9 + $0x10] sm:$0xff]
      %v3151 = vld [vmem:[%s9 + $0x18] sm:$0xff]
      %v3152 = vld [vmem:[%s9 + $0x20] sm:$0xf]
      %v3153 = vld [vmem:[%s9 + $0x24] sm:$0xff]
      %v3154 = vld [vmem:[%s9 + $0x2c] sm:$0xff]
      %v3155 = vld [vmem:[%s9 + $0x34] sm:$0xff]
      %v3156 = vld [vmem:[%s9 + $0x3c] sm:$0xff]
      %v3157 = vld [vmem:[%s9 + $0x44] sm:$0xf]
      %v3158 = vld [vmem:[%s9 + $0x48] sm:$0xff]
      %v3159 = vld [vmem:[%s9 + $0x50] sm:$0xff]
      %v3160 = vld [vmem:[%s9 + $0x58] sm:$0xff]
      %v3161 = vld [vmem:[%s9 + $0x60] sm:$0xff]
      %v3162 = vld [vmem:[%s9 + $0x68] sm:$0xf]
      %v3163 = vld [vmem:[%s9 + $0x6c] sm:$0xff]
      %v3164 = vld [vmem:[%s9 + $0x74] sm:$0xff]
      %v3165 = vld [vmem:[%s9 + $0x7c] sm:$0xff]
      %v3166 = vld [vmem:[%s9 + $0x84] sm:$0xff]
      %v3167 = vld [vmem:[%s9 + $0x8c] sm:$0xf]
      %v3168 = vld [vmem:[%s9 + $0x90] sm:$0xff]
      %v3169 = vld [vmem:[%s9 + $0x98] sm:$0xff]
      %v3170 = vld [vmem:[%s9 + $0xa0] sm:$0xff]
      %v3171 = vld [vmem:[%s9 + $0xa8] sm:$0xff]
      %v3172 = vld [vmem:[%s9 + $0xb0] sm:$0xf]
      %v3173 = vld [vmem:[%s9 + $0xb4] sm:$0xff]
      %v3174 = vld [vmem:[%s9 + $0xbc] sm:$0xff]
      %v3175 = vld [vmem:[%s9 + $0xc4] sm:$0xff]
      %v3176 = vld [vmem:[%s9 + $0xcc] sm:$0xff]
      %v3177 = vld [vmem:[%s9 + $0xd4] sm:$0xf]
      %v3178 = vld [vmem:[%s9 + $0xd8] sm:$0xff]
      %v3179 = vld [vmem:[%s9 + $0xe0] sm:$0xff]
      %v3180 = vld [vmem:[%s9 + $0xe8] sm:$0xff]
      %v3181 = vld [vmem:[%s9 + $0xf0] sm:$0xff]
      %v3182 = vld [vmem:[%s9 + $0xf8] sm:$0xf]
      %v3183 = vld [vmem:[%s9 + $0xfc] sm:$0xff]
      %v3184 = vld [vmem:[%s9 + $0x104] sm:$0xff]
      %v3185 = vld [vmem:[%s9 + $0x10c] sm:$0xff]
      %v3186 = vld [vmem:[%s9 + $0x114] sm:$0xff]
      %v3187 = vld [vmem:[%s9 + $0x11c] sm:$0xf]
      %v3228 = vunpack.c.l.b16 %v3148
      %v3229 = vunpack.c.h.b16 %v3148
      %v3230 = vunpack.c.l.b16 %v3149
      %v3231 = vunpack.c.h.b16 %v3149
      %v3232 = vunpack.c.l.b16 %v3150
      %v3233 = vunpack.c.h.b16 %v3150
      %v3234 = vunpack.c.l.b16 %v3151
      %v3235 = vunpack.c.h.b16 %v3151
      %v3236 = vunpack.c.l.b16 %v3152
      %v3237 = vunpack.c.l.b16 %v3153
      %v3238 = vunpack.c.h.b16 %v3153
      %v3239 = vunpack.c.l.b16 %v3154
      %v3240 = vunpack.c.h.b16 %v3154
      %v3241 = vunpack.c.l.b16 %v3155
      %v3242 = vunpack.c.h.b16 %v3155
      %v3243 = vunpack.c.l.b16 %v3156
      %v3244 = vunpack.c.h.b16 %v3156
      %v3245 = vunpack.c.l.b16 %v3157
      %v3246 = vunpack.c.l.b16 %v3158
      %v3247 = vunpack.c.h.b16 %v3158
      %v3248 = vunpack.c.l.b16 %v3159
      %v3249 = vunpack.c.h.b16 %v3159
      %v3250 = vunpack.c.l.b16 %v3160
      %v3251 = vunpack.c.h.b16 %v3160
      %v3252 = vunpack.c.l.b16 %v3161
      %v3253 = vunpack.c.h.b16 %v3161
      %v3254 = vunpack.c.l.b16 %v3162
      %v3255 = vunpack.c.l.b16 %v3163
      %v3256 = vunpack.c.h.b16 %v3163
      %v3257 = vunpack.c.l.b16 %v3164
      %v3258 = vunpack.c.h.b16 %v3164
      %v3259 = vunpack.c.l.b16 %v3165
      %v3260 = vunpack.c.h.b16 %v3165
      %v3261 = vunpack.c.l.b16 %v3166
      %v3262 = vunpack.c.h.b16 %v3166
      %v3263 = vunpack.c.l.b16 %v3167
      %v3264 = vunpack.c.l.b16 %v3168
      %v3265 = vunpack.c.h.b16 %v3168
      %v3266 = vunpack.c.l.b16 %v3169
      %v3267 = vunpack.c.h.b16 %v3169
      %v3268 = vunpack.c.l.b16 %v3170
      %v3269 = vunpack.c.h.b16 %v3170
      %v3270 = vunpack.c.l.b16 %v3171
      %v3271 = vunpack.c.h.b16 %v3171
      %v3272 = vunpack.c.l.b16 %v3172
      %v3273 = vunpack.c.l.b16 %v3173
      %v3274 = vunpack.c.h.b16 %v3173
      %v3275 = vunpack.c.l.b16 %v3174
      %v3276 = vunpack.c.h.b16 %v3174
      %v3277 = vunpack.c.l.b16 %v3175
      %v3278 = vunpack.c.h.b16 %v3175
      %v3279 = vunpack.c.l.b16 %v3176
      %v3280 = vunpack.c.h.b16 %v3176
      %v3281 = vunpack.c.l.b16 %v3177
      %v3282 = vunpack.c.l.b16 %v3178
      %v3283 = vunpack.c.h.b16 %v3178
      %v3284 = vunpack.c.l.b16 %v3179
      %v3285 = vunpack.c.h.b16 %v3179
      %v3286 = vunpack.c.l.b16 %v3180
      %v3287 = vunpack.c.h.b16 %v3180
      %v3288 = vunpack.c.l.b16 %v3181
      %v3289 = vunpack.c.h.b16 %v3181
      %v3290 = vunpack.c.l.b16 %v3182
      %v3291 = vunpack.c.l.b16 %v3183
      %v3292 = vunpack.c.h.b16 %v3183
      %v3293 = vunpack.c.l.b16 %v3184
      %v3294 = vunpack.c.h.b16 %v3184
      %v3295 = vunpack.c.l.b16 %v3185
      %v3296 = vunpack.c.h.b16 %v3185
      %v3297 = vunpack.c.l.b16 %v3186
      %v3298 = vunpack.c.h.b16 %v3186
      %v3299 = vunpack.c.l.b16 %v3187
      %v3300 = vpack.c.b16 %v3237, %v3228
      %v3301 = vpack.c.b16 %v3238, %v3229
      %v3302 = vpack.c.b16 %v3239, %v3230
      %v3303 = vpack.c.b16 %v3240, %v3231
      %v3304 = vpack.c.b16 %v3241, %v3232
      %v3305 = vpack.c.b16 %v3242, %v3233
      %v3306 = vpack.c.b16 %v3243, %v3234
      %v3307 = vpack.c.b16 %v3244, %v3235
      %v3308 = vpack.c.b16 %v3245, %v3236
      %v3309 = vpack.c.b16 %v3255, %v3246
      %v3310 = vpack.c.b16 %v3256, %v3247
      %v3311 = vpack.c.b16 %v3257, %v3248
      %v3312 = vpack.c.b16 %v3258, %v3249
      %v3313 = vpack.c.b16 %v3259, %v3250
      %v3314 = vpack.c.b16 %v3260, %v3251
      %v3315 = vpack.c.b16 %v3261, %v3252
      %v3316 = vpack.c.b16 %v3262, %v3253
      %v3317 = vpack.c.b16 %v3263, %v3254
      %v3318 = vpack.c.b16 %v3273, %v3264
      %v3319 = vpack.c.b16 %v3274, %v3265
      %v3320 = vpack.c.b16 %v3275, %v3266
      %v3321 = vpack.c.b16 %v3276, %v3267
      %v3322 = vpack.c.b16 %v3277, %v3268
      %v3323 = vpack.c.b16 %v3278, %v3269
      %v3324 = vpack.c.b16 %v3279, %v3270
      %v3325 = vpack.c.b16 %v3280, %v3271
      %v3326 = vpack.c.b16 %v3281, %v3272
      %v3327 = vpack.c.b16 %v3291, %v3282
      %v3328 = vpack.c.b16 %v3292, %v3283
      %v3329 = vpack.c.b16 %v3293, %v3284
      %v3330 = vpack.c.b16 %v3294, %v3285
      %v3331 = vpack.c.b16 %v3295, %v3286
      %v3332 = vpack.c.b16 %v3296, %v3287
      %v3333 = vpack.c.b16 %v3297, %v3288
      %v3334 = vpack.c.b16 %v3298, %v3289
      %v3335 = vpack.c.b16 %v3299, %v3290
      %vm3372 = vcmask 523264
      %v3374 = vsel %vm3372, %v3144, 0
      %v3377 = vsel %vm3372, %v3145, 0
      %v3380 = vsel %vm3372, %v3146, 0
      %v3383 = vsel %vm3372, %v3147, 0
      %3385 = vmatprep.subr.bf16.mxu0 %v3301
      %3386 = vmatpush1.bf16.msra.mxu0 %v3300
      %3387 = vmatprep.subr.bf16.mxu0 %v3310
      %3388 = vmatpush1.bf16.msra.mxu0 %v3309
      %3389 = vmatprep.subr.bf16.mxu0 %v3319
      %3390 = vmatpush1.bf16.msra.mxu0 %v3318
      %3391 = vmatprep.subr.bf16.mxu0 %v3328
      %3392 = vmatpush1.bf16.msra.mxu0 %v3327
      %3393 = vmatprep.subr.bf16.mxu0 0
      %3394 = vmatpush1.bf16.msra.mxu0 0
      %3395 = vmatprep.subr.bf16.mxu0 0
      %3396 = vmatpush1.bf16.msra.mxu0 0
      %3397 = vmatprep.subr.bf16.mxu0 0
      %3398 = vmatpush1.bf16.msra.mxu0 0
      %3399 = vmatprep.subr.bf16.mxu0 0
      %3400 = vmatpush1.bf16.msra.mxu0 0
      %3401 = vmatprep.subr.bf16.mxu0 0
      %3402 = vmatpush1.bf16.msra.mxu0 0
      %3403 = vmatprep.subr.bf16.mxu0 0
      %3404 = vmatpush1.bf16.msra.mxu0 0
      %3405 = vmatprep.subr.bf16.mxu0 0
      %3406 = vmatpush1.bf16.msra.mxu0 0
      %3407 = vmatprep.subr.bf16.mxu0 0
      %3408 = vmatpush1.bf16.msra.mxu0 0
      %3409 = vmatprep.subr.bf16.mxu0 0
      %3410 = vmatpush1.bf16.msra.mxu0 0
      %3411 = vmatprep.subr.bf16.mxu0 0
      %3412 = vmatpush1.bf16.msra.mxu0 0
      %3413 = vmatprep.subr.bf16.mxu0 0
      %3414 = vmatpush1.bf16.msra.mxu0 0
      %3415 = vmatprep.subr.bf16.mxu0 0
      %3416 = vmatpush1.bf16.msra.mxu0 0
      %3417 = vmatprep.mubr.bf16.mxu0 0
      %3418 = vmatmul.mubr.bf16.gmra.mrb[0].mxu0 %v3374
      %v3419 = vpop.f32.mrb[0].mxu0
      %v3420 = vadd.f32 0.0, %v3419
      %v3421 = vpop.f32.mrb[0].mxu0
      %v3422 = vadd.f32 0.0, %v3421
      %v3423 = vpop.f32.mrb[0].mxu0
      %v3424 = vadd.f32 0.0, %v3423
      %v3425 = vpop.f32.mrb[0].mxu0
      %v3426 = vadd.f32 0.0, %v3425
      %3427 = vmatprep.mubr.bf16.mxu0 0
      %3428 = vmatmul.mubr.bf16.gmra.mrb[0].mxu0 %v3377
      %v3429 = vpop.f32.mrb[0].mxu0
      %v3430 = vadd.f32 0.0, %v3429
      %v3431 = vpop.f32.mrb[0].mxu0
      %v3432 = vadd.f32 0.0, %v3431
      %v3433 = vpop.f32.mrb[0].mxu0
      %v3434 = vadd.f32 0.0, %v3433
      %v3435 = vpop.f32.mrb[0].mxu0
      %v3436 = vadd.f32 0.0, %v3435
      %3437 = vmatprep.mubr.bf16.mxu0 0
      %3438 = vmatmul.mubr.bf16.gmra.mrb[0].mxu0 %v3380
      %v3439 = vpop.f32.mrb[0].mxu0
      %v3440 = vadd.f32 0.0, %v3439
      %v3441 = vpop.f32.mrb[0].mxu0
      %v3442 = vadd.f32 0.0, %v3441
      %v3443 = vpop.f32.mrb[0].mxu0
      %v3444 = vadd.f32 0.0, %v3443
      %v3445 = vpop.f32.mrb[0].mxu0
      %v3446 = vadd.f32 0.0, %v3445
      %3447 = vmatprep.mubr.bf16.mxu0 0
      %3448 = vmatmul.mubr.bf16.gmra.mrb[0].mxu0 %v3383
      %v3449 = vpop.f32.mrb[0].mxu0
      %v3450 = vadd.f32 0.0, %v3449
      %v3451 = vpop.f32.mrb[0].mxu0
      %v3452 = vadd.f32 0.0, %v3451
      %v3453 = vpop.f32.mrb[0].mxu0
      %v3454 = vadd.f32 0.0, %v3453
      %v3455 = vpop.f32.mrb[0].mxu0
      %v3456 = vadd.f32 0.0, %v3455
      %3457 = vdwg.mxu0
      %3458 = vmatprep.subr.bf16.mxu0 %v3303
      %3459 = vmatpush1.bf16.msra.mxu0 %v3302
      %3460 = vmatprep.subr.bf16.mxu0 %v3312
      %3461 = vmatpush1.bf16.msra.mxu0 %v3311
      %3462 = vmatprep.subr.bf16.mxu0 %v3321
      %3463 = vmatpush1.bf16.msra.mxu0 %v3320
      %3464 = vmatprep.subr.bf16.mxu0 %v3330
      %3465 = vmatpush1.bf16.msra.mxu0 %v3329
      %3466 = vmatprep.subr.bf16.mxu0 0
      %3467 = vmatpush1.bf16.msra.mxu0 0
      %3468 = vmatprep.subr.bf16.mxu0 0
      %3469 = vmatpush1.bf16.msra.mxu0 0
      %3470 = vmatprep.subr.bf16.mxu0 0
      %3471 = vmatpush1.bf16.msra.mxu0 0
      %3472 = vmatprep.subr.bf16.mxu0 0
      %3473 = vmatpush1.bf16.msra.mxu0 0
      %3474 = vmatprep.subr.bf16.mxu0 0
      %3475 = vmatpush1.bf16.msra.mxu0 0
      %3476 = vmatprep.subr.bf16.mxu0 0
      %3477 = vmatpush1.bf16.msra.mxu0 0
      %3478 = vmatprep.subr.bf16.mxu0 0
      %3479 = vmatpush1.bf16.msra.mxu0 0
      %3480 = vmatprep.subr.bf16.mxu0 0
      %3481 = vmatpush1.bf16.msra.mxu0 0
      %3482 = vmatprep.subr.bf16.mxu0 0
      %3483 = vmatpush1.bf16.msra.mxu0 0
      %3484 = vmatprep.subr.bf16.mxu0 0
      %3485 = vmatpush1.bf16.msra.mxu0 0
      %3486 = vmatprep.subr.bf16.mxu0 0
      %3487 = vmatpush1.bf16.msra.mxu0 0
      %3488 = vmatprep.subr.bf16.mxu0 0
      %3489 = vmatpush1.bf16.msra.mxu0 0
      %3490 = vmatprep.mubr.bf16.mxu0 0
      %3491 = vmatmul.mubr.bf16.gmra.mrb[0].mxu0 %v3374
      %v3492 = vpop.f32.mrb[0].mxu0
      %v3493 = vadd.f32 0.0, %v3492
      %v3494 = vpop.f32.mrb[0].mxu0
      %v3495 = vadd.f32 0.0, %v3494
      %v3496 = vpop.f32.mrb[0].mxu0
      %v3497 = vadd.f32 0.0, %v3496
      %v3498 = vpop.f32.mrb[0].mxu0
      %v3499 = vadd.f32 0.0, %v3498
      %3500 = vmatprep.mubr.bf16.mxu0 0
      %3501 = vmatmul.mubr.bf16.gmra.mrb[0].mxu0 %v3377
      %v3502 = vpop.f32.mrb[0].mxu0
      %v3503 = vadd.f32 0.0, %v3502
      %v3504 = vpop.f32.mrb[0].mxu0
      %v3505 = vadd.f32 0.0, %v3504
      %v3506 = vpop.f32.mrb[0].mxu0
      %v3507 = vadd.f32 0.0, %v3506
      %v3508 = vpop.f32.mrb[0].mxu0
      %v3509 = vadd.f32 0.0, %v3508
      %3510 = vmatprep.mubr.bf16.mxu0 0
      %3511 = vmatmul.mubr.bf16.gmra.mrb[0].mxu0 %v3380
      %v3512 = vpop.f32.mrb[0].mxu0
      %v3513 = vadd.f32 0.0, %v3512
      %v3514 = vpop.f32.mrb[0].mxu0
      %v3515 = vadd.f32 0.0, %v3514
      %v3516 = vpop.f32.mrb[0].mxu0
      %v3517 = vadd.f32 0.0, %v3516
      %v3518 = vpop.f32.mrb[0].mxu0
      %v3519 = vadd.f32 0.0, %v3518
      %3520 = vmatprep.mubr.bf16.mxu0 0
      %3521 = vmatmul.mubr.bf16.gmra.mrb[0].mxu0 %v3383
      %v3522 = vpop.f32.mrb[0].mxu0
      %v3523 = vadd.f32 0.0, %v3522
      %v3524 = vpop.f32.mrb[0].mxu0
      %v3525 = vadd.f32 0.0, %v3524
      %v3526 = vpop.f32.mrb[0].mxu0
      %v3527 = vadd.f32 0.0, %v3526
      %v3528 = vpop.f32.mrb[0].mxu0
      %v3529 = vadd.f32 0.0, %v3528
      %3530 = vdwg.mxu0
      %3531 = vmatprep.subr.bf16.mxu0 %v3305
      %3532 = vmatpush1.bf16.msra.mxu0 %v3304
      %3533 = vmatprep.subr.bf16.mxu0 %v3314
      %3534 = vmatpush1.bf16.msra.mxu0 %v3313
      %3535 = vmatprep.subr.bf16.mxu0 %v3323
      %3536 = vmatpush1.bf16.msra.mxu0 %v3322
      %3537 = vmatprep.subr.bf16.mxu0 %v3332
      %3538 = vmatpush1.bf16.msra.mxu0 %v3331
      %3539 = vmatprep.subr.bf16.mxu0 0
      %3540 = vmatpush1.bf16.msra.mxu0 0
      %3541 = vmatprep.subr.bf16.mxu0 0
      %3542 = vmatpush1.bf16.msra.mxu0 0
      %3543 = vmatprep.subr.bf16.mxu0 0
      %3544 = vmatpush1.bf16.msra.mxu0 0
      %3545 = vmatprep.subr.bf16.mxu0 0
      %3546 = vmatpush1.bf16.msra.mxu0 0
      %3547 = vmatprep.subr.bf16.mxu0 0
      %3548 = vmatpush1.bf16.msra.mxu0 0
      %3549 = vmatprep.subr.bf16.mxu0 0
      %3550 = vmatpush1.bf16.msra.mxu0 0
      %3551 = vmatprep.subr.bf16.mxu0 0
      %3552 = vmatpush1.bf16.msra.mxu0 0
      %3553 = vmatprep.subr.bf16.mxu0 0
      %3554 = vmatpush1.bf16.msra.mxu0 0
      %3555 = vmatprep.subr.bf16.mxu0 0
      %3556 = vmatpush1.bf16.msra.mxu0 0
      %3557 = vmatprep.subr.bf16.mxu0 0
      %3558 = vmatpush1.bf16.msra.mxu0 0
      %3559 = vmatprep.subr.bf16.mxu0 0
      %3560 = vmatpush1.bf16.msra.mxu0 0
      %3561 = vmatprep.subr.bf16.mxu0 0
      %3562 = vmatpush1.bf16.msra.mxu0 0
      %3563 = vmatprep.mubr.bf16.mxu0 0
      %3564 = vmatmul.mubr.bf16.gmra.mrb[0].mxu0 %v3374
      %v3565 = vpop.f32.mrb[0].mxu0
      %v3566 = vadd.f32 0.0, %v3565
      %v3567 = vpop.f32.mrb[0].mxu0
      %v3568 = vadd.f32 0.0, %v3567
      %v3569 = vpop.f32.mrb[0].mxu0
      %v3570 = vadd.f32 0.0, %v3569
      %v3571 = vpop.f32.mrb[0].mxu0
      %v3572 = vadd.f32 0.0, %v3571
      %3573 = vmatprep.mubr.bf16.mxu0 0
      %3574 = vmatmul.mubr.bf16.gmra.mrb[0].mxu0 %v3377
      %v3575 = vpop.f32.mrb[0].mxu0
      %v3576 = vadd.f32 0.0, %v3575
      %v3577 = vpop.f32.mrb[0].mxu0
      %v3578 = vadd.f32 0.0, %v3577
      %v3579 = vpop.f32.mrb[0].mxu0
      %v3580 = vadd.f32 0.0, %v3579
      %v3581 = vpop.f32.mrb[0].mxu0
      %v3582 = vadd.f32 0.0, %v3581
      %3583 = vmatprep.mubr.bf16.mxu0 0
      %3584 = vmatmul.mubr.bf16.gmra.mrb[0].mxu0 %v3380
      %v3585 = vpop.f32.mrb[0].mxu0
      %v3586 = vadd.f32 0.0, %v3585
      %v3587 = vpop.f32.mrb[0].mxu0
      %v3588 = vadd.f32 0.0, %v3587
      %v3589 = vpop.f32.mrb[0].mxu0
      %v3590 = vadd.f32 0.0, %v3589
      %v3591 = vpop.f32.mrb[0].mxu0
      %v3592 = vadd.f32 0.0, %v3591
      %3593 = vmatprep.mubr.bf16.mxu0 0
      %3594 = vmatmul.mubr.bf16.gmra.mrb[0].mxu0 %v3383
      %v3595 = vpop.f32.mrb[0].mxu0
      %v3596 = vadd.f32 0.0, %v3595
      %v3597 = vpop.f32.mrb[0].mxu0
      %v3598 = vadd.f32 0.0, %v3597
      %v3599 = vpop.f32.mrb[0].mxu0
      %v3600 = vadd.f32 0.0, %v3599
      %v3601 = vpop.f32.mrb[0].mxu0
      %v3602 = vadd.f32 0.0, %v3601
      %3603 = vdwg.mxu0
      %3604 = vmatprep.subr.bf16.mxu0 %v3307
      %3605 = vmatpush1.bf16.msra.mxu0 %v3306
      %3606 = vmatprep.subr.bf16.mxu0 %v3316
      %3607 = vmatpush1.bf16.msra.mxu0 %v3315
      %3608 = vmatprep.subr.bf16.mxu0 %v3325
      %3609 = vmatpush1.bf16.msra.mxu0 %v3324
      %3610 = vmatprep.subr.bf16.mxu0 %v3334
      %3611 = vmatpush1.bf16.msra.mxu0 %v3333
      %3612 = vmatprep.subr.bf16.mxu0 0
      %3613 = vmatpush1.bf16.msra.mxu0 0
      %3614 = vmatprep.subr.bf16.mxu0 0
      %3615 = vmatpush1.bf16.msra.mxu0 0
      %3616 = vmatprep.subr.bf16.mxu0 0
      %3617 = vmatpush1.bf16.msra.mxu0 0
      %3618 = vmatprep.subr.bf16.mxu0 0
      %3619 = vmatpush1.bf16.msra.mxu0 0
      %3620 = vmatprep.subr.bf16.mxu0 0
      %3621 = vmatpush1.bf16.msra.mxu0 0
      %3622 = vmatprep.subr.bf16.mxu0 0
      %3623 = vmatpush1.bf16.msra.mxu0 0
      %3624 = vmatprep.subr.bf16.mxu0 0
      %3625 = vmatpush1.bf16.msra.mxu0 0
      %3626 = vmatprep.subr.bf16.mxu0 0
      %3627 = vmatpush1.bf16.msra.mxu0 0
      %3628 = vmatprep.subr.bf16.mxu0 0
      %3629 = vmatpush1.bf16.msra.mxu0 0
      %3630 = vmatprep.subr.bf16.mxu0 0
      %3631 = vmatpush1.bf16.msra.mxu0 0
      %3632 = vmatprep.subr.bf16.mxu0 0
      %3633 = vmatpush1.bf16.msra.mxu0 0
      %3634 = vmatprep.subr.bf16.mxu0 0
      %3635 = vmatpush1.bf16.msra.mxu0 0
      %3636 = vmatprep.mubr.bf16.mxu0 0
      %3637 = vmatmul.mubr.bf16.gmra.mrb[0].mxu0 %v3374
      %v3638 = vpop.f32.mrb[0].mxu0
      %v3639 = vadd.f32 0.0, %v3638
      %v3640 = vpop.f32.mrb[0].mxu0
      %v3641 = vadd.f32 0.0, %v3640
      %v3642 = vpop.f32.mrb[0].mxu0
      %v3643 = vadd.f32 0.0, %v3642
      %v3644 = vpop.f32.mrb[0].mxu0
      %v3645 = vadd.f32 0.0, %v3644
      %3646 = vmatprep.mubr.bf16.mxu0 0
      %3647 = vmatmul.mubr.bf16.gmra.mrb[0].mxu0 %v3377
      %v3648 = vpop.f32.mrb[0].mxu0
      %v3649 = vadd.f32 0.0, %v3648
      %v3650 = vpop.f32.mrb[0].mxu0
      %v3651 = vadd.f32 0.0, %v3650
      %v3652 = vpop.f32.mrb[0].mxu0
      %v3653 = vadd.f32 0.0, %v3652
      %v3654 = vpop.f32.mrb[0].mxu0
      %v3655 = vadd.f32 0.0, %v3654
      %3656 = vmatprep.mubr.bf16.mxu0 0
      %3657 = vmatmul.mubr.bf16.gmra.mrb[0].mxu0 %v3380
      %v3658 = vpop.f32.mrb[0].mxu0
      %v3659 = vadd.f32 0.0, %v3658
      %v3660 = vpop.f32.mrb[0].mxu0
      %v3661 = vadd.f32 0.0, %v3660
      %v3662 = vpop.f32.mrb[0].mxu0
      %v3663 = vadd.f32 0.0, %v3662
      %v3664 = vpop.f32.mrb[0].mxu0
      %v3665 = vadd.f32 0.0, %v3664
      %3666 = vmatprep.mubr.bf16.mxu0 0
      %3667 = vmatmul.mubr.bf16.gmra.mrb[0].mxu0 %v3383
      %v3668 = vpop.f32.mrb[0].mxu0
      %v3669 = vadd.f32 0.0, %v3668
      %v3670 = vpop.f32.mrb[0].mxu0
      %v3671 = vadd.f32 0.0, %v3670
      %v3672 = vpop.f32.mrb[0].mxu0
      %v3673 = vadd.f32 0.0, %v3672
      %v3674 = vpop.f32.mrb[0].mxu0
      %v3675 = vadd.f32 0.0, %v3674
      %3676 = vdwg.mxu0
      %3677 = vmatprep.subr.bf16.mxu0 0
      %3678 = vmatpush1.bf16.msra.mxu0 %v3308
      %3679 = vmatprep.subr.bf16.mxu0 0
      %3680 = vmatpush1.bf16.msra.mxu0 %v3317
      %3681 = vmatprep.subr.bf16.mxu0 0
      %3682 = vmatpush1.bf16.msra.mxu0 %v3326
      %3683 = vmatprep.subr.bf16.mxu0 0
      %3684 = vmatpush1.bf16.msra.mxu0 %v3335
      %3685 = vmatprep.subr.bf16.mxu0 0
      %3686 = vmatpush1.bf16.msra.mxu0 0
      %3687 = vmatprep.subr.bf16.mxu0 0
      %3688 = vmatpush1.bf16.msra.mxu0 0
      %3689 = vmatprep.subr.bf16.mxu0 0
      %3690 = vmatpush1.bf16.msra.mxu0 0
      %3691 = vmatprep.subr.bf16.mxu0 0
      %3692 = vmatpush1.bf16.msra.mxu0 0
      %3693 = vmatprep.subr.bf16.mxu0 0
      %3694 = vmatpush1.bf16.msra.mxu0 0
      %3695 = vmatprep.subr.bf16.mxu0 0
      %3696 = vmatpush1.bf16.msra.mxu0 0
      %3697 = vmatprep.subr.bf16.mxu0 0
      %3698 = vmatpush1.bf16.msra.mxu0 0
      %3699 = vmatprep.subr.bf16.mxu0 0
      %3700 = vmatpush1.bf16.msra.mxu0 0
      %3701 = vmatprep.subr.bf16.mxu0 0
      %3702 = vmatpush1.bf16.msra.mxu0 0
      %3703 = vmatprep.subr.bf16.mxu0 0
      %3704 = vmatpush1.bf16.msra.mxu0 0
      %3705 = vmatprep.subr.bf16.mxu0 0
      %3706 = vmatpush1.bf16.msra.mxu0 0
      %3707 = vmatprep.subr.bf16.mxu0 0
      %3708 = vmatpush1.bf16.msra.mxu0 0
      %3709 = vmatprep.mubr.bf16.mxu0 0
      %3710 = vmatmul.mubr.bf16.gmra.mrb[0].mxu0 %v3374
      %v3711 = vpop.f32.mrb[0].mxu0
      %v3712 = vadd.f32 0.0, %v3711
      %v3713 = vpop.f32.mrb[0].mxu0
      %v3714 = vpop.f32.mrb[0].mxu0
      %v3715 = vadd.f32 0.0, %v3714
      %v3716 = vpop.f32.mrb[0].mxu0
      %3717 = vmatprep.mubr.bf16.mxu0 0
      %3718 = vmatmul.mubr.bf16.gmra.mrb[0].mxu0 %v3377
      %v3719 = vpop.f32.mrb[0].mxu0
      %v3720 = vadd.f32 0.0, %v3719
      %v3721 = vpop.f32.mrb[0].mxu0
      %v3722 = vpop.f32.mrb[0].mxu0
      %v3723 = vadd.f32 0.0, %v3722
      %v3724 = vpop.f32.mrb[0].mxu0
      %3725 = vmatprep.mubr.bf16.mxu0 0
      %3726 = vmatmul.mubr.bf16.gmra.mrb[0].mxu0 %v3380
      %v3727 = vpop.f32.mrb[0].mxu0
      %v3728 = vadd.f32 0.0, %v3727
      %v3729 = vpop.f32.mrb[0].mxu0
      %v3730 = vpop.f32.mrb[0].mxu0
      %v3731 = vadd.f32 0.0, %v3730
      %v3732 = vpop.f32.mrb[0].mxu0
      %3733 = vmatprep.mubr.bf16.mxu0 0
      %3734 = vmatmul.mubr.bf16.gmra.mrb[0].mxu0 %v3383
      %v3735 = vpop.f32.mrb[0].mxu0
      %v3736 = vadd.f32 0.0, %v3735
      %v3737 = vpop.f32.mrb[0].mxu0
      %v3738 = vpop.f32.mrb[0].mxu0
      %v3739 = vadd.f32 0.0, %v3738
      %v3740 = vpop.f32.mrb[0].mxu0
      %3741 = vdwg.mxu0
      %v3742 = vpack.c.bf16 %v3424, %v3420
      %v3743 = vpack.c.bf16 %v3434, %v3430
      %v3744 = vpack.c.bf16 %v3444, %v3440
      %v3745 = vpack.c.bf16 %v3454, %v3450
      %3746 = vst [vmem:[#allocation3] sm:$0xff] %v3742
      %3747 = vst [vmem:[#allocation3 + $0x8] sm:$0xff] %v3743
      %3748 = vst [vmem:[#allocation3 + $0x10] sm:$0xff] %v3744
      %3749 = vst [vmem:[#allocation3 + $0x18] sm:$0xff] %v3745
      %v3750 = vpack.c.bf16 %v3426, %v3422
      %v3751 = vpack.c.bf16 %v3436, %v3432
      %v3752 = vpack.c.bf16 %v3446, %v3442
      %v3753 = vpack.c.bf16 %v3456, %v3452
      %3754 = vst [vmem:[#allocation3 + $0x20] sm:$0xff] %v3750
      %3755 = vst [vmem:[#allocation3 + $0x28] sm:$0xff] %v3751
      %3756 = vst [vmem:[#allocation3 + $0x30] sm:$0xff] %v3752
      %3757 = vst [vmem:[#allocation3 + $0x38] sm:$0xff] %v3753
      %v3758 = vpack.c.bf16 %v3497, %v3493
      %v3759 = vpack.c.bf16 %v3507, %v3503
      %v3760 = vpack.c.bf16 %v3517, %v3513
      %v3761 = vpack.c.bf16 %v3527, %v3523
      %3762 = vst [vmem:[#allocation3 + $0x40] sm:$0xff] %v3758
      %3763 = vst [vmem:[#allocation3 + $0x48] sm:$0xff] %v3759
      %3764 = vst [vmem:[#allocation3 + $0x50] sm:$0xff] %v3760
      %3765 = vst [vmem:[#allocation3 + $0x58] sm:$0xff] %v3761
      %v3766 = vpack.c.bf16 %v3499, %v3495
      %v3767 = vpack.c.bf16 %v3509, %v3505
      %v3768 = vpack.c.bf16 %v3519, %v3515
      %v3769 = vpack.c.bf16 %v3529, %v3525
      %3770 = vst [vmem:[#allocation3 + $0x60] sm:$0xff] %v3766
      %3771 = vst [vmem:[#allocation3 + $0x68] sm:$0xff] %v3767
      %3772 = vst [vmem:[#allocation3 + $0x70] sm:$0xff] %v3768
      %3773 = vst [vmem:[#allocation3 + $0x78] sm:$0xff] %v3769
      %v3774 = vpack.c.bf16 %v3570, %v3566
      %v3775 = vpack.c.bf16 %v3580, %v3576
      %v3776 = vpack.c.bf16 %v3590, %v3586
      %v3777 = vpack.c.bf16 %v3600, %v3596
      %3778 = vst [vmem:[#allocation3 + $0x80] sm:$0xff] %v3774
      %3779 = vst [vmem:[#allocation3 + $0x88] sm:$0xff] %v3775
      %3780 = vst [vmem:[#allocation3 + $0x90] sm:$0xff] %v3776
      %3781 = vst [vmem:[#allocation3 + $0x98] sm:$0xff] %v3777
      %v3782 = vpack.c.bf16 %v3572, %v3568
      %v3783 = vpack.c.bf16 %v3582, %v3578
      %v3784 = vpack.c.bf16 %v3592, %v3588
      %v3785 = vpack.c.bf16 %v3602, %v3598
      %3786 = vst [vmem:[#allocation3 + $0xa0] sm:$0xff] %v3782
      %3787 = vst [vmem:[#allocation3 + $0xa8] sm:$0xff] %v3783
      %3788 = vst [vmem:[#allocation3 + $0xb0] sm:$0xff] %v3784
      %3789 = vst [vmem:[#allocation3 + $0xb8] sm:$0xff] %v3785
      %v3790 = vpack.c.bf16 %v3643, %v3639
      %v3791 = vpack.c.bf16 %v3653, %v3649
      %v3792 = vpack.c.bf16 %v3663, %v3659
      %v3793 = vpack.c.bf16 %v3673, %v3669
      %3794 = vst [vmem:[#allocation3 + $0xc0] sm:$0xff] %v3790
      %3795 = vst [vmem:[#allocation3 + $0xc8] sm:$0xff] %v3791
      %3796 = vst [vmem:[#allocation3 + $0xd0] sm:$0xff] %v3792
      %3797 = vst [vmem:[#allocation3 + $0xd8] sm:$0xff] %v3793
      %v3798 = vpack.c.bf16 %v3645, %v3641
      %v3799 = vpack.c.bf16 %v3655, %v3651
      %v3800 = vpack.c.bf16 %v3665, %v3661
      %v3801 = vpack.c.bf16 %v3675, %v3671
      %3802 = vst [vmem:[#allocation3 + $0xe0] sm:$0xff] %v3798
      %3803 = vst [vmem:[#allocation3 + $0xe8] sm:$0xff] %v3799
      %3804 = vst [vmem:[#allocation3 + $0xf0] sm:$0xff] %v3800
      %3805 = vst [vmem:[#allocation3 + $0xf8] sm:$0xff] %v3801
      %v3806 = vpack.c.bf16 %v3715, %v3712
      %v3807 = vpack.c.bf16 %v3723, %v3720
      %v3808 = vpack.c.bf16 %v3731, %v3728
      %v3809 = vpack.c.bf16 %v3739, %v3736
      %3810 = vst [vmem:[#allocation3 + $0x100] sm:$0xff] %v3806
      %3811 = vst [vmem:[#allocation3 + $0x108] sm:$0xff] %v3807
      %3812 = vst [vmem:[#allocation3 + $0x110] sm:$0xff] %v3808
      %3813 = vst [vmem:[#allocation3 + $0x118] sm:$0xff] %v3809
      %v3814 = vld [vmem:[%s2] sm:$0xff]
      %v3815 = vld [vmem:[%s2 + $0x8] sm:$0xff]
      %v3816 = vld [vmem:[%s2 + $0x10] sm:$0xf]
      %v3817 = vld [vmem:[%s2 + $0x14] sm:$0xff]
      %v3818 = vld [vmem:[%s2 + $0x1c] sm:$0xff]
      %v3819 = vld [vmem:[%s2 + $0x24] sm:$0xf]
      %v3820 = vld [vmem:[%s2 + $0x28] sm:$0xff]
      %v3821 = vld [vmem:[%s2 + $0x30] sm:$0xff]
      %v3822 = vld [vmem:[%s2 + $0x38] sm:$0xf]
      %v3823 = vld [vmem:[%s2 + $0x3c] sm:$0xff]
      %v3824 = vld [vmem:[%s2 + $0x44] sm:$0xff]
      %v3825 = vld [vmem:[%s2 + $0x4c] sm:$0xf]
      %v3826 = vld [vmem:[%s2 + $0x50] sm:$0xff]
      %v3827 = vld [vmem:[%s2 + $0x58] sm:$0xff]
      %v3828 = vld [vmem:[%s2 + $0x60] sm:$0xf]
      %v3829 = vld [vmem:[%s2 + $0x64] sm:$0xff]
      %v3830 = vld [vmem:[%s2 + $0x6c] sm:$0xff]
      %v3831 = vld [vmem:[%s2 + $0x74] sm:$0xf]
      %v3832 = vld [vmem:[%s2 + $0x78] sm:$0xff]
      %v3833 = vld [vmem:[%s2 + $0x80] sm:$0xff]
      %v3834 = vld [vmem:[%s2 + $0x88] sm:$0xf]
      %v3835 = vld [vmem:[%s2 + $0x8c] sm:$0xff]
      %v3836 = vld [vmem:[%s2 + $0x94] sm:$0xff]
      %v3837 = vld [vmem:[%s2 + $0x9c] sm:$0xf]
      %v3838 = vld [vmem:[%s2 + $0xa0] sm:$0xff]
      %v3839 = vld [vmem:[%s2 + $0xa8] sm:$0xff]
      %v3840 = vld [vmem:[%s2 + $0xb0] sm:$0xf]
      %v3841 = vld [vmem:[%s2 + $0xb4] sm:$0xff]
      %v3842 = vld [vmem:[%s2 + $0xbc] sm:$0xff]
      %v3843 = vld [vmem:[%s2 + $0xc4] sm:$0xf]
      %v3844 = vld [vmem:[%s2 + $0xc8] sm:$0xff]
      %v3845 = vld [vmem:[%s2 + $0xd0] sm:$0xff]
      %v3846 = vld [vmem:[%s2 + $0xd8] sm:$0xf]
      %v3847 = vld [vmem:[%s2 + $0xdc] sm:$0xff]
      %v3848 = vld [vmem:[%s2 + $0xe4] sm:$0xff]
      %v3849 = vld [vmem:[%s2 + $0xec] sm:$0xf]
      %v3850 = vld [vmem:[%s2 + $0xf0] sm:$0xff]
      %v3851 = vld [vmem:[%s2 + $0xf8] sm:$0xff]
      %v3852 = vld [vmem:[%s2 + $0x100] sm:$0xf]
      %v3853 = vld [vmem:[%s2 + $0x104] sm:$0xff]
      %v3854 = vld [vmem:[%s2 + $0x10c] sm:$0xff]
      %v3855 = vld [vmem:[%s2 + $0x114] sm:$0xf]
      %v3856 = vld [vmem:[%s2 + $0x118] sm:$0xff]
      %v3857 = vld [vmem:[%s2 + $0x120] sm:$0xff]
      %v3858 = vld [vmem:[%s2 + $0x128] sm:$0xf]
      %v3859 = vld [vmem:[%s2 + $0x12c] sm:$0xff]
      %v3860 = vld [vmem:[%s2 + $0x134] sm:$0xff]
      %v3861 = vld [vmem:[%s2 + $0x13c] sm:$0xf]
      %v3862 = vld [vmem:[%s2 + $0x140] sm:$0xff]
      %v3863 = vld [vmem:[%s2 + $0x148] sm:$0xff]
      %v3864 = vld [vmem:[%s2 + $0x150] sm:$0xf]
      %v3865 = vld [vmem:[%s2 + $0x154] sm:$0xff]
      %v3866 = vld [vmem:[%s2 + $0x15c] sm:$0xff]
      %v3867 = vld [vmem:[%s2 + $0x164] sm:$0xf]
      %v3868 = vld [vmem:[%s2 + $0x168] sm:$0xff]
      %v3869 = vld [vmem:[%s2 + $0x170] sm:$0xff]
      %v3870 = vld [vmem:[%s2 + $0x178] sm:$0xf]
      %v3871 = vld [vmem:[%s2 + $0x17c] sm:$0xff]
      %v3872 = vld [vmem:[%s2 + $0x184] sm:$0xff]
      %v3873 = vld [vmem:[%s2 + $0x18c] sm:$0xf]
      %v3874 = vld [vmem:[%s2 + $0x190] sm:$0xff]
      %v3875 = vld [vmem:[%s2 + $0x198] sm:$0xff]
      %v3876 = vld [vmem:[%s2 + $0x1a0] sm:$0xf]
      %v3877 = vld [vmem:[%s2 + $0x1a4] sm:$0xff]
      %v3878 = vld [vmem:[%s2 + $0x1ac] sm:$0xff]
      %v3879 = vld [vmem:[%s2 + $0x1b4] sm:$0xf]
      %v3880 = vld [vmem:[%s2 + $0x1b8] sm:$0xff]
      %v3881 = vld [vmem:[%s2 + $0x1c0] sm:$0xff]
      %v3882 = vld [vmem:[%s2 + $0x1c8] sm:$0xf]
      %v3883 = vld [vmem:[%s2 + $0x1cc] sm:$0xff]
      %v3884 = vld [vmem:[%s2 + $0x1d4] sm:$0xff]
      %v3885 = vld [vmem:[%s2 + $0x1dc] sm:$0xf]
      %v3886 = vld [vmem:[%s2 + $0x1e0] sm:$0xff]
      %v3887 = vld [vmem:[%s2 + $0x1e8] sm:$0xff]
      %v3888 = vld [vmem:[%s2 + $0x1f0] sm:$0xf]
      %v3889 = vld [vmem:[%s2 + $0x1f4] sm:$0xff]
      %v3890 = vld [vmem:[%s2 + $0x1fc] sm:$0xff]
      %v3891 = vld [vmem:[%s2 + $0x204] sm:$0xf]
      %v3892 = vld [vmem:[%s2 + $0x208] sm:$0xff]
      %v3893 = vld [vmem:[%s2 + $0x210] sm:$0xff]
      %v3894 = vld [vmem:[%s2 + $0x218] sm:$0xf]
      %v3895 = vld [vmem:[%s2 + $0x21c] sm:$0xff]
      %v3896 = vld [vmem:[%s2 + $0x224] sm:$0xff]
      %v3897 = vld [vmem:[%s2 + $0x22c] sm:$0xf]
      %v3898 = vld [vmem:[%s2 + $0x230] sm:$0xff]
      %v3899 = vld [vmem:[%s2 + $0x238] sm:$0xff]
      %v3900 = vld [vmem:[%s2 + $0x240] sm:$0xf]
      %v3901 = vld [vmem:[#allocation3] sm:$0xff]
      %v3902 = vld [vmem:[#allocation3 + $0x8] sm:$0xff]
      %v3903 = vld [vmem:[#allocation3 + $0x10] sm:$0xff]
      %v3904 = vld [vmem:[#allocation3 + $0x18] sm:$0xff]
      %v3905 = vld [vmem:[#allocation3 + $0x20] sm:$0xff]
      %v3906 = vld [vmem:[#allocation3 + $0x28] sm:$0xff]
      %v3907 = vld [vmem:[#allocation3 + $0x30] sm:$0xff]
      %v3908 = vld [vmem:[#allocation3 + $0x38] sm:$0xff]
      %v3909 = vld [vmem:[#allocation3 + $0x40] sm:$0xff]
      %v3910 = vld [vmem:[#allocation3 + $0x48] sm:$0xff]
      %v3911 = vld [vmem:[#allocation3 + $0x50] sm:$0xff]
      %v3912 = vld [vmem:[#allocation3 + $0x58] sm:$0xff]
      %v3913 = vld [vmem:[#allocation3 + $0x60] sm:$0xff]
      %v3914 = vld [vmem:[#allocation3 + $0x68] sm:$0xff]
      %v3915 = vld [vmem:[#allocation3 + $0x70] sm:$0xff]
      %v3916 = vld [vmem:[#allocation3 + $0x78] sm:$0xff]
      %v3917 = vld [vmem:[#allocation3 + $0x80] sm:$0xff]
      %v3918 = vld [vmem:[#allocation3 + $0x88] sm:$0xff]
      %v3919 = vld [vmem:[#allocation3 + $0x90] sm:$0xff]
      %v3920 = vld [vmem:[#allocation3 + $0x98] sm:$0xff]
      %v3921 = vld [vmem:[#allocation3 + $0xa0] sm:$0xff]
      %v3922 = vld [vmem:[#allocation3 + $0xa8] sm:$0xff]
      %v3923 = vld [vmem:[#allocation3 + $0xb0] sm:$0xff]
      %v3924 = vld [vmem:[#allocation3 + $0xb8] sm:$0xff]
      %v3925 = vld [vmem:[#allocation3 + $0xc0] sm:$0xff]
      %v3926 = vld [vmem:[#allocation3 + $0xc8] sm:$0xff]
      %v3927 = vld [vmem:[#allocation3 + $0xd0] sm:$0xff]
      %v3928 = vld [vmem:[#allocation3 + $0xd8] sm:$0xff]
      %v3929 = vld [vmem:[#allocation3 + $0xe0] sm:$0xff]
      %v3930 = vld [vmem:[#allocation3 + $0xe8] sm:$0xff]
      %v3931 = vld [vmem:[#allocation3 + $0xf0] sm:$0xff]
      %v3932 = vld [vmem:[#allocation3 + $0xf8] sm:$0xff]
      %v3933 = vld [vmem:[#allocation3 + $0x100] sm:$0xff]
      %v3934 = vld [vmem:[#allocation3 + $0x108] sm:$0xff]
      %v3935 = vld [vmem:[#allocation3 + $0x110] sm:$0xff]
      %v3936 = vld [vmem:[#allocation3 + $0x118] sm:$0xff]
      %v3937 = vld [vmem:[%s10] sm:$0x1]
      %v3939 = vlaneseq
      %v3940 = vshrl.u32 %v3939, 7
      %v3941 = vsub.s32 0, %v3940
      %v3942 = vrot.slane %v3937, %v3941
      %v4031 = vunpack.c.l.b16 %v3814
      %v4032 = vunpack.c.h.b16 %v3814
      %v4033 = vunpack.c.l.b16 %v3815
      %v4034 = vunpack.c.h.b16 %v3815
      %v4035 = vunpack.c.l.b16 %v3816
      %v4036 = vunpack.c.l.b16 %v3817
      %v4037 = vunpack.c.h.b16 %v3817
      %v4038 = vunpack.c.l.b16 %v3818
      %v4039 = vunpack.c.h.b16 %v3818
      %v4040 = vunpack.c.l.b16 %v3819
      %v4041 = vunpack.c.l.b16 %v3820
      %v4042 = vunpack.c.h.b16 %v3820
      %v4043 = vunpack.c.l.b16 %v3821
      %v4044 = vunpack.c.h.b16 %v3821
      %v4045 = vunpack.c.l.b16 %v3822
      %v4046 = vunpack.c.l.b16 %v3823
      %v4047 = vunpack.c.h.b16 %v3823
      %v4048 = vunpack.c.l.b16 %v3824
      %v4049 = vunpack.c.h.b16 %v3824
      %v4050 = vunpack.c.l.b16 %v3825
      %v4051 = vunpack.c.l.b16 %v3826
      %v4052 = vunpack.c.h.b16 %v3826
      %v4053 = vunpack.c.l.b16 %v3827
      %v4054 = vunpack.c.h.b16 %v3827
      %v4055 = vunpack.c.l.b16 %v3828
      %v4056 = vunpack.c.l.b16 %v3829
      %v4057 = vunpack.c.h.b16 %v3829
      %v4058 = vunpack.c.l.b16 %v3830
      %v4059 = vunpack.c.h.b16 %v3830
      %v4060 = vunpack.c.l.b16 %v3831
      %v4061 = vunpack.c.l.b16 %v3832
      %v4062 = vunpack.c.h.b16 %v3832
      %v4063 = vunpack.c.l.b16 %v3833
      %v4064 = vunpack.c.h.b16 %v3833
      %v4065 = vunpack.c.l.b16 %v3834
      %v4066 = vunpack.c.l.b16 %v3835
      %v4067 = vunpack.c.h.b16 %v3835
      %v4068 = vunpack.c.l.b16 %v3836
      %v4069 = vunpack.c.h.b16 %v3836
      %v4070 = vunpack.c.l.b16 %v3837
      %v4071 = vunpack.c.l.b16 %v3838
      %v4072 = vunpack.c.h.b16 %v3838
      %v4073 = vunpack.c.l.b16 %v3839
      %v4074 = vunpack.c.h.b16 %v3839
      %v4075 = vunpack.c.l.b16 %v3840
      %v4076 = vunpack.c.l.b16 %v3841
      %v4077 = vunpack.c.h.b16 %v3841
      %v4078 = vunpack.c.l.b16 %v3842
      %v4079 = vunpack.c.h.b16 %v3842
      %v4080 = vunpack.c.l.b16 %v3843
      %v4081 = vunpack.c.l.b16 %v3844
      %v4082 = vunpack.c.h.b16 %v3844
      %v4083 = vunpack.c.l.b16 %v3845
      %v4084 = vunpack.c.h.b16 %v3845
      %v4085 = vunpack.c.l.b16 %v3846
      %v4086 = vunpack.c.l.b16 %v3847
      %v4087 = vunpack.c.h.b16 %v3847
      %v4088 = vunpack.c.l.b16 %v3848
      %v4089 = vunpack.c.h.b16 %v3848
      %v4090 = vunpack.c.l.b16 %v3849
      %v4091 = vunpack.c.l.b16 %v3850
      %v4092 = vunpack.c.h.b16 %v3850
      %v4093 = vunpack.c.l.b16 %v3851
      %v4094 = vunpack.c.h.b16 %v3851
      %v4095 = vunpack.c.l.b16 %v3852
      %v4096 = vunpack.c.l.b16 %v3853
      %v4097 = vunpack.c.h.b16 %v3853
      %v4098 = vunpack.c.l.b16 %v3854
      %v4099 = vunpack.c.h.b16 %v3854
      %v4100 = vunpack.c.l.b16 %v3855
      %v4101 = vunpack.c.l.b16 %v3856
      %v4102 = vunpack.c.h.b16 %v3856
      %v4103 = vunpack.c.l.b16 %v3857
      %v4104 = vunpack.c.h.b16 %v3857
      %v4105 = vunpack.c.l.b16 %v3858
      %v4106 = vunpack.c.l.b16 %v3859
      %v4107 = vunpack.c.h.b16 %v3859
      %v4108 = vunpack.c.l.b16 %v3860
      %v4109 = vunpack.c.h.b16 %v3860
      %v4110 = vunpack.c.l.b16 %v3861
      %v4111 = vunpack.c.l.b16 %v3862
      %v4112 = vunpack.c.h.b16 %v3862
      %v4113 = vunpack.c.l.b16 %v3863
      %v4114 = vunpack.c.h.b16 %v3863
      %v4115 = vunpack.c.l.b16 %v3864
      %v4116 = vunpack.c.l.b16 %v3865
      %v4117 = vunpack.c.h.b16 %v3865
      %v4118 = vunpack.c.l.b16 %v3866
      %v4119 = vunpack.c.h.b16 %v3866
      %v4120 = vunpack.c.l.b16 %v3867
      %v4121 = vunpack.c.l.b16 %v3868
      %v4122 = vunpack.c.h.b16 %v3868
      %v4123 = vunpack.c.l.b16 %v3869
      %v4124 = vunpack.c.h.b16 %v3869
      %v4125 = vunpack.c.l.b16 %v3870
      %v4126 = vunpack.c.l.b16 %v3871
      %v4127 = vunpack.c.h.b16 %v3871
      %v4128 = vunpack.c.l.b16 %v3872
      %v4129 = vunpack.c.h.b16 %v3872
      %v4130 = vunpack.c.l.b16 %v3873
      %v4131 = vunpack.c.l.b16 %v3874
      %v4132 = vunpack.c.h.b16 %v3874
      %v4133 = vunpack.c.l.b16 %v3875
      %v4134 = vunpack.c.h.b16 %v3875
      %v4135 = vunpack.c.l.b16 %v3876
      %v4136 = vunpack.c.l.b16 %v3877
      %v4137 = vunpack.c.h.b16 %v3877
      %v4138 = vunpack.c.l.b16 %v3878
      %v4139 = vunpack.c.h.b16 %v3878
      %v4140 = vunpack.c.l.b16 %v3879
      %v4141 = vunpack.c.l.b16 %v3880
      %v4142 = vunpack.c.h.b16 %v3880
      %v4143 = vunpack.c.l.b16 %v3881
      %v4144 = vunpack.c.h.b16 %v3881
      %v4145 = vunpack.c.l.b16 %v3882
      %v4146 = vunpack.c.l.b16 %v3883
      %v4147 = vunpack.c.h.b16 %v3883
      %v4148 = vunpack.c.l.b16 %v3884
      %v4149 = vunpack.c.h.b16 %v3884
      %v4150 = vunpack.c.l.b16 %v3885
      %v4151 = vunpack.c.l.b16 %v3886
      %v4152 = vunpack.c.h.b16 %v3886
      %v4153 = vunpack.c.l.b16 %v3887
      %v4154 = vunpack.c.h.b16 %v3887
      %v4155 = vunpack.c.l.b16 %v3888
      %v4156 = vunpack.c.l.b16 %v3889
      %v4157 = vunpack.c.h.b16 %v3889
      %v4158 = vunpack.c.l.b16 %v3890
      %v4159 = vunpack.c.h.b16 %v3890
      %v4160 = vunpack.c.l.b16 %v3891
      %v4161 = vunpack.c.l.b16 %v3892
      %v4162 = vunpack.c.h.b16 %v3892
      %v4163 = vunpack.c.l.b16 %v3893
      %v4164 = vunpack.c.h.b16 %v3893
      %v4165 = vunpack.c.l.b16 %v3894
      %v4166 = vunpack.c.l.b16 %v3895
      %v4167 = vunpack.c.h.b16 %v3895
      %v4168 = vunpack.c.l.b16 %v3896
      %v4169 = vunpack.c.h.b16 %v3896
      %v4170 = vunpack.c.l.b16 %v3897
      %v4171 = vunpack.c.l.b16 %v3898
      %v4172 = vunpack.c.h.b16 %v3898
      %v4173 = vunpack.c.l.b16 %v3899
      %v4174 = vunpack.c.h.b16 %v3899
      %v4175 = vunpack.c.l.b16 %v3900
      %v4176 = vpack.c.b16 %v4036, %v4031
      %v4177 = vpack.c.b16 %v4037, %v4032
      %v4178 = vpack.c.b16 %v4038, %v4033
      %v4179 = vpack.c.b16 %v4039, %v4034
      %v4180 = vpack.c.b16 %v4040, %v4035
      %v4181 = vpack.c.b16 %v4046, %v4041
      %v4182 = vpack.c.b16 %v4047, %v4042
      %v4183 = vpack.c.b16 %v4048, %v4043
      %v4184 = vpack.c.b16 %v4049, %v4044
      %v4185 = vpack.c.b16 %v4050, %v4045
      %v4186 = vpack.c.b16 %v4056, %v4051
      %v4187 = vpack.c.b16 %v4057, %v4052
      %v4188 = vpack.c.b16 %v4058, %v4053
      %v4189 = vpack.c.b16 %v4059, %v4054
      %v4190 = vpack.c.b16 %v4060, %v4055
      %v4191 = vpack.c.b16 %v4066, %v4061
      %v4192 = vpack.c.b16 %v4067, %v4062
      %v4193 = vpack.c.b16 %v4068, %v4063
      %v4194 = vpack.c.b16 %v4069, %v4064
      %v4195 = vpack.c.b16 %v4070, %v4065
      %v4196 = vpack.c.b16 %v4076, %v4071
      %v4197 = vpack.c.b16 %v4077, %v4072
      %v4198 = vpack.c.b16 %v4078, %v4073
      %v4199 = vpack.c.b16 %v4079, %v4074
      %v4200 = vpack.c.b16 %v4080, %v4075
      %v4201 = vpack.c.b16 %v4086, %v4081
      %v4202 = vpack.c.b16 %v4087, %v4082
      %v4203 = vpack.c.b16 %v4088, %v4083
      %v4204 = vpack.c.b16 %v4089, %v4084
      %v4205 = vpack.c.b16 %v4090, %v4085
      %v4206 = vpack.c.b16 %v4096, %v4091
      %v4207 = vpack.c.b16 %v4097, %v4092
      %v4208 = vpack.c.b16 %v4098, %v4093
      %v4209 = vpack.c.b16 %v4099, %v4094
      %v4210 = vpack.c.b16 %v4100, %v4095
      %v4211 = vpack.c.b16 %v4106, %v4101
      %v4212 = vpack.c.b16 %v4107, %v4102
      %v4213 = vpack.c.b16 %v4108, %v4103
      %v4214 = vpack.c.b16 %v4109, %v4104
      %v4215 = vpack.c.b16 %v4110, %v4105
      %v4216 = vpack.c.b16 %v4116, %v4111
      %v4217 = vpack.c.b16 %v4117, %v4112
      %v4218 = vpack.c.b16 %v4118, %v4113
      %v4219 = vpack.c.b16 %v4119, %v4114
      %v4220 = vpack.c.b16 %v4120, %v4115
      %v4221 = vpack.c.b16 %v4126, %v4121
      %v4222 = vpack.c.b16 %v4127, %v4122
      %v4223 = vpack.c.b16 %v4128, %v4123
      %v4224 = vpack.c.b16 %v4129, %v4124
      %v4225 = vpack.c.b16 %v4130, %v4125
      %v4226 = vpack.c.b16 %v4136, %v4131
      %v4227 = vpack.c.b16 %v4137, %v4132
      %v4228 = vpack.c.b16 %v4138, %v4133
      %v4229 = vpack.c.b16 %v4139, %v4134
      %v4230 = vpack.c.b16 %v4140, %v4135
      %v4231 = vpack.c.b16 %v4146, %v4141
      %v4232 = vpack.c.b16 %v4147, %v4142
      %v4233 = vpack.c.b16 %v4148, %v4143
      %v4234 = vpack.c.b16 %v4149, %v4144
      %v4235 = vpack.c.b16 %v4150, %v4145
      %v4236 = vpack.c.b16 %v4156, %v4151
      %v4237 = vpack.c.b16 %v4157, %v4152
      %v4238 = vpack.c.b16 %v4158, %v4153
      %v4239 = vpack.c.b16 %v4159, %v4154
      %v4240 = vpack.c.b16 %v4160, %v4155
      %v4241 = vpack.c.b16 %v4166, %v4161
      %v4242 = vpack.c.b16 %v4167, %v4162
      %v4243 = vpack.c.b16 %v4168, %v4163
      %v4244 = vpack.c.b16 %v4169, %v4164
      %v4245 = vpack.c.b16 %v4170, %v4165
      %v4246 = vpack.c.b16 %v4171, %v4171
      %v4247 = vpack.c.b16 %v4172, %v4172
      %v4248 = vpack.c.b16 %v4173, %v4173
      %v4249 = vpack.c.b16 %v4174, %v4174
      %v4250 = vpack.c.b16 %v4175, %v4175
      %v4312 = vsel %vm3372, %v4180, 0
      %v4315 = vsel %vm3372, %v4185, 0
      %v4318 = vsel %vm3372, %v4190, 0
      %v4321 = vsel %vm3372, %v4195, 0
      %v4324 = vsel %vm3372, %v4200, 0
      %v4327 = vsel %vm3372, %v4205, 0
      %v4330 = vsel %vm3372, %v4210, 0
      %v4333 = vsel %vm3372, %v4215, 0
      %v4336 = vsel %vm3372, %v4220, 0
      %v4339 = vsel %vm3372, %v4225, 0
      %v4342 = vsel %vm3372, %v4230, 0
      %v4345 = vsel %vm3372, %v4235, 0
      %v4348 = vsel %vm3372, %v4240, 0
      %v4351 = vsel %vm3372, %v4245, 0
      %v4354 = vsel %vm3372, %v4250, 0
      %4356 = vmatprep.subr.bf16.mxu0 0
      %4357 = vmatpush1.bf16.msra.mxu0 %v3901
      %4358 = vmatprep.subr.bf16.mxu0 0
      %4359 = vmatpush1.bf16.msra.mxu0 %v3902
      %4360 = vmatprep.subr.bf16.mxu0 0
      %4361 = vmatpush1.bf16.msra.mxu0 %v3903
      %4362 = vmatprep.subr.bf16.mxu0 0
      %4363 = vmatpush1.bf16.msra.mxu0 %v3904
      %4364 = vmatprep.subr.bf16.mxu0 0
      %4365 = vmatpush1.bf16.msra.mxu0 %v3905
      %4366 = vmatprep.subr.bf16.mxu0 0
      %4367 = vmatpush1.bf16.msra.mxu0 %v3906
      %4368 = vmatprep.subr.bf16.mxu0 0
      %4369 = vmatpush1.bf16.msra.mxu0 %v3907
      %4370 = vmatprep.subr.bf16.mxu0 0
      %4371 = vmatpush1.bf16.msra.mxu0 %v3908
      %4372 = vmatprep.subr.bf16.mxu0 0
      %4373 = vmatpush1.bf16.msra.mxu0 %v3909
      %4374 = vmatprep.subr.bf16.mxu0 0
      %4375 = vmatpush1.bf16.msra.mxu0 %v3910
      %4376 = vmatprep.subr.bf16.mxu0 0
      %4377 = vmatpush1.bf16.msra.mxu0 %v3911
      %4378 = vmatprep.subr.bf16.mxu0 0
      %4379 = vmatpush1.bf16.msra.mxu0 %v3912
      %4380 = vmatprep.subr.bf16.mxu0 0
      %4381 = vmatpush1.bf16.msra.mxu0 %v3913
      %4382 = vmatprep.subr.bf16.mxu0 0
      %4383 = vmatpush1.bf16.msra.mxu0 %v3914
      %4384 = vmatprep.subr.bf16.mxu0 0
      %4385 = vmatpush1.bf16.msra.mxu0 %v3915
      %4386 = vmatprep.subr.bf16.mxu0 0
      %4387 = vmatpush1.bf16.msra.mxu0 %v3916
      %4388 = vmatprep.mubr.bf16.mxu0 %v4177
      %4389 = vmatmul.mubr.bf16.gmra.mrb[0].mxu0 %v4176
      %v4390 = vpop.f32.mrb[0].mxu0
      %v4391 = vadd.f32 %v3942, %v4390
      %v4392 = vpop.f32.mrb[0].mxu0
      %v4393 = vpop.f32.mrb[0].mxu0
      %v4394 = vadd.f32 %v3942, %v4393
      %v4395 = vpop.f32.mrb[0].mxu0
      %4396 = vmatprep.mubr.bf16.mxu0 %v4182
      %4397 = vmatmul.mubr.bf16.gmra.mrb[0].mxu0 %v4181
      %v4398 = vpop.f32.mrb[0].mxu0
      %v4399 = vadd.f32 %v3942, %v4398
      %v4400 = vpop.f32.mrb[0].mxu0
      %v4401 = vpop.f32.mrb[0].mxu0
      %v4402 = vadd.f32 %v3942, %v4401
      %v4403 = vpop.f32.mrb[0].mxu0
      %4404 = vmatprep.mubr.bf16.mxu0 %v4187
      %4405 = vmatmul.mubr.bf16.gmra.mrb[0].mxu0 %v4186
      %v4406 = vpop.f32.mrb[0].mxu0
      %v4407 = vadd.f32 %v3942, %v4406
      %v4408 = vpop.f32.mrb[0].mxu0
      %v4409 = vpop.f32.mrb[0].mxu0
      %v4410 = vadd.f32 %v3942, %v4409
      %v4411 = vpop.f32.mrb[0].mxu0
      %4412 = vmatprep.mubr.bf16.mxu0 %v4192
      %4413 = vmatmul.mubr.bf16.gmra.mrb[0].mxu0 %v4191
      %v4414 = vpop.f32.mrb[0].mxu0
      %v4415 = vadd.f32 %v3942, %v4414
      %v4416 = vpop.f32.mrb[0].mxu0
      %v4417 = vpop.f32.mrb[0].mxu0
      %v4418 = vadd.f32 %v3942, %v4417
      %v4419 = vpop.f32.mrb[0].mxu0
      %4420 = vmatprep.mubr.bf16.mxu0 %v4197
      %4421 = vmatmul.mubr.bf16.gmra.mrb[0].mxu0 %v4196
      %v4422 = vpop.f32.mrb[0].mxu0
      %v4423 = vadd.f32 %v3942, %v4422
      %v4424 = vpop.f32.mrb[0].mxu0
      %v4425 = vpop.f32.mrb[0].mxu0
      %v4426 = vadd.f32 %v3942, %v4425
      %v4427 = vpop.f32.mrb[0].mxu0
      %4428 = vmatprep.mubr.bf16.mxu0 %v4202
      %4429 = vmatmul.mubr.bf16.gmra.mrb[0].mxu0 %v4201
      %v4430 = vpop.f32.mrb[0].mxu0
      %v4431 = vadd.f32 %v3942, %v4430
      %v4432 = vpop.f32.mrb[0].mxu0
      %v4433 = vpop.f32.mrb[0].mxu0
      %v4434 = vadd.f32 %v3942, %v4433
      %v4435 = vpop.f32.mrb[0].mxu0
      %4436 = vmatprep.mubr.bf16.mxu0 %v4207
      %4437 = vmatmul.mubr.bf16.gmra.mrb[0].mxu0 %v4206
      %v4438 = vpop.f32.mrb[0].mxu0
      %v4439 = vadd.f32 %v3942, %v4438
      %v4440 = vpop.f32.mrb[0].mxu0
      %v4441 = vpop.f32.mrb[0].mxu0
      %v4442 = vadd.f32 %v3942, %v4441
      %v4443 = vpop.f32.mrb[0].mxu0
      %4444 = vmatprep.mubr.bf16.mxu0 %v4212
      %4445 = vmatmul.mubr.bf16.gmra.mrb[0].mxu0 %v4211
      %v4446 = vpop.f32.mrb[0].mxu0
      %v4447 = vadd.f32 %v3942, %v4446
      %v4448 = vpop.f32.mrb[0].mxu0
      %v4449 = vpop.f32.mrb[0].mxu0
      %v4450 = vadd.f32 %v3942, %v4449
      %v4451 = vpop.f32.mrb[0].mxu0
      %4452 = vmatprep.mubr.bf16.mxu0 %v4217
      %4453 = vmatmul.mubr.bf16.gmra.mrb[0].mxu0 %v4216
      %v4454 = vpop.f32.mrb[0].mxu0
      %v4455 = vadd.f32 %v3942, %v4454
      %v4456 = vpop.f32.mrb[0].mxu0
      %v4457 = vpop.f32.mrb[0].mxu0
      %v4458 = vadd.f32 %v3942, %v4457
      %v4459 = vpop.f32.mrb[0].mxu0
      %4460 = vmatprep.mubr.bf16.mxu0 %v4222
      %4461 = vmatmul.mubr.bf16.gmra.mrb[0].mxu0 %v4221
      %v4462 = vpop.f32.mrb[0].mxu0
      %v4463 = vadd.f32 %v3942, %v4462
      %v4464 = vpop.f32.mrb[0].mxu0
      %v4465 = vpop.f32.mrb[0].mxu0
      %v4466 = vadd.f32 %v3942, %v4465
      %v4467 = vpop.f32.mrb[0].mxu0
      %4468 = vmatprep.mubr.bf16.mxu0 %v4227
      %4469 = vmatmul.mubr.bf16.gmra.mrb[0].mxu0 %v4226
      %v4470 = vpop.f32.mrb[0].mxu0
      %v4471 = vadd.f32 %v3942, %v4470
      %v4472 = vpop.f32.mrb[0].mxu0
      %v4473 = vpop.f32.mrb[0].mxu0
      %v4474 = vadd.f32 %v3942, %v4473
      %v4475 = vpop.f32.mrb[0].mxu0
      %4476 = vmatprep.mubr.bf16.mxu0 %v4232
      %4477 = vmatmul.mubr.bf16.gmra.mrb[0].mxu0 %v4231
      %v4478 = vpop.f32.mrb[0].mxu0
      %v4479 = vadd.f32 %v3942, %v4478
      %v4480 = vpop.f32.mrb[0].mxu0
      %v4481 = vpop.f32.mrb[0].mxu0
      %v4482 = vadd.f32 %v3942, %v4481
      %v4483 = vpop.f32.mrb[0].mxu0
      %4484 = vmatprep.mubr.bf16.mxu0 %v4237
      %4485 = vmatmul.mubr.bf16.gmra.mrb[0].mxu0 %v4236
      %v4486 = vpop.f32.mrb[0].mxu0
      %v4487 = vadd.f32 %v3942, %v4486
      %v4488 = vpop.f32.mrb[0].mxu0
      %v4489 = vpop.f32.mrb[0].mxu0
      %v4490 = vadd.f32 %v3942, %v4489
      %v4491 = vpop.f32.mrb[0].mxu0
      %4492 = vmatprep.mubr.bf16.mxu0 %v4242
      %4493 = vmatmul.mubr.bf16.gmra.mrb[0].mxu0 %v4241
      %v4494 = vpop.f32.mrb[0].mxu0
      %v4495 = vadd.f32 %v3942, %v4494
      %v4496 = vpop.f32.mrb[0].mxu0
      %v4497 = vpop.f32.mrb[0].mxu0
      %v4498 = vadd.f32 %v3942, %v4497
      %v4499 = vpop.f32.mrb[0].mxu0
      %4500 = vmatprep.mubr.bf16.mxu0 %v4247
      %4501 = vmatmul.mubr.bf16.gmra.mrb[0].mxu0 %v4246
      %v4502 = vpop.f32.mrb[0].mxu0
      %v4503 = vadd.f32 %v3942, %v4502
      %v4504 = vpop.f32.mrb[0].mxu0
      %v4505 = vpop.f32.mrb[0].mxu0
      %v4506 = vpop.f32.mrb[0].mxu0
      %4507 = vdwg.mxu0
      %4508 = vmatprep.subr.bf16.mxu0 0
      %4509 = vmatpush1.bf16.msra.mxu0 %v3917
      %4510 = vmatprep.subr.bf16.mxu0 0
      %4511 = vmatpush1.bf16.msra.mxu0 %v3918
      %4512 = vmatprep.subr.bf16.mxu0 0
      %4513 = vmatpush1.bf16.msra.mxu0 %v3919
      %4514 = vmatprep.subr.bf16.mxu0 0
      %4515 = vmatpush1.bf16.msra.mxu0 %v3920
      %4516 = vmatprep.subr.bf16.mxu0 0
      %4517 = vmatpush1.bf16.msra.mxu0 %v3921
      %4518 = vmatprep.subr.bf16.mxu0 0
      %4519 = vmatpush1.bf16.msra.mxu0 %v3922
      %4520 = vmatprep.subr.bf16.mxu0 0
      %4521 = vmatpush1.bf16.msra.mxu0 %v3923
      %4522 = vmatprep.subr.bf16.mxu0 0
      %4523 = vmatpush1.bf16.msra.mxu0 %v3924
      %4524 = vmatprep.subr.bf16.mxu0 0
      %4525 = vmatpush1.bf16.msra.mxu0 %v3925
      %4526 = vmatprep.subr.bf16.mxu0 0
      %4527 = vmatpush1.bf16.msra.mxu0 %v3926
      %4528 = vmatprep.subr.bf16.mxu0 0
      %4529 = vmatpush1.bf16.msra.mxu0 %v3927
      %4530 = vmatprep.subr.bf16.mxu0 0
      %4531 = vmatpush1.bf16.msra.mxu0 %v3928
      %4532 = vmatprep.subr.bf16.mxu0 0
      %4533 = vmatpush1.bf16.msra.mxu0 %v3929
      %4534 = vmatprep.subr.bf16.mxu0 0
      %4535 = vmatpush1.bf16.msra.mxu0 %v3930
      %4536 = vmatprep.subr.bf16.mxu0 0
      %4537 = vmatpush1.bf16.msra.mxu0 %v3931
      %4538 = vmatprep.subr.bf16.mxu0 0
      %4539 = vmatpush1.bf16.msra.mxu0 %v3932
      %4540 = vmatprep.mubr.bf16.mxu0 %v4179
      %4541 = vmatmul.mubr.bf16.gmra.mrb[0].mxu0 %v4178
      %v4542 = vpop.f32.mrb[0].mxu0
      %v4543 = vadd.f32 %v4391, %v4542
      %v4544 = vpop.f32.mrb[0].mxu0
      %v4545 = vpop.f32.mrb[0].mxu0
      %v4546 = vadd.f32 %v4394, %v4545
      %v4547 = vpop.f32.mrb[0].mxu0
      %4548 = vmatprep.mubr.bf16.mxu0 %v4184
      %4549 = vmatmul.mubr.bf16.gmra.mrb[0].mxu0 %v4183
      %v4550 = vpop.f32.mrb[0].mxu0
      %v4551 = vadd.f32 %v4399, %v4550
      %v4552 = vpop.f32.mrb[0].mxu0
      %v4553 = vpop.f32.mrb[0].mxu0
      %v4554 = vadd.f32 %v4402, %v4553
      %v4555 = vpop.f32.mrb[0].mxu0
      %4556 = vmatprep.mubr.bf16.mxu0 %v4189
      %4557 = vmatmul.mubr.bf16.gmra.mrb[0].mxu0 %v4188
      %v4558 = vpop.f32.mrb[0].mxu0
      %v4559 = vadd.f32 %v4407, %v4558
      %v4560 = vpop.f32.mrb[0].mxu0
      %v4561 = vpop.f32.mrb[0].mxu0
      %v4562 = vadd.f32 %v4410, %v4561
      %v4563 = vpop.f32.mrb[0].mxu0
      %4564 = vmatprep.mubr.bf16.mxu0 %v4194
      %4565 = vmatmul.mubr.bf16.gmra.mrb[0].mxu0 %v4193
      %v4566 = vpop.f32.mrb[0].mxu0
      %v4567 = vadd.f32 %v4415, %v4566
      %v4568 = vpop.f32.mrb[0].mxu0
      %v4569 = vpop.f32.mrb[0].mxu0
      %v4570 = vadd.f32 %v4418, %v4569
      %v4571 = vpop.f32.mrb[0].mxu0
      %4572 = vmatprep.mubr.bf16.mxu0 %v4199
      %4573 = vmatmul.mubr.bf16.gmra.mrb[0].mxu0 %v4198
      %v4574 = vpop.f32.mrb[0].mxu0
      %v4575 = vadd.f32 %v4423, %v4574
      %v4576 = vpop.f32.mrb[0].mxu0
      %v4577 = vpop.f32.mrb[0].mxu0
      %v4578 = vadd.f32 %v4426, %v4577
      %v4579 = vpop.f32.mrb[0].mxu0
      %4580 = vmatprep.mubr.bf16.mxu0 %v4204
      %4581 = vmatmul.mubr.bf16.gmra.mrb[0].mxu0 %v4203
      %v4582 = vpop.f32.mrb[0].mxu0
      %v4583 = vadd.f32 %v4431, %v4582
      %v4584 = vpop.f32.mrb[0].mxu0
      %v4585 = vpop.f32.mrb[0].mxu0
      %v4586 = vadd.f32 %v4434, %v4585
      %v4587 = vpop.f32.mrb[0].mxu0
      %4588 = vmatprep.mubr.bf16.mxu0 %v4209
      %4589 = vmatmul.mubr.bf16.gmra.mrb[0].mxu0 %v4208
      %v4590 = vpop.f32.mrb[0].mxu0
      %v4591 = vadd.f32 %v4439, %v4590
      %v4592 = vpop.f32.mrb[0].mxu0
      %v4593 = vpop.f32.mrb[0].mxu0
      %v4594 = vadd.f32 %v4442, %v4593
      %v4595 = vpop.f32.mrb[0].mxu0
      %4596 = vmatprep.mubr.bf16.mxu0 %v4214
      %4597 = vmatmul.mubr.bf16.gmra.mrb[0].mxu0 %v4213
      %v4598 = vpop.f32.mrb[0].mxu0
      %v4599 = vadd.f32 %v4447, %v4598
      %v4600 = vpop.f32.mrb[0].mxu0
      %v4601 = vpop.f32.mrb[0].mxu0
      %v4602 = vadd.f32 %v4450, %v4601
      %v4603 = vpop.f32.mrb[0].mxu0
      %4604 = vmatprep.mubr.bf16.mxu0 %v4219
      %4605 = vmatmul.mubr.bf16.gmra.mrb[0].mxu0 %v4218
      %v4606 = vpop.f32.mrb[0].mxu0
      %v4607 = vadd.f32 %v4455, %v4606
      %v4608 = vpop.f32.mrb[0].mxu0
      %v4609 = vpop.f32.mrb[0].mxu0
      %v4610 = vadd.f32 %v4458, %v4609
      %v4611 = vpop.f32.mrb[0].mxu0
      %4612 = vmatprep.mubr.bf16.mxu0 %v4224
      %4613 = vmatmul.mubr.bf16.gmra.mrb[0].mxu0 %v4223
      %v4614 = vpop.f32.mrb[0].mxu0
      %v4615 = vadd.f32 %v4463, %v4614
      %v4616 = vpop.f32.mrb[0].mxu0
      %v4617 = vpop.f32.mrb[0].mxu0
      %v4618 = vadd.f32 %v4466, %v4617
      %v4619 = vpop.f32.mrb[0].mxu0
      %4620 = vmatprep.mubr.bf16.mxu0 %v4229
      %4621 = vmatmul.mubr.bf16.gmra.mrb[0].mxu0 %v4228
      %v4622 = vpop.f32.mrb[0].mxu0
      %v4623 = vadd.f32 %v4471, %v4622
      %v4624 = vpop.f32.mrb[0].mxu0
      %v4625 = vpop.f32.mrb[0].mxu0
      %v4626 = vadd.f32 %v4474, %v4625
      %v4627 = vpop.f32.mrb[0].mxu0
      %4628 = vmatprep.mubr.bf16.mxu0 %v4234
      %4629 = vmatmul.mubr.bf16.gmra.mrb[0].mxu0 %v4233
      %v4630 = vpop.f32.mrb[0].mxu0
      %v4631 = vadd.f32 %v4479, %v4630
      %v4632 = vpop.f32.mrb[0].mxu0
      %v4633 = vpop.f32.mrb[0].mxu0
      %v4634 = vadd.f32 %v4482, %v4633
      %v4635 = vpop.f32.mrb[0].mxu0
      %4636 = vmatprep.mubr.bf16.mxu0 %v4239
      %4637 = vmatmul.mubr.bf16.gmra.mrb[0].mxu0 %v4238
      %v4638 = vpop.f32.mrb[0].mxu0
      %v4639 = vadd.f32 %v4487, %v4638
      %v4640 = vpop.f32.mrb[0].mxu0
      %v4641 = vpop.f32.mrb[0].mxu0
      %v4642 = vadd.f32 %v4490, %v4641
      %v4643 = vpop.f32.mrb[0].mxu0
      %4644 = vmatprep.mubr.bf16.mxu0 %v4244
      %4645 = vmatmul.mubr.bf16.gmra.mrb[0].mxu0 %v4243
      %v4646 = vpop.f32.mrb[0].mxu0
      %v4647 = vadd.f32 %v4495, %v4646
      %v4648 = vpop.f32.mrb[0].mxu0
      %v4649 = vpop.f32.mrb[0].mxu0
      %v4650 = vadd.f32 %v4498, %v4649
      %v4651 = vpop.f32.mrb[0].mxu0
      %4652 = vmatprep.mubr.bf16.mxu0 %v4249
      %4653 = vmatmul.mubr.bf16.gmra.mrb[0].mxu0 %v4248
      %v4654 = vpop.f32.mrb[0].mxu0
      %v4655 = vadd.f32 %v4503, %v4654
      %v4656 = vpop.f32.mrb[0].mxu0
      %v4657 = vpop.f32.mrb[0].mxu0
      %v4658 = vpop.f32.mrb[0].mxu0
      %4659 = vdwg.mxu0
      %4660 = vmatprep.subr.bf16.mxu0 0
      %4661 = vmatpush1.bf16.msra.mxu0 %v3933
      %4662 = vmatprep.subr.bf16.mxu0 0
      %4663 = vmatpush1.bf16.msra.mxu0 %v3934
      %4664 = vmatprep.subr.bf16.mxu0 0
      %4665 = vmatpush1.bf16.msra.mxu0 %v3935
      %4666 = vmatprep.subr.bf16.mxu0 0
      %4667 = vmatpush1.bf16.msra.mxu0 %v3936
      %4668 = vmatprep.subr.bf16.mxu0 0
      %4669 = vmatpush1.bf16.msra.mxu0 0
      %4670 = vmatprep.subr.bf16.mxu0 0
      %4671 = vmatpush1.bf16.msra.mxu0 0
      %4672 = vmatprep.subr.bf16.mxu0 0
      %4673 = vmatpush1.bf16.msra.mxu0 0
      %4674 = vmatprep.subr.bf16.mxu0 0
      %4675 = vmatpush1.bf16.msra.mxu0 0
      %4676 = vmatprep.subr.bf16.mxu0 0
      %4677 = vmatpush1.bf16.msra.mxu0 0
      %4678 = vmatprep.subr.bf16.mxu0 0
      %4679 = vmatpush1.bf16.msra.mxu0 0
      %4680 = vmatprep.subr.bf16.mxu0 0
      %4681 = vmatpush1.bf16.msra.mxu0 0
      %4682 = vmatprep.subr.bf16.mxu0 0
      %4683 = vmatpush1.bf16.msra.mxu0 0
      %4684 = vmatprep.subr.bf16.mxu0 0
      %4685 = vmatpush1.bf16.msra.mxu0 0
      %4686 = vmatprep.subr.bf16.mxu0 0
      %4687 = vmatpush1.bf16.msra.mxu0 0
      %4688 = vmatprep.subr.bf16.mxu0 0
      %4689 = vmatpush1.bf16.msra.mxu0 0
      %4690 = vmatprep.subr.bf16.mxu0 0
      %4691 = vmatpush1.bf16.msra.mxu0 0
      %4692 = vmatprep.mubr.bf16.mxu0 0
      %4693 = vmatmul.mubr.bf16.gmra.mrb[0].mxu0 %v4312
      %v4694 = vpop.f32.mrb[0].mxu0
      %v4695 = vadd.f32 %v4543, %v4694
      %v4696 = vpop.f32.mrb[0].mxu0
      %v4697 = vpop.f32.mrb[0].mxu0
      %v4698 = vadd.f32 %v4546, %v4697
      %v4699 = vpop.f32.mrb[0].mxu0
      %4700 = vmatprep.mubr.bf16.mxu0 0
      %4701 = vmatmul.mubr.bf16.gmra.mrb[0].mxu0 %v4315
      %v4702 = vpop.f32.mrb[0].mxu0
      %v4703 = vadd.f32 %v4551, %v4702
      %v4704 = vpop.f32.mrb[0].mxu0
      %v4705 = vpop.f32.mrb[0].mxu0
      %v4706 = vadd.f32 %v4554, %v4705
      %v4707 = vpop.f32.mrb[0].mxu0
      %4708 = vmatprep.mubr.bf16.mxu0 0
      %4709 = vmatmul.mubr.bf16.gmra.mrb[0].mxu0 %v4318
      %v4710 = vpop.f32.mrb[0].mxu0
      %v4711 = vadd.f32 %v4559, %v4710
      %v4712 = vpop.f32.mrb[0].mxu0
      %v4713 = vpop.f32.mrb[0].mxu0
      %v4714 = vadd.f32 %v4562, %v4713
      %v4715 = vpop.f32.mrb[0].mxu0
      %4716 = vmatprep.mubr.bf16.mxu0 0
      %4717 = vmatmul.mubr.bf16.gmra.mrb[0].mxu0 %v4321
      %v4718 = vpop.f32.mrb[0].mxu0
      %v4719 = vadd.f32 %v4567, %v4718
      %v4720 = vpop.f32.mrb[0].mxu0
      %v4721 = vpop.f32.mrb[0].mxu0
      %v4722 = vadd.f32 %v4570, %v4721
      %v4723 = vpop.f32.mrb[0].mxu0
      %4724 = vmatprep.mubr.bf16.mxu0 0
      %4725 = vmatmul.mubr.bf16.gmra.mrb[0].mxu0 %v4324
      %v4726 = vpop.f32.mrb[0].mxu0
      %v4727 = vadd.f32 %v4575, %v4726
      %v4728 = vpop.f32.mrb[0].mxu0
      %v4729 = vpop.f32.mrb[0].mxu0
      %v4730 = vadd.f32 %v4578, %v4729
      %v4731 = vpop.f32.mrb[0].mxu0
      %4732 = vmatprep.mubr.bf16.mxu0 0
      %4733 = vmatmul.mubr.bf16.gmra.mrb[0].mxu0 %v4327
      %v4734 = vpop.f32.mrb[0].mxu0
      %v4735 = vadd.f32 %v4583, %v4734
      %v4736 = vpop.f32.mrb[0].mxu0
      %v4737 = vpop.f32.mrb[0].mxu0
      %v4738 = vadd.f32 %v4586, %v4737
      %v4739 = vpop.f32.mrb[0].mxu0
      %4740 = vmatprep.mubr.bf16.mxu0 0
      %4741 = vmatmul.mubr.bf16.gmra.mrb[0].mxu0 %v4330
      %v4742 = vpop.f32.mrb[0].mxu0
      %v4743 = vadd.f32 %v4591, %v4742
      %v4744 = vpop.f32.mrb[0].mxu0
      %v4745 = vpop.f32.mrb[0].mxu0
      %v4746 = vadd.f32 %v4594, %v4745
      %v4747 = vpop.f32.mrb[0].mxu0
      %4748 = vmatprep.mubr.bf16.mxu0 0
      %4749 = vmatmul.mubr.bf16.gmra.mrb[0].mxu0 %v4333
      %v4750 = vpop.f32.mrb[0].mxu0
      %v4751 = vadd.f32 %v4599, %v4750
      %v4752 = vpop.f32.mrb[0].mxu0
      %v4753 = vpop.f32.mrb[0].mxu0
      %v4754 = vadd.f32 %v4602, %v4753
      %v4755 = vpop.f32.mrb[0].mxu0
      %4756 = vmatprep.mubr.bf16.mxu0 0
      %4757 = vmatmul.mubr.bf16.gmra.mrb[0].mxu0 %v4336
      %v4758 = vpop.f32.mrb[0].mxu0
      %v4759 = vadd.f32 %v4607, %v4758
      %v4760 = vpop.f32.mrb[0].mxu0
      %v4761 = vpop.f32.mrb[0].mxu0
      %v4762 = vadd.f32 %v4610, %v4761
      %v4763 = vpop.f32.mrb[0].mxu0
      %4764 = vmatprep.mubr.bf16.mxu0 0
      %4765 = vmatmul.mubr.bf16.gmra.mrb[0].mxu0 %v4339
      %v4766 = vpop.f32.mrb[0].mxu0
      %v4767 = vadd.f32 %v4615, %v4766
      %v4768 = vpop.f32.mrb[0].mxu0
      %v4769 = vpop.f32.mrb[0].mxu0
      %v4770 = vadd.f32 %v4618, %v4769
      %v4771 = vpop.f32.mrb[0].mxu0
      %4772 = vmatprep.mubr.bf16.mxu0 0
      %4773 = vmatmul.mubr.bf16.gmra.mrb[0].mxu0 %v4342
      %v4774 = vpop.f32.mrb[0].mxu0
      %v4775 = vadd.f32 %v4623, %v4774
      %v4776 = vpop.f32.mrb[0].mxu0
      %v4777 = vpop.f32.mrb[0].mxu0
      %v4778 = vadd.f32 %v4626, %v4777
      %v4779 = vpop.f32.mrb[0].mxu0
      %4780 = vmatprep.mubr.bf16.mxu0 0
      %4781 = vmatmul.mubr.bf16.gmra.mrb[0].mxu0 %v4345
      %v4782 = vpop.f32.mrb[0].mxu0
      %v4783 = vadd.f32 %v4631, %v4782
      %v4784 = vpop.f32.mrb[0].mxu0
      %v4785 = vpop.f32.mrb[0].mxu0
      %v4786 = vadd.f32 %v4634, %v4785
      %v4787 = vpop.f32.mrb[0].mxu0
      %4788 = vmatprep.mubr.bf16.mxu0 0
      %4789 = vmatmul.mubr.bf16.gmra.mrb[0].mxu0 %v4348
      %v4790 = vpop.f32.mrb[0].mxu0
      %v4791 = vadd.f32 %v4639, %v4790
      %v4792 = vpop.f32.mrb[0].mxu0
      %v4793 = vpop.f32.mrb[0].mxu0
      %v4794 = vadd.f32 %v4642, %v4793
      %v4795 = vpop.f32.mrb[0].mxu0
      %4796 = vmatprep.mubr.bf16.mxu0 0
      %4797 = vmatmul.mubr.bf16.gmra.mrb[0].mxu0 %v4351
      %v4798 = vpop.f32.mrb[0].mxu0
      %v4799 = vadd.f32 %v4647, %v4798
      %v4800 = vpop.f32.mrb[0].mxu0
      %v4801 = vpop.f32.mrb[0].mxu0
      %v4802 = vadd.f32 %v4650, %v4801
      %v4803 = vpop.f32.mrb[0].mxu0
      %4804 = vmatprep.mubr.bf16.mxu0 0
      %4805 = vmatmul.mubr.bf16.gmra.mrb[0].mxu0 %v4354
      %v4806 = vpop.f32.mrb[0].mxu0
      %v4807 = vadd.f32 %v4655, %v4806
      %v4808 = vpop.f32.mrb[0].mxu0
      %v4809 = vpop.f32.mrb[0].mxu0
      %v4810 = vpop.f32.mrb[0].mxu0
      %4811 = vdwg.mxu0
      %v4812 = vand.u32 2147483647, %v4695
      %v4813 = vand.u32 2147483647, %v4698
      %v4814 = vand.u32 2147483647, %v4703
      %v4815 = vand.u32 2147483647, %v4706
      %v4816 = vand.u32 2147483647, %v4711
      %v4817 = vand.u32 2147483647, %v4714
      %v4818 = vand.u32 2147483647, %v4719
      %v4819 = vand.u32 2147483647, %v4722
      %v4820 = vand.u32 2147483647, %v4727
      %v4821 = vand.u32 2147483647, %v4730
      %v4822 = vand.u32 2147483647, %v4735
      %v4823 = vand.u32 2147483647, %v4738
      %v4824 = vand.u32 2147483647, %v4743
      %v4825 = vand.u32 2147483647, %v4746
      %v4826 = vand.u32 2147483647, %v4751
      %v4827 = vand.u32 2147483647, %v4754
      %v4828 = vand.u32 2147483647, %v4759
      %v4829 = vand.u32 2147483647, %v4762
      %v4830 = vand.u32 2147483647, %v4767
      %v4831 = vand.u32 2147483647, %v4770
      %v4832 = vand.u32 2147483647, %v4775
      %v4833 = vand.u32 2147483647, %v4778
      %v4834 = vand.u32 2147483647, %v4783
      %v4835 = vand.u32 2147483647, %v4786
      %v4836 = vand.u32 2147483647, %v4791
      %v4837 = vand.u32 2147483647, %v4794
      %v4838 = vand.u32 2147483647, %v4799
      %v4839 = vand.u32 2147483647, %v4802
      %v4840 = vand.u32 2147483647, %v4807
      %v4841 = vsub.f32 0.0, %v4812
      %v4842 = vsub.f32 0.0, %v4813
      %v4843 = vsub.f32 0.0, %v4814
      %v4844 = vsub.f32 0.0, %v4815
      %v4845 = vsub.f32 0.0, %v4816
      %v4846 = vsub.f32 0.0, %v4817
      %v4847 = vsub.f32 0.0, %v4818
      %v4848 = vsub.f32 0.0, %v4819
      %v4849 = vsub.f32 0.0, %v4820
      %v4850 = vsub.f32 0.0, %v4821
      %v4851 = vsub.f32 0.0, %v4822
      %v4852 = vsub.f32 0.0, %v4823
      %v4853 = vsub.f32 0.0, %v4824
      %v4854 = vsub.f32 0.0, %v4825
      %v4855 = vsub.f32 0.0, %v4826
      %v4856 = vsub.f32 0.0, %v4827
      %v4857 = vsub.f32 0.0, %v4828
      %v4858 = vsub.f32 0.0, %v4829
      %v4859 = vsub.f32 0.0, %v4830
      %v4860 = vsub.f32 0.0, %v4831
      %v4861 = vsub.f32 0.0, %v4832
      %v4862 = vsub.f32 0.0, %v4833
      %v4863 = vsub.f32 0.0, %v4834
      %v4864 = vsub.f32 0.0, %v4835
      %v4865 = vsub.f32 0.0, %v4836
      %v4866 = vsub.f32 0.0, %v4837
      %v4867 = vsub.f32 0.0, %v4838
      %v4868 = vsub.f32 0.0, %v4839
      %v4869 = vsub.f32 0.0, %v4840
      %v4870 = vmul.f32 %v4841, 1.442695
      %v4871 = vpow.pop %v4870
      %v4872 = vmul.f32 %v4842, 1.442695
      %v4873 = vpow.pop %v4872
      %v4874 = vmul.f32 %v4843, 1.442695
      %v4875 = vpow.pop %v4874
      %v4876 = vmul.f32 %v4844, 1.442695
      %v4877 = vpow.pop %v4876
      %v4878 = vmul.f32 %v4845, 1.442695
      %v4879 = vpow.pop %v4878
      %v4880 = vmul.f32 %v4846, 1.442695
      %v4881 = vpow.pop %v4880
      %v4882 = vmul.f32 %v4847, 1.442695
      %v4883 = vpow.pop %v4882
      %v4884 = vmul.f32 %v4848, 1.442695
      %v4885 = vpow.pop %v4884
      %v4886 = vmul.f32 %v4849, 1.442695
      %v4887 = vpow.pop %v4886
      %v4888 = vmul.f32 %v4850, 1.442695
      %v4889 = vpow.pop %v4888
      %v4890 = vmul.f32 %v4851, 1.442695
      %v4891 = vpow.pop %v4890
      %v4892 = vmul.f32 %v4852, 1.442695
      %v4893 = vpow.pop %v4892
      %v4894 = vmul.f32 %v4853, 1.442695
      %v4895 = vpow.pop %v4894
      %v4896 = vmul.f32 %v4854, 1.442695
      %v4897 = vpow.pop %v4896
      %v4898 = vmul.f32 %v4855, 1.442695
      %v4899 = vpow.pop %v4898
      %v4900 = vmul.f32 %v4856, 1.442695
      %v4901 = vpow.pop %v4900
      %v4902 = vmul.f32 %v4857, 1.442695
      %v4903 = vpow.pop %v4902
      %v4904 = vmul.f32 %v4858, 1.442695
      %v4905 = vpow.pop %v4904
      %v4906 = vmul.f32 %v4859, 1.442695
      %v4907 = vpow.pop %v4906
      %v4908 = vmul.f32 %v4860, 1.442695
      %v4909 = vpow.pop %v4908
      %v4910 = vmul.f32 %v4861, 1.442695
      %v4911 = vpow.pop %v4910
      %v4912 = vmul.f32 %v4862, 1.442695
      %v4913 = vpow.pop %v4912
      %v4914 = vmul.f32 %v4863, 1.442695
      %v4915 = vpow.pop %v4914
      %v4916 = vmul.f32 %v4864, 1.442695
      %v4917 = vpow.pop %v4916
      %v4918 = vmul.f32 %v4865, 1.442695
      %v4919 = vpow.pop %v4918
      %v4920 = vmul.f32 %v4866, 1.442695
      %v4921 = vpow.pop %v4920
      %v4922 = vmul.f32 %v4867, 1.442695
      %v4923 = vpow.pop %v4922
      %v4924 = vmul.f32 %v4868, 1.442695
      %v4925 = vpow.pop %v4924
      %v4926 = vmul.f32 %v4869, 1.442695
      %v4927 = vpow.pop %v4926
      %vm4928 = vcmp.ge.f32.partialorder %v4695, 0.0
      %vm4929 = vcmp.ge.f32.partialorder %v4698, 0.0
      %vm4930 = vcmp.ge.f32.partialorder %v4703, 0.0
      %vm4931 = vcmp.ge.f32.partialorder %v4706, 0.0
      %vm4932 = vcmp.ge.f32.partialorder %v4711, 0.0
      %vm4933 = vcmp.ge.f32.partialorder %v4714, 0.0
      %vm4934 = vcmp.ge.f32.partialorder %v4719, 0.0
      %vm4935 = vcmp.ge.f32.partialorder %v4722, 0.0
      %vm4936 = vcmp.ge.f32.partialorder %v4727, 0.0
      %vm4937 = vcmp.ge.f32.partialorder %v4730, 0.0
      %vm4938 = vcmp.ge.f32.partialorder %v4735, 0.0
      %vm4939 = vcmp.ge.f32.partialorder %v4738, 0.0
      %vm4940 = vcmp.ge.f32.partialorder %v4743, 0.0
      %vm4941 = vcmp.ge.f32.partialorder %v4746, 0.0
      %vm4942 = vcmp.ge.f32.partialorder %v4751, 0.0
      %vm4943 = vcmp.ge.f32.partialorder %v4754, 0.0
      %vm4944 = vcmp.ge.f32.partialorder %v4759, 0.0
      %vm4945 = vcmp.ge.f32.partialorder %v4762, 0.0
      %vm4946 = vcmp.ge.f32.partialorder %v4767, 0.0
      %vm4947 = vcmp.ge.f32.partialorder %v4770, 0.0
      %vm4948 = vcmp.ge.f32.partialorder %v4775, 0.0
      %vm4949 = vcmp.ge.f32.partialorder %v4778, 0.0
      %vm4950 = vcmp.ge.f32.partialorder %v4783, 0.0
      %vm4951 = vcmp.ge.f32.partialorder %v4786, 0.0
      %vm4952 = vcmp.ge.f32.partialorder %v4791, 0.0
      %vm4953 = vcmp.ge.f32.partialorder %v4794, 0.0
      %vm4954 = vcmp.ge.f32.partialorder %v4799, 0.0
      %vm4955 = vcmp.ge.f32.partialorder %v4802, 0.0
      %vm4956 = vcmp.ge.f32.partialorder %v4807, 0.0
      %v4957 = vadd.f32 %v4871, 1.0
      %v4958 = vadd.f32 %v4873, 1.0
      %v4959 = vadd.f32 %v4875, 1.0
      %v4960 = vadd.f32 %v4877, 1.0
      %v4961 = vadd.f32 %v4879, 1.0
      %v4962 = vadd.f32 %v4881, 1.0
      %v4963 = vadd.f32 %v4883, 1.0
      %v4964 = vadd.f32 %v4885, 1.0
      %v4965 = vadd.f32 %v4887, 1.0
      %v4966 = vadd.f32 %v4889, 1.0
      %v4967 = vadd.f32 %v4891, 1.0
      %v4968 = vadd.f32 %v4893, 1.0
      %v4969 = vadd.f32 %v4895, 1.0
      %v4970 = vadd.f32 %v4897, 1.0
      %v4971 = vadd.f32 %v4899, 1.0
      %v4972 = vadd.f32 %v4901, 1.0
      %v4973 = vadd.f32 %v4903, 1.0
      %v4974 = vadd.f32 %v4905, 1.0
      %v4975 = vadd.f32 %v4907, 1.0
      %v4976 = vadd.f32 %v4909, 1.0
      %v4977 = vadd.f32 %v4911, 1.0
      %v4978 = vadd.f32 %v4913, 1.0
      %v4979 = vadd.f32 %v4915, 1.0
      %v4980 = vadd.f32 %v4917, 1.0
      %v4981 = vadd.f32 %v4919, 1.0
      %v4982 = vadd.f32 %v4921, 1.0
      %v4983 = vadd.f32 %v4923, 1.0
      %v4984 = vadd.f32 %v4925, 1.0
      %v4985 = vadd.f32 %v4927, 1.0
      %v4986 = vrcp.pop %v4957
      %v4987 = vmul.f32 1.0, %v4986
      %v4988 = vrcp.pop %v4958
      %v4989 = vmul.f32 1.0, %v4988
      %v4990 = vrcp.pop %v4959
      %v4991 = vmul.f32 1.0, %v4990
      %v4992 = vrcp.pop %v4960
      %v4993 = vmul.f32 1.0, %v4992
      %v4994 = vrcp.pop %v4961
      %v4995 = vmul.f32 1.0, %v4994
      %v4996 = vrcp.pop %v4962
      %v4997 = vmul.f32 1.0, %v4996
      %v4998 = vrcp.pop %v4963
      %v4999 = vmul.f32 1.0, %v4998
      %v5000 = vrcp.pop %v4964
      %v5001 = vmul.f32 1.0, %v5000
      %v5002 = vrcp.pop %v4965
      %v5003 = vmul.f32 1.0, %v5002
      %v5004 = vrcp.pop %v4966
      %v5005 = vmul.f32 1.0, %v5004
      %v5006 = vrcp.pop %v4967
      %v5007 = vmul.f32 1.0, %v5006
      %v5008 = vrcp.pop %v4968
      %v5009 = vmul.f32 1.0, %v5008
      %v5010 = vrcp.pop %v4969
      %v5011 = vmul.f32 1.0, %v5010
      %v5012 = vrcp.pop %v4970
      %v5013 = vmul.f32 1.0, %v5012
      %v5014 = vrcp.pop %v4971
      %v5015 = vmul.f32 1.0, %v5014
      %v5016 = vrcp.pop %v4972
      %v5017 = vmul.f32 1.0, %v5016
      %v5018 = vrcp.pop %v4973
      %v5019 = vmul.f32 1.0, %v5018
      %v5020 = vrcp.pop %v4974
      %v5021 = vmul.f32 1.0, %v5020
      %v5022 = vrcp.pop %v4975
      %v5023 = vmul.f32 1.0, %v5022
      %v5024 = vrcp.pop %v4976
      %v5025 = vmul.f32 1.0, %v5024
      %v5026 = vrcp.pop %v4977
      %v5027 = vmul.f32 1.0, %v5026
      %v5028 = vrcp.pop %v4978
      %v5029 = vmul.f32 1.0, %v5028
      %v5030 = vrcp.pop %v4979
      %v5031 = vmul.f32 1.0, %v5030
      %v5032 = vrcp.pop %v4980
      %v5033 = vmul.f32 1.0, %v5032
      %v5034 = vrcp.pop %v4981
      %v5035 = vmul.f32 1.0, %v5034
      %v5036 = vrcp.pop %v4982
      %v5037 = vmul.f32 1.0, %v5036
      %v5038 = vrcp.pop %v4983
      %v5039 = vmul.f32 1.0, %v5038
      %v5040 = vrcp.pop %v4984
      %v5041 = vmul.f32 1.0, %v5040
      %v5042 = vrcp.pop %v4985
      %v5043 = vmul.f32 1.0, %v5042
      %v5044 = vmul.f32 %v4871, %v4986
      %v5045 = vmul.f32 %v4873, %v4988
      %v5046 = vmul.f32 %v4875, %v4990
      %v5047 = vmul.f32 %v4877, %v4992
      %v5048 = vmul.f32 %v4879, %v4994
      %v5049 = vmul.f32 %v4881, %v4996
      %v5050 = vmul.f32 %v4883, %v4998
      %v5051 = vmul.f32 %v4885, %v5000
      %v5052 = vmul.f32 %v4887, %v5002
      %v5053 = vmul.f32 %v4889, %v5004
      %v5054 = vmul.f32 %v4891, %v5006
      %v5055 = vmul.f32 %v4893, %v5008
      %v5056 = vmul.f32 %v4895, %v5010
      %v5057 = vmul.f32 %v4897, %v5012
      %v5058 = vmul.f32 %v4899, %v5014
      %v5059 = vmul.f32 %v4901, %v5016
      %v5060 = vmul.f32 %v4903, %v5018
      %v5061 = vmul.f32 %v4905, %v5020
      %v5062 = vmul.f32 %v4907, %v5022
      %v5063 = vmul.f32 %v4909, %v5024
      %v5064 = vmul.f32 %v4911, %v5026
      %v5065 = vmul.f32 %v4913, %v5028
      %v5066 = vmul.f32 %v4915, %v5030
      %v5067 = vmul.f32 %v4917, %v5032
      %v5068 = vmul.f32 %v4919, %v5034
      %v5069 = vmul.f32 %v4921, %v5036
      %v5070 = vmul.f32 %v4923, %v5038
      %v5071 = vmul.f32 %v4925, %v5040
      %v5072 = vmul.f32 %v4927, %v5042
      %v5073 = vsel %vm4928, %v4987, %v5044
      %v5074 = vsel %vm4929, %v4989, %v5045
      %v5075 = vsel %vm4930, %v4991, %v5046
      %v5076 = vsel %vm4931, %v4993, %v5047
      %v5077 = vsel %vm4932, %v4995, %v5048
      %v5078 = vsel %vm4933, %v4997, %v5049
      %v5079 = vsel %vm4934, %v4999, %v5050
      %v5080 = vsel %vm4935, %v5001, %v5051
      %v5081 = vsel %vm4936, %v5003, %v5052
      %v5082 = vsel %vm4937, %v5005, %v5053
      %v5083 = vsel %vm4938, %v5007, %v5054
      %v5084 = vsel %vm4939, %v5009, %v5055
      %v5085 = vsel %vm4940, %v5011, %v5056
      %v5086 = vsel %vm4941, %v5013, %v5057
      %v5087 = vsel %vm4942, %v5015, %v5058
      %v5088 = vsel %vm4943, %v5017, %v5059
      %v5089 = vsel %vm4944, %v5019, %v5060
      %v5090 = vsel %vm4945, %v5021, %v5061
      %v5091 = vsel %vm4946, %v5023, %v5062
      %v5092 = vsel %vm4947, %v5025, %v5063
      %v5093 = vsel %vm4948, %v5027, %v5064
      %v5094 = vsel %vm4949, %v5029, %v5065
      %v5095 = vsel %vm4950, %v5031, %v5066
      %v5096 = vsel %vm4951, %v5033, %v5067
      %v5097 = vsel %vm4952, %v5035, %v5068
      %v5098 = vsel %vm4953, %v5037, %v5069
      %v5099 = vsel %vm4954, %v5039, %v5070
      %v5100 = vsel %vm4955, %v5041, %v5071
      %v5101 = vsel %vm4956, %v5043, %v5072
      %5102 = vst [vmem:[%s386] sm:$0xff] %v5073
      %5103 = vst [vmem:[%s386 + $0x8] sm:$0xff] %v5074
      %5104 = vst [vmem:[%s386 + $0x10] sm:$0xff] %v5075
      %5105 = vst [vmem:[%s386 + $0x18] sm:$0xff] %v5076
      %5106 = vst [vmem:[%s386 + $0x20] sm:$0xff] %v5077
      %5107 = vst [vmem:[%s386 + $0x28] sm:$0xff] %v5078
      %5108 = vst [vmem:[%s386 + $0x30] sm:$0xff] %v5079
      %5109 = vst [vmem:[%s386 + $0x38] sm:$0xff] %v5080
      %5110 = vst [vmem:[%s386 + $0x40] sm:$0xff] %v5081
      %5111 = vst [vmem:[%s386 + $0x48] sm:$0xff] %v5082
      %5112 = vst [vmem:[%s386 + $0x50] sm:$0xff] %v5083
      %5113 = vst [vmem:[%s386 + $0x58] sm:$0xff] %v5084
      %5114 = vst [vmem:[%s386 + $0x60] sm:$0xff] %v5085
      %5115 = vst [vmem:[%s386 + $0x68] sm:$0xff] %v5086
      %5116 = vst [vmem:[%s386 + $0x70] sm:$0xff] %v5087
      %5117 = vst [vmem:[%s386 + $0x78] sm:$0xff] %v5088
      %5118 = vst [vmem:[%s386 + $0x80] sm:$0xff] %v5089
      %5119 = vst [vmem:[%s386 + $0x88] sm:$0xff] %v5090
      %5120 = vst [vmem:[%s386 + $0x90] sm:$0xff] %v5091
      %5121 = vst [vmem:[%s386 + $0x98] sm:$0xff] %v5092
      %5122 = vst [vmem:[%s386 + $0xa0] sm:$0xff] %v5093
      %5123 = vst [vmem:[%s386 + $0xa8] sm:$0xff] %v5094
      %5124 = vst [vmem:[%s386 + $0xb0] sm:$0xff] %v5095
      %5125 = vst [vmem:[%s386 + $0xb8] sm:$0xff] %v5096
      %5126 = vst [vmem:[%s386 + $0xc0] sm:$0xff] %v5097
      %5127 = vst [vmem:[%s386 + $0xc8] sm:$0xff] %v5098
      %5128 = vst [vmem:[%s386 + $0xd0] sm:$0xff] %v5099
      %5129 = vst [vmem:[%s386 + $0xd8] sm:$0xff] %v5100
      %5130 = vst [vmem:[%s386 + $0xe0] sm:$0xff] %v5101
      %p5131 = scmp.lt.s32.totalorder %s22, 1
      %s5132 = scalar_select %p5131, %s22, 1
      %s5133 = smul.addr %s5132, 29
      %s5134 = smul.addr %s5133, 8
      %s5135 = scalar_lea.vmem %s11, %s5134
      // Predicated region
      $region65: #{fused_forward.1} parent=63 // pred_check
        %p5136 = pneg %p276
      $region66: #{fused_forward.1} parent=63 // pred_check_branch
        %5138 = sbr.rel (%p5136) target = $region68
      $region67: #{fused_forward.1} parent=63 // pred_region
        _
      $region68: #{fused_forward.1} parent=63 // pred_fallthru
        _
    $region64: #{fused_forward.1} parent=5 // pred_fallthru
      _
    %p5139 = scmp.le.s32.totalorder 2, %s17
    // Predicated region
    $region69: #{fused_forward.1} parent=5 // pred_check
      %p5140 = pneg %p5139
    $region70: #{fused_forward.1} parent=5 // pred_check_branch
      %5142 = sbr.rel (%p5140) target = $region72
    $region71: #{fused_forward.1} parent=5 // pred_region
      %s5143 = ssub.s32 %s17, 2
      // Predicated region
      $region73: #{fused_forward.1} parent=71 // pred_check
        %p5144 = pneg %p282
      $region74: #{fused_forward.1} parent=71 // pred_check_branch
        %5146 = sbr.rel (%p5144) target = $region76
      $region75: #{fused_forward.1} parent=71 // pred_region
        %p5147 = scmp.lt.s32.totalorder %s23, 1
        %s5148 = scalar_select %p5147, %s23, 1
        %s5149 = smul.addr %s5148, 29
        %s5150 = smul.addr %s5149, 8
        %s5151 = scalar_lea.vmem %s11, %s5150
      $region76: #{fused_forward.1} parent=71 // pred_fallthru
        _
    $region72: #{fused_forward.1} parent=5 // pred_fallthru
      _
  $region6: #{fused_forward.1} parent=0 // loop_footer
    %s21 = sadd.s32 1, %s17
  $region7: #{fused_forward.1} parent=0 // loop_footer_branch
    %16 = sbr.rel target = $region3
  $region8: #{fused_forward.1} parent=0 // loop_exit
    _

</llo_original>
